<compile_context>
chip_gen: v5e
topology: v5e:2x2
jax: 0.10.0
libtpu: 0.0.40
codegen_flags: <defaults>
</compile_context>

<pallas_src>
import functools

import jax
import jax.numpy as jnp
from jax import lax
from jax.experimental import pallas as pl
from jax.experimental.pallas import tpu as pltpu


def _sigmoid(x):
    # sigmoid(x) == 0.5 * tanh(0.5 * x) + 0.5  -> one EUP op + VPU fma instead
    # of exp + reciprocal; the single EUP slot is the serial per-step bottleneck.
    return 0.5 * jnp.tanh(0.5 * x) + 0.5


def _ctlstm_kernel(x_ref, dt_ref, wx_ref, whh_ref, bias_ref, h_out_ref,
                   xp_sc, h_sc, c_sc, cb_sc, *, hid_dim, beta, steps, btile):
    """One grid step == `steps` fused time steps for one batch tile.

    x_ref    : (steps*btile, 2H)  concatenated [item|dur] embeddings, bf16
    dt_ref   : (steps*btile, 1)   time deltas, f32
    wx_ref   : (2H, 7H)           input-projection weight, bf16 (VMEM resident)
    whh_ref  : (H, 7H)            recurrence weight, bf16 (VMEM resident)
    bias_ref : (1, 7H)            bias, f32
    h_out_ref: (steps*btile, H)   hidden states per time step, f32
    xp_sc    : (steps*btile, 7H)  per-block input projection, f32 scratch
    h/c/cb_sc: (btile, H)         carries across time blocks, f32 scratch
    """
    t = pl.program_id(1)

    # Reference code starts every sequence from zero hidden / cell / cell_bar.
    @pl.when(t == 0)
    def _():
        h_sc[...] = jnp.zeros_like(h_sc)
        c_sc[...] = jnp.zeros_like(c_sc)
        cb_sc[...] = jnp.zeros_like(cb_sc)

    H = hid_dim

    # Prologue: block input projection. M = steps*btile rows -> decent MXU
    # utilization, amortized over all fused time steps (off the serial path).
    xp_sc[...] = (jnp.dot(x_ref[...], wx_ref[...],
                          preferred_element_type=jnp.float32)
                  + bias_ref[...])

    whh = whh_ref[...]                     # (H, 7H) bf16, loaded once per block
    inv_beta = 1.0 / beta

    def step(j, carry):
        h, c, cb = carry
        row = pl.multiple_of(j * btile, btile)
        # Only the recurrent matmul stays on the serial critical path.
        pre = (jnp.dot(h.astype(jnp.bfloat16), whh,
                       preferred_element_type=jnp.float32)
               + xp_sc[pl.ds(row, btile), :])            # (btile, 7H)

        gate_input      = _sigmoid(pre[:, 0 * H:1 * H])
        gate_forget     = _sigmoid(pre[:, 1 * H:2 * H])
        gate_output     = _sigmoid(pre[:, 2 * H:3 * H])
        gate_pre_c      = jnp.tanh(pre[:, 3 * H:4 * H])
        gate_input_bar  = _sigmoid(pre[:, 4 * H:5 * H])
        gate_forget_bar = _sigmoid(pre[:, 5 * H:6 * H])
        # F.softplus(x, beta) == (1/beta) * log(1 + exp(beta * x))
        if beta == 1.0:
            gate_decay = jax.nn.softplus(pre[:, 6 * H:7 * H])
        else:
            gate_decay = jax.nn.softplus(pre[:, 6 * H:7 * H] * beta) * inv_beta

        cell_i   = gate_forget * c + gate_input * gate_pre_c
        cell_bar = gate_forget_bar * cb + gate_input_bar * gate_pre_c

        dt = dt_ref[pl.ds(row, btile), :]                # (btile, 1)
        cell_new = cell_bar + (cell_i - cell_bar) * jnp.exp(-gate_decay * dt)
        h_new = gate_output * jnp.tanh(cell_new)

        h_out_ref[pl.ds(row, btile), :] = h_new.astype(h_out_ref.dtype)
        return h_new, cell_new, cell_bar

    # Partial unroll: keeps LLO scheduler visibility without code-size blowup.
    h, c, cb = lax.fori_loop(0, steps, step,
                             (h_sc[...], c_sc[...], cb_sc[...]),
                             unroll=min(8, steps))
    h_sc[...] = h
    c_sc[...] = c
    cb_sc[...] = cb


def _vmem_bytes(tc, btile, hp):
    rows = tc * btile
    return (2 * rows * 2 * hp * 2          # x input (bf16, double-buffered)
            + 2 * rows * 4                 # dt (f32, double-buffered)
            + 2 * 2 * hp * 7 * hp * 2      # W_x (bf16, worst-case 2 bufs)
            + 2 * hp * 7 * hp * 2          # W_hh
            + 2 * 7 * hp * 4               # bias
            + 2 * rows * hp * 4            # h_out (f32, double-buffered)
            + rows * 7 * hp * 4            # x_proj scratch
            + 3 * btile * hp * 4)          # carries


def _pick_tc(T, btile, hp, budget=24 << 20):
    # Budget re-derived for v7x's 64 MiB physical VMEM (stay well under ~48 MiB
    # after double-buffering); v5e/v6e have more headroom.
    tc = min(64, max(1, T))
    while tc > 1 and _vmem_bytes(tc, btile, hp) > budget:
        tc //= 2
    return tc


def ctlstm_scan(x, dt, w_x, w_hh, bias, *, hid_dim_padded, beta, tc, btile):
    """x: (nb, Tp*btile, 2Hp) bf16; dt: (nb, Tp*btile, 1) f32;
    w_x: (2Hp, 7Hp) bf16; w_hh: (Hp, 7Hp) bf16; bias: (1, 7Hp) f32."""
    nb, rows, _ = x.shape
    Hp = hid_dim_padded
    tp = rows // btile
    kernel = functools.partial(_ctlstm_kernel, hid_dim=Hp, beta=beta,
                               steps=tc, btile=btile)
    vmem_limit = min(48 << 20, max(16 << 20, int(1.5 * _vmem_bytes(tc, btile, Hp))))
    blk_rows = tc * btile
    return pl.pallas_call(
        kernel,
        out_shape=jax.ShapeDtypeStruct((nb, rows, Hp), jnp.float32),
        grid_spec=pltpu.PrefetchScalarGridSpec(
            num_scalar_prefetch=0,
            grid=(nb, tp // tc),
            in_specs=[
                pl.BlockSpec((None, blk_rows, 2 * Hp), lambda b, t: (b, t, 0)),  # x
                pl.BlockSpec((None, blk_rows, 1), lambda b, t: (b, t, 0)),       # dt
                pl.BlockSpec((2 * Hp, 7 * Hp), lambda b, t: (0, 0)),             # W_x
                pl.BlockSpec((Hp, 7 * Hp), lambda b, t: (0, 0)),                 # W_hh
                pl.BlockSpec((1, 7 * Hp), lambda b, t: (0, 0)),                  # bias
            ],
            out_specs=pl.BlockSpec((None, blk_rows, Hp), lambda b, t: (b, t, 0)),
            scratch_shapes=[
                pltpu.VMEM((blk_rows, 7 * Hp), jnp.float32),   # per-block x_proj
                pltpu.VMEM((btile, Hp), jnp.float32),          # h carry
                pltpu.VMEM((btile, Hp), jnp.float32),          # c carry
                pltpu.VMEM((btile, Hp), jnp.float32),          # c_bar carry
            ]),
        compiler_params=pltpu.CompilerParams(
            # batch tiles are independent (usable by v7x's 2nd TC);
            # time must run in order (recurrence).
            dimension_semantics=("parallel", "arbitrary"),
            vmem_limit_bytes=vmem_limit),
    )(x, dt, w_x, w_hh, bias)


def init_params(key, settings):
    H = settings['hid_dim']
    num_item = settings['num_item']
    num_dur = settings['num_duration']
    k1, k2, k3, k4, k5, k6 = jax.random.split(key, 6)
    return {
        'item_emb': jax.random.normal(k1, (num_item + 1, H), jnp.float32),
        'dur_emb': jax.random.normal(k2, (num_dur + 1, H), jnp.float32),
        # CTLSTMCell recurrence: Linear(3H -> 7H) acting on [item | dur | h]
        'lstm_w': jax.random.normal(k3, (3 * H, 7 * H), jnp.float32) * 0.1,
        'lstm_b': jax.random.normal(k4, (7 * H,), jnp.float32) * 0.1,
        # hidden_lambda Linear(H -> num_item): declared in __init__, unused in forward
        'lambda_w': jax.random.normal(k5, (H, num_item), jnp.float32) * 0.1,
        'lambda_b': jax.random.normal(k6, (num_item,), jnp.float32) * 0.1,
    }


def _round_up(x, m):
    return ((x + m - 1) // m) * m


def conttime_forward(params, items, time_interval, type_duration,
                     seq_len_lists, *, hid_dim, beta):
    B, T = items.shape
    H = hid_dim
    Hp = _round_up(H, 128)          # lane-aligned hidden dim (gate slices aligned)
    Btile = 8                       # sublane-aligned batch tile per grid row
    Bp = _round_up(B, Btile)
    nb = Bp // Btile
    Tc = _pick_tc(T, Btile, Hp)     # fused time steps per grid iteration
    Tp = _round_up(T, Tc)

    # ---- glue: embedding gathers (no clean Pallas equivalent) ----------------
    item_embs = params['item_emb'][items]            # (B, T, H)
    dur_embs = params['dur_emb'][type_duration]      # (B, T, H)

    W = params['lstm_w']                             # (3H, 7H)
    bvec = params['lstm_b']                          # (7H,)
    W_x = W[:2 * H, :]                               # input part
    W_hh = W[2 * H:, :]                              # recurrent part

    # ---- pad gates to 128-lane boundaries; pack per-batch-tile row layout ----
    # Padded hidden lanes see pre == 0 (zero weight cols / bias), so they stay
    # exactly 0 in h/c/c_bar and never pollute real lanes.
    W_x_p = jnp.pad(W_x.reshape(2, H, 7, H),
                    ((0, 0), (0, Hp - H), (0, 0), (0, Hp - H)))
    W_x_p = W_x_p.reshape(2 * Hp, 7 * Hp).astype(jnp.bfloat16)
    W_hh_p = jnp.pad(W_hh.reshape(H, 7, H),
                     ((0, Hp - H), (0, 0), (0, Hp - H)))
    W_hh_p = W_hh_p.reshape(Hp, 7 * Hp).astype(jnp.bfloat16)
    bias_p = jnp.pad(bvec.reshape(7, H), ((0, 0), (0, Hp - H)))
    bias_p = bias_p.reshape(1, 7 * Hp).astype(jnp.float32)

    # x = [item | dur] embeddings, streamed in bf16 (projection happens in-kernel).
    x = jnp.stack([item_embs, dur_embs], axis=2)               # (B, T, 2, H)
    x = jnp.transpose(x, (1, 0, 2, 3))                         # (T, B, 2, H)
    x = jnp.pad(x, ((0, Tp - T), (0, Bp - B), (0, 0), (0, Hp - H)))
    x = x.reshape(Tp, nb, Btile, 2 * Hp)
    x = jnp.transpose(x, (1, 0, 2, 3)).reshape(nb, Tp * Btile, 2 * Hp)
    x = x.astype(jnp.bfloat16)

    dt = jnp.transpose(time_interval, (1, 0)).astype(jnp.float32)   # (T, B)
    dt = jnp.pad(dt, ((0, Tp - T), (0, Bp - B)))                    # (Tp, Bp)
    dt = dt.reshape(Tp, nb, Btile)
    dt = jnp.transpose(dt, (1, 0, 2)).reshape(nb, Tp * Btile, 1)

    # ---- recurrent hot loop in Pallas ----------------------------------------
    h_out_p = ctlstm_scan(x, dt, W_x_p, W_hh_p, bias_p,
                          hid_dim_padded=Hp, beta=beta, tc=Tc, btile=Btile)

    h_out_p = h_out_p.reshape(nb, Tp, Btile, Hp)
    h_out_p = jnp.transpose(h_out_p, (1, 0, 2, 3)).reshape(Tp, Bp, Hp)
    h_out = h_out_p[:T, :B, :H]                                 # == torch.stack(h_list)

    # Faithful to the reference code: h_final_list.append(h_list[seq_len_lists[idx]-1][0])
    # i.e. it always picks batch row 0 at time step seq_len_lists[idx]-1.
    h_final_out = h_out[seq_len_lists - 1, 0, :]                # (B, H)
    return h_out, h_final_out


if __name__ == "__main__":
    settings = dict(num_item=10, num_user=5, device=None,
                    num_duration=6, beta=1.0, hid_dim=32)
    B, T = 2, 8

    key = jax.random.PRNGKey(0)
    kp, k1, k2, k3 = jax.random.split(key, 4)
    params = init_params(kp, settings)

    items = jax.random.randint(k1, (B, T), 0, settings['num_item'] + 1, dtype=jnp.int32)
    type_duration = jax.random.randint(k2, (B, T), 0, settings['num_duration'] + 1,
                                       dtype=jnp.int32)
    time_interval = jax.random.uniform(k3, (B, T), jnp.float32, 0.0, 2.0)
    seq_len_lists = jnp.array([T, T - 3], dtype=jnp.int32)

    h_out, h_final = conttime_forward(params, items, time_interval, type_duration,
                                      seq_len_lists,
                                      hid_dim=settings['hid_dim'],
                                      beta=settings['beta'])
    jax.block_until_ready((h_out, h_final))

    assert h_out.shape == (T, B, settings['hid_dim'])
    assert h_final.shape == (B, settings['hid_dim'])
    assert bool(jnp.all(jnp.isfinite(h_out))) and bool(jnp.all(jnp.isfinite(h_final)))
    print("KERNEL_OK")
</pallas_src>

<mosaic_0001>
module attributes {stable_mosaic.version = 11 : i64} {
  func.func @_ctlstm_kernel(%arg0: i32, %arg1: i32, %arg2: memref<1x64x256xbf16, #tpu.memory_space<vmem>>, %arg3: memref<1x64x1xf32, #tpu.memory_space<vmem>>, %arg4: memref<256x896xbf16, #tpu.memory_space<vmem>>, %arg5: memref<128x896xbf16, #tpu.memory_space<vmem>>, %arg6: memref<1x896xf32, #tpu.memory_space<vmem>>, %arg7: memref<1x64x128xf32, #tpu.memory_space<vmem>>, %arg8: memref<64x896xf32, #tpu.memory_space<vmem>>, %arg9: memref<8x128xf32, #tpu.memory_space<vmem>>, %arg10: memref<8x128xf32, #tpu.memory_space<vmem>>, %arg11: memref<8x128xf32, #tpu.memory_space<vmem>>) attributes {dimension_semantics = [#tpu.dimension_semantics<parallel>, #tpu.dimension_semantics<arbitrary>], iteration_bounds = array<i64: 1, 1>, scalar_prefetch = 0 : i64, scratch_operands = 4 : i64, tpu.core_type = #tpu.core_type<tc>, window_params = [{transform_indices = @transform_0, window_bounds = array<i64: 1, 64, 256>}, {transform_indices = @transform_1, window_bounds = array<i64: 1, 64, 1>}, {pipeline_mode = #tpu.pipeline_mode<synchronous>, transform_indices = @transform_2, window_bounds = array<i64: 256, 896>}, {pipeline_mode = #tpu.pipeline_mode<synchronous>, transform_indices = @transform_3, window_bounds = array<i64: 128, 896>}, {pipeline_mode = #tpu.pipeline_mode<synchronous>, transform_indices = @transform_4, window_bounds = array<i64: 1, 896>}, {transform_indices = @transform_5, window_bounds = array<i64: 1, 64, 128>}]} {
    %c0_i32 = arith.constant 0 : i32
    %0 = arith.cmpi eq, %arg1, %c0_i32 : i32
    %1 = arith.extui %0 : i1 to i32
    %c0_i32_0 = arith.constant 0 : i32
    %2 = arith.cmpi ne, %1, %c0_i32_0 : i32
    scf.if %2 {
      %cst_224 = arith.constant 0.000000e+00 : f32
      %714 = vector.broadcast %cst_224 : f32 to vector<8x128xf32>
      %c0_225 = arith.constant 0 : index
      %c0_226 = arith.constant 0 : index
      %715 = vector.load %arg9[%c0_225, %c0_226] : memref<8x128xf32, #tpu.memory_space<vmem>>, vector<8x128xf32>
      tpu.vector_store %arg9[%c0_225, %c0_226], %714 {strides = array<i32>} : memref<8x128xf32, #tpu.memory_space<vmem>>, vector<8x128xf32>,
      %cst_227 = arith.constant 0.000000e+00 : f32
      %716 = vector.broadcast %cst_227 : f32 to vector<8x128xf32>
      %c0_228 = arith.constant 0 : index
      %c0_229 = arith.constant 0 : index
      %717 = vector.load %arg10[%c0_228, %c0_229] : memref<8x128xf32, #tpu.memory_space<vmem>>, vector<8x128xf32>
      tpu.vector_store %arg10[%c0_228, %c0_229], %716 {strides = array<i32>} : memref<8x128xf32, #tpu.memory_space<vmem>>, vector<8x128xf32>,
      %cst_230 = arith.constant 0.000000e+00 : f32
      %718 = vector.broadcast %cst_230 : f32 to vector<8x128xf32>
      %c0_231 = arith.constant 0 : index
      %c0_232 = arith.constant 0 : index
      %719 = vector.load %arg11[%c0_231, %c0_232] : memref<8x128xf32, #tpu.memory_space<vmem>>, vector<8x128xf32>
      tpu.vector_store %arg11[%c0_231, %c0_232], %718 {strides = array<i32>} : memref<8x128xf32, #tpu.memory_space<vmem>>, vector<8x128xf32>,
    } else {
    }
    %c0 = arith.constant 0 : index
    %c0_1 = arith.constant 0 : index
    %c0_2 = arith.constant 0 : index
    %3 = vector.load %arg2[%c0, %c0_1, %c0_2] : memref<1x64x256xbf16, #tpu.memory_space<vmem>>, vector<1x64x256xbf16>
    %4 = vector.shape_cast %3 : vector<1x64x256xbf16> to vector<64x256xbf16>
    %c0_3 = arith.constant 0 : index
    %c0_4 = arith.constant 0 : index
    %5 = vector.load %arg4[%c0_3, %c0_4] : memref<256x896xbf16, #tpu.memory_space<vmem>>, vector<256x896xbf16>
    %cst = arith.constant dense<0.000000e+00> : vector<64x896xf32>
    %6 = tpu.matmul %4, %5, %cst {dimension_numbers = #tpu.dot_dimension_numbers<[1], [0], [0], [1], [0, 0, 1, 1], [], []>} : vector<64x256xbf16>, vector<256x896xbf16>, vector<64x896xf32> -> vector<64x896xf32>
    %c0_5 = arith.constant 0 : index
    %c0_6 = arith.constant 0 : index
    %7 = vector.load %arg6[%c0_5, %c0_6] : memref<1x896xf32, #tpu.memory_space<vmem>>, vector<1x896xf32>
    %8 = vector.broadcast %7 : vector<1x896xf32> to vector<64x896xf32>
    %9 = arith.addf %6, %8 : vector<64x896xf32>
    %c0_7 = arith.constant 0 : index
    %c0_8 = arith.constant 0 : index
    %10 = vector.load %arg8[%c0_7, %c0_8] : memref<64x896xf32, #tpu.memory_space<vmem>>, vector<64x896xf32>
    tpu.vector_store %arg8[%c0_7, %c0_8], %9 {strides = array<i32>} : memref<64x896xf32, #tpu.memory_space<vmem>>, vector<64x896xf32>,
    %c0_9 = arith.constant 0 : index
    %c0_10 = arith.constant 0 : index
    %11 = vector.load %arg5[%c0_9, %c0_10] : memref<128x896xbf16, #tpu.memory_space<vmem>>, vector<128x896xbf16>
    %c0_11 = arith.constant 0 : index
    %c0_12 = arith.constant 0 : index
    %12 = vector.load %arg9[%c0_11, %c0_12] : memref<8x128xf32, #tpu.memory_space<vmem>>, vector<8x128xf32>
    %c0_13 = arith.constant 0 : index
    %c0_14 = arith.constant 0 : index
    %13 = vector.load %arg10[%c0_13, %c0_14] : memref<8x128xf32, #tpu.memory_space<vmem>>, vector<8x128xf32>
    %c0_15 = arith.constant 0 : index
    %c0_16 = arith.constant 0 : index
    %14 = vector.load %arg11[%c0_15, %c0_16] : memref<8x128xf32, #tpu.memory_space<vmem>>, vector<8x128xf32>
    %c0_i32_17 = arith.constant 0 : i32
    %c8_i32 = arith.constant 8 : i32
    %15 = arith.muli %c0_i32_17, %c8_i32 : i32
    %16 = tpu.assume_multiple %15, 8 : i32
    %17 = arith.truncf %12 : vector<8x128xf32> to vector<8x128xbf16>
    %cst_18 = arith.constant dense<0.000000e+00> : vector<8x896xf32>
    %18 = tpu.matmul %17, %11, %cst_18 {dimension_numbers = #tpu.dot_dimension_numbers<[1], [0], [0], [1], [0, 0, 1, 1], [], []>} : vector<8x128xbf16>, vector<128x896xbf16>, vector<8x896xf32> -> vector<8x896xf32>
    %19 = arith.index_cast %16 : i32 to index
    %c0_19 = arith.constant 0 : index
    %20 = vector.load %arg8[%19, %c0_19] : memref<64x896xf32, #tpu.memory_space<vmem>>, vector<8x896xf32>
    %21 = arith.addf %18, %20 : vector<8x896xf32>
    %22 = vector.extract_strided_slice %21 {offsets = [0, 0], sizes = [8, 128], strides = [1, 1]} : vector<8x896xf32> to vector<8x128xf32>
    %cst_20 = arith.constant 5.000000e-01 : f32
    %23 = vector.broadcast %cst_20 : f32 to vector<8x128xf32>
    %24 = arith.mulf %23, %22 : vector<8x128xf32>
    %25 = math.tanh %24 : vector<8x128xf32>
    %cst_21 = arith.constant 5.000000e-01 : f32
    %26 = vector.broadcast %cst_21 : f32 to vector<8x128xf32>
    %27 = arith.mulf %26, %25 : vector<8x128xf32>
    %cst_22 = arith.constant 5.000000e-01 : f32
    %28 = vector.broadcast %cst_22 : f32 to vector<8x128xf32>
    %29 = arith.addf %27, %28 : vector<8x128xf32>
    %30 = vector.extract_strided_slice %21 {offsets = [0, 128], sizes = [8, 128], strides = [1, 1]} : vector<8x896xf32> to vector<8x128xf32>
    %cst_23 = arith.constant 5.000000e-01 : f32
    %31 = vector.broadcast %cst_23 : f32 to vector<8x128xf32>
    %32 = arith.mulf %31, %30 : vector<8x128xf32>
    %33 = math.tanh %32 : vector<8x128xf32>
    %cst_24 = arith.constant 5.000000e-01 : f32
    %34 = vector.broadcast %cst_24 : f32 to vector<8x128xf32>
    %35 = arith.mulf %34, %33 : vector<8x128xf32>
    %cst_25 = arith.constant 5.000000e-01 : f32
    %36 = vector.broadcast %cst_25 : f32 to vector<8x128xf32>
    %37 = arith.addf %35, %36 : vector<8x128xf32>
    %38 = vector.extract_strided_slice %21 {offsets = [0, 256], sizes = [8, 128], strides = [1, 1]} : vector<8x896xf32> to vector<8x128xf32>
    %cst_26 = arith.constant 5.000000e-01 : f32
    %39 = vector.broadcast %cst_26 : f32 to vector<8x128xf32>
    %40 = arith.mulf %39, %38 : vector<8x128xf32>
    %41 = math.tanh %40 : vector<8x128xf32>
    %cst_27 = arith.constant 5.000000e-01 : f32
    %42 = vector.broadcast %cst_27 : f32 to vector<8x128xf32>
    %43 = arith.mulf %42, %41 : vector<8x128xf32>
    %cst_28 = arith.constant 5.000000e-01 : f32
    %44 = vector.broadcast %cst_28 : f32 to vector<8x128xf32>
    %45 = arith.addf %43, %44 : vector<8x128xf32>
    %46 = vector.extract_strided_slice %21 {offsets = [0, 384], sizes = [8, 128], strides = [1, 1]} : vector<8x896xf32> to vector<8x128xf32>
    %47 = math.tanh %46 : vector<8x128xf32>
    %48 = vector.extract_strided_slice %21 {offsets = [0, 512], sizes = [8, 128], strides = [1, 1]} : vector<8x896xf32> to vector<8x128xf32>
    %cst_29 = arith.constant 5.000000e-01 : f32
    %49 = vector.broadcast %cst_29 : f32 to vector<8x128xf32>
    %50 = arith.mulf %49, %48 : vector<8x128xf32>
    %51 = math.tanh %50 : vector<8x128xf32>
    %cst_30 = arith.constant 5.000000e-01 : f32
    %52 = vector.broadcast %cst_30 : f32 to vector<8x128xf32>
    %53 = arith.mulf %52, %51 : vector<8x128xf32>
    %cst_31 = arith.constant 5.000000e-01 : f32
    %54 = vector.broadcast %cst_31 : f32 to vector<8x128xf32>
    %55 = arith.addf %53, %54 : vector<8x128xf32>
    %56 = vector.extract_strided_slice %21 {offsets = [0, 640], sizes = [8, 128], strides = [1, 1]} : vector<8x896xf32> to vector<8x128xf32>
    %cst_32 = arith.constant 5.000000e-01 : f32
    %57 = vector.broadcast %cst_32 : f32 to vector<8x128xf32>
    %58 = arith.mulf %57, %56 : vector<8x128xf32>
    %59 = math.tanh %58 : vector<8x128xf32>
    %cst_33 = arith.constant 5.000000e-01 : f32
    %60 = vector.broadcast %cst_33 : f32 to vector<8x128xf32>
    %61 = arith.mulf %60, %59 : vector<8x128xf32>
    %cst_34 = arith.constant 5.000000e-01 : f32
    %62 = vector.broadcast %cst_34 : f32 to vector<8x128xf32>
    %63 = arith.addf %61, %62 : vector<8x128xf32>
    %64 = vector.extract_strided_slice %21 {offsets = [0, 768], sizes = [8, 128], strides = [1, 1]} : vector<8x896xf32> to vector<8x128xf32>
    %cst_35 = arith.constant 0.000000e+00 : f32
    %65 = vector.broadcast %cst_35 : f32 to vector<8x128xf32>
    %66 = arith.maximumf %64, %65 : vector<8x128xf32>
    %67 = vector.broadcast %cst_35 : f32 to vector<8x128xf32>
    %68 = arith.subf %64, %67 : vector<8x128xf32>
    %69 = arith.cmpf one, %68, %68 : vector<8x128xf32>
    %70 = vector.broadcast %cst_35 : f32 to vector<8x128xf32>
    %71 = arith.addf %64, %70 : vector<8x128xf32>
    %72 = math.absf %68 : vector<8x128xf32>
    %cst_36 = arith.constant 0.000000e+00 : f32
    %73 = vector.broadcast %cst_36 : f32 to vector<8x128xf32>
    %74 = arith.subf %73, %72 : vector<8x128xf32>
    %75 = math.exp %74 : vector<8x128xf32>
    %76 = math.log1p %75 : vector<8x128xf32>
    %77 = arith.addf %66, %76 : vector<8x128xf32>
    %78 = arith.select %69, %71, %77 : vector<8x128xi1>, vector<8x128xf32>
    %79 = arith.mulf %37, %13 : vector<8x128xf32>
    %80 = arith.mulf %29, %47 : vector<8x128xf32>
    %81 = arith.addf %79, %80 : vector<8x128xf32>
    %82 = arith.mulf %63, %14 : vector<8x128xf32>
    %83 = arith.mulf %55, %47 : vector<8x128xf32>
    %84 = arith.addf %82, %83 : vector<8x128xf32>
    %c0_37 = arith.constant 0 : index
    %85 = arith.index_cast %16 : i32 to index
    %c0_38 = arith.constant 0 : index
    %86 = vector.load %arg3[%c0_37, %85, %c0_38] : memref<1x64x1xf32, #tpu.memory_space<vmem>>, vector<1x8x1xf32>
    %87 = vector.shape_cast %86 : vector<1x8x1xf32> to vector<8x1xf32>
    %88 = arith.subf %81, %84 : vector<8x128xf32>
    %cst_39 = arith.constant 0.000000e+00 : f32
    %89 = vector.broadcast %cst_39 : f32 to vector<8x128xf32>
    %90 = arith.subf %89, %78 : vector<8x128xf32>
    %91 = vector.broadcast %87 : vector<8x1xf32> to vector<8x128xf32>
    %92 = arith.mulf %90, %91 : vector<8x128xf32>
    %93 = math.exp %92 : vector<8x128xf32>
    %94 = arith.mulf %88, %93 : vector<8x128xf32>
    %95 = arith.addf %84, %94 : vector<8x128xf32>
    %96 = math.tanh %95 : vector<8x128xf32>
    %97 = arith.mulf %45, %96 : vector<8x128xf32>
    %c0_40 = arith.constant 0 : index
    %98 = arith.index_cast %16 : i32 to index
    %c0_41 = arith.constant 0 : index
    %99 = vector.load %arg7[%c0_40, %98, %c0_41] : memref<1x64x128xf32, #tpu.memory_space<vmem>>, vector<1x8x128xf32>
    %100 = vector.shape_cast %99 : vector<1x8x128xf32> to vector<8x128xf32>
    %101 = vector.shape_cast %97 : vector<8x128xf32> to vector<1x8x128xf32>
    tpu.vector_store %arg7[%c0_40, %98, %c0_41], %101 {strides = array<i32>} : memref<1x64x128xf32, #tpu.memory_space<vmem>>, vector<1x8x128xf32>,
    %c1_i32 = arith.constant 1 : i32
    %c8_i32_42 = arith.constant 8 : i32
    %102 = arith.muli %c1_i32, %c8_i32_42 : i32
    %103 = tpu.assume_multiple %102, 8 : i32
    %104 = arith.truncf %97 : vector<8x128xf32> to vector<8x128xbf16>
    %cst_43 = arith.constant dense<0.000000e+00> : vector<8x896xf32>
    %105 = tpu.matmul %104, %11, %cst_43 {dimension_numbers = #tpu.dot_dimension_numbers<[1], [0], [0], [1], [0, 0, 1, 1], [], []>} : vector<8x128xbf16>, vector<128x896xbf16>, vector<8x896xf32> -> vector<8x896xf32>
    %106 = arith.index_cast %103 : i32 to index
    %c0_44 = arith.constant 0 : index
    %107 = vector.load %arg8[%106, %c0_44] : memref<64x896xf32, #tpu.memory_space<vmem>>, vector<8x896xf32>
    %108 = arith.addf %105, %107 : vector<8x896xf32>
    %109 = vector.extract_strided_slice %108 {offsets = [0, 0], sizes = [8, 128], strides = [1, 1]} : vector<8x896xf32> to vector<8x128xf32>
    %cst_45 = arith.constant 5.000000e-01 : f32
    %110 = vector.broadcast %cst_45 : f32 to vector<8x128xf32>
    %111 = arith.mulf %110, %109 : vector<8x128xf32>
    %112 = math.tanh %111 : vector<8x128xf32>
    %cst_46 = arith.constant 5.000000e-01 : f32
    %113 = vector.broadcast %cst_46 : f32 to vector<8x128xf32>
    %114 = arith.mulf %113, %112 : vector<8x128xf32>
    %cst_47 = arith.constant 5.000000e-01 : f32
    %115 = vector.broadcast %cst_47 : f32 to vector<8x128xf32>
    %116 = arith.addf %114, %115 : vector<8x128xf32>
    %117 = vector.extract_strided_slice %108 {offsets = [0, 128], sizes = [8, 128], strides = [1, 1]} : vector<8x896xf32> to vector<8x128xf32>
    %cst_48 = arith.constant 5.000000e-01 : f32
    %118 = vector.broadcast %cst_48 : f32 to vector<8x128xf32>
    %119 = arith.mulf %118, %117 : vector<8x128xf32>
    %120 = math.tanh %119 : vector<8x128xf32>
    %cst_49 = arith.constant 5.000000e-01 : f32
    %121 = vector.broadcast %cst_49 : f32 to vector<8x128xf32>
    %122 = arith.mulf %121, %120 : vector<8x128xf32>
    %cst_50 = arith.constant 5.000000e-01 : f32
    %123 = vector.broadcast %cst_50 : f32 to vector<8x128xf32>
    %124 = arith.addf %122, %123 : vector<8x128xf32>
    %125 = vector.extract_strided_slice %108 {offsets = [0, 256], sizes = [8, 128], strides = [1, 1]} : vector<8x896xf32> to vector<8x128xf32>
    %cst_51 = arith.constant 5.000000e-01 : f32
    %126 = vector.broadcast %cst_51 : f32 to vector<8x128xf32>
    %127 = arith.mulf %126, %125 : vector<8x128xf32>
    %128 = math.tanh %127 : vector<8x128xf32>
    %cst_52 = arith.constant 5.000000e-01 : f32
    %129 = vector.broadcast %cst_52 : f32 to vector<8x128xf32>
    %130 = arith.mulf %129, %128 : vector<8x128xf32>
    %cst_53 = arith.constant 5.000000e-01 : f32
    %131 = vector.broadcast %cst_53 : f32 to vector<8x128xf32>
    %132 = arith.addf %130, %131 : vector<8x128xf32>
    %133 = vector.extract_strided_slice %108 {offsets = [0, 384], sizes = [8, 128], strides = [1, 1]} : vector<8x896xf32> to vector<8x128xf32>
    %134 = math.tanh %133 : vector<8x128xf32>
    %135 = vector.extract_strided_slice %108 {offsets = [0, 512], sizes = [8, 128], strides = [1, 1]} : vector<8x896xf32> to vector<8x128xf32>
    %cst_54 = arith.constant 5.000000e-01 : f32
    %136 = vector.broadcast %cst_54 : f32 to vector<8x128xf32>
    %137 = arith.mulf %136, %135 : vector<8x128xf32>
    %138 = math.tanh %137 : vector<8x128xf32>
    %cst_55 = arith.constant 5.000000e-01 : f32
    %139 = vector.broadcast %cst_55 : f32 to vector<8x128xf32>
    %140 = arith.mulf %139, %138 : vector<8x128xf32>
    %cst_56 = arith.constant 5.000000e-01 : f32
    %141 = vector.broadcast %cst_56 : f32 to vector<8x128xf32>
    %142 = arith.addf %140, %141 : vector<8x128xf32>
    %143 = vector.extract_strided_slice %108 {offsets = [0, 640], sizes = [8, 128], strides = [1, 1]} : vector<8x896xf32> to vector<8x128xf32>
    %cst_57 = arith.constant 5.000000e-01 : f32
    %144 = vector.broadcast %cst_57 : f32 to vector<8x128xf32>
    %145 = arith.mulf %144, %143 : vector<8x128xf32>
    %146 = math.tanh %145 : vector<8x128xf32>
    %cst_58 = arith.constant 5.000000e-01 : f32
    %147 = vector.broadcast %cst_58 : f32 to vector<8x128xf32>
    %148 = arith.mulf %147, %146 : vector<8x128xf32>
    %cst_59 = arith.constant 5.000000e-01 : f32
    %149 = vector.broadcast %cst_59 : f32 to vector<8x128xf32>
    %150 = arith.addf %148, %149 : vector<8x128xf32>
    %151 = vector.extract_strided_slice %108 {offsets = [0, 768], sizes = [8, 128], strides = [1, 1]} : vector<8x896xf32> to vector<8x128xf32>
    %cst_60 = arith.constant 0.000000e+00 : f32
    %152 = vector.broadcast %cst_60 : f32 to vector<8x128xf32>
    %153 = arith.maximumf %151, %152 : vector<8x128xf32>
    %154 = vector.broadcast %cst_60 : f32 to vector<8x128xf32>
    %155 = arith.subf %151, %154 : vector<8x128xf32>
    %156 = arith.cmpf one, %155, %155 : vector<8x128xf32>
    %157 = vector.broadcast %cst_60 : f32 to vector<8x128xf32>
    %158 = arith.addf %151, %157 : vector<8x128xf32>
    %159 = math.absf %155 : vector<8x128xf32>
    %cst_61 = arith.constant 0.000000e+00 : f32
    %160 = vector.broadcast %cst_61 : f32 to vector<8x128xf32>
    %161 = arith.subf %160, %159 : vector<8x128xf32>
    %162 = math.exp %161 : vector<8x128xf32>
    %163 = math.log1p %162 : vector<8x128xf32>
    %164 = arith.addf %153, %163 : vector<8x128xf32>
    %165 = arith.select %156, %158, %164 : vector<8x128xi1>, vector<8x128xf32>
    %166 = arith.mulf %124, %95 : vector<8x128xf32>
    %167 = arith.mulf %116, %134 : vector<8x128xf32>
    %168 = arith.addf %166, %167 : vector<8x128xf32>
    %169 = arith.mulf %150, %84 : vector<8x128xf32>
    %170 = arith.mulf %142, %134 : vector<8x128xf32>
    %171 = arith.addf %169, %170 : vector<8x128xf32>
    %c0_62 = arith.constant 0 : index
    %172 = arith.index_cast %103 : i32 to index
    %c0_63 = arith.constant 0 : index
    %173 = vector.load %arg3[%c0_62, %172, %c0_63] : memref<1x64x1xf32, #tpu.memory_space<vmem>>, vector<1x8x1xf32>
    %174 = vector.shape_cast %173 : vector<1x8x1xf32> to vector<8x1xf32>
    %175 = arith.subf %168, %171 : vector<8x128xf32>
    %cst_64 = arith.constant 0.000000e+00 : f32
    %176 = vector.broadcast %cst_64 : f32 to vector<8x128xf32>
    %177 = arith.subf %176, %165 : vector<8x128xf32>
    %178 = vector.broadcast %174 : vector<8x1xf32> to vector<8x128xf32>
    %179 = arith.mulf %177, %178 : vector<8x128xf32>
    %180 = math.exp %179 : vector<8x128xf32>
    %181 = arith.mulf %175, %180 : vector<8x128xf32>
    %182 = arith.addf %171, %181 : vector<8x128xf32>
    %183 = math.tanh %182 : vector<8x128xf32>
    %184 = arith.mulf %132, %183 : vector<8x128xf32>
    %c0_65 = arith.constant 0 : index
    %185 = arith.index_cast %103 : i32 to index
    %c0_66 = arith.constant 0 : index
    %186 = vector.load %arg7[%c0_65, %185, %c0_66] : memref<1x64x128xf32, #tpu.memory_space<vmem>>, vector<1x8x128xf32>
    %187 = vector.shape_cast %186 : vector<1x8x128xf32> to vector<8x128xf32>
    %188 = vector.shape_cast %184 : vector<8x128xf32> to vector<1x8x128xf32>
    tpu.vector_store %arg7[%c0_65, %185, %c0_66], %188 {strides = array<i32>} : memref<1x64x128xf32, #tpu.memory_space<vmem>>, vector<1x8x128xf32>,
    %c2_i32 = arith.constant 2 : i32
    %c8_i32_67 = arith.constant 8 : i32
    %189 = arith.muli %c2_i32, %c8_i32_67 : i32
    %190 = tpu.assume_multiple %189, 8 : i32
    %191 = arith.truncf %184 : vector<8x128xf32> to vector<8x128xbf16>
    %cst_68 = arith.constant dense<0.000000e+00> : vector<8x896xf32>
    %192 = tpu.matmul %191, %11, %cst_68 {dimension_numbers = #tpu.dot_dimension_numbers<[1], [0], [0], [1], [0, 0, 1, 1], [], []>} : vector<8x128xbf16>, vector<128x896xbf16>, vector<8x896xf32> -> vector<8x896xf32>
    %193 = arith.index_cast %190 : i32 to index
    %c0_69 = arith.constant 0 : index
    %194 = vector.load %arg8[%193, %c0_69] : memref<64x896xf32, #tpu.memory_space<vmem>>, vector<8x896xf32>
    %195 = arith.addf %192, %194 : vector<8x896xf32>
    %196 = vector.extract_strided_slice %195 {offsets = [0, 0], sizes = [8, 128], strides = [1, 1]} : vector<8x896xf32> to vector<8x128xf32>
    %cst_70 = arith.constant 5.000000e-01 : f32
    %197 = vector.broadcast %cst_70 : f32 to vector<8x128xf32>
    %198 = arith.mulf %197, %196 : vector<8x128xf32>
    %199 = math.tanh %198 : vector<8x128xf32>
    %cst_71 = arith.constant 5.000000e-01 : f32
    %200 = vector.broadcast %cst_71 : f32 to vector<8x128xf32>
    %201 = arith.mulf %200, %199 : vector<8x128xf32>
    %cst_72 = arith.constant 5.000000e-01 : f32
    %202 = vector.broadcast %cst_72 : f32 to vector<8x128xf32>
    %203 = arith.addf %201, %202 : vector<8x128xf32>
    %204 = vector.extract_strided_slice %195 {offsets = [0, 128], sizes = [8, 128], strides = [1, 1]} : vector<8x896xf32> to vector<8x128xf32>
    %cst_73 = arith.constant 5.000000e-01 : f32
    %205 = vector.broadcast %cst_73 : f32 to vector<8x128xf32>
    %206 = arith.mulf %205, %204 : vector<8x128xf32>
    %207 = math.tanh %206 : vector<8x128xf32>
    %cst_74 = arith.constant 5.000000e-01 : f32
    %208 = vector.broadcast %cst_74 : f32 to vector<8x128xf32>
    %209 = arith.mulf %208, %207 : vector<8x128xf32>
    %cst_75 = arith.constant 5.000000e-01 : f32
    %210 = vector.broadcast %cst_75 : f32 to vector<8x128xf32>
    %211 = arith.addf %209, %210 : vector<8x128xf32>
    %212 = vector.extract_strided_slice %195 {offsets = [0, 256], sizes = [8, 128], strides = [1, 1]} : vector<8x896xf32> to vector<8x128xf32>
    %cst_76 = arith.constant 5.000000e-01 : f32
    %213 = vector.broadcast %cst_76 : f32 to vector<8x128xf32>
    %214 = arith.mulf %213, %212 : vector<8x128xf32>
    %215 = math.tanh %214 : vector<8x128xf32>
    %cst_77 = arith.constant 5.000000e-01 : f32
    %216 = vector.broadcast %cst_77 : f32 to vector<8x128xf32>
    %217 = arith.mulf %216, %215 : vector<8x128xf32>
    %cst_78 = arith.constant 5.000000e-01 : f32
    %218 = vector.broadcast %cst_78 : f32 to vector<8x128xf32>
    %219 = arith.addf %217, %218 : vector<8x128xf32>
    %220 = vector.extract_strided_slice %195 {offsets = [0, 384], sizes = [8, 128], strides = [1, 1]} : vector<8x896xf32> to vector<8x128xf32>
    %221 = math.tanh %220 : vector<8x128xf32>
    %222 = vector.extract_strided_slice %195 {offsets = [0, 512], sizes = [8, 128], strides = [1, 1]} : vector<8x896xf32> to vector<8x128xf32>
    %cst_79 = arith.constant 5.000000e-01 : f32
    %223 = vector.broadcast %cst_79 : f32 to vector<8x128xf32>
    %224 = arith.mulf %223, %222 : vector<8x128xf32>
    %225 = math.tanh %224 : vector<8x128xf32>
    %cst_80 = arith.constant 5.000000e-01 : f32
    %226 = vector.broadcast %cst_80 : f32 to vector<8x128xf32>
    %227 = arith.mulf %226, %225 : vector<8x128xf32>
    %cst_81 = arith.constant 5.000000e-01 : f32
    %228 = vector.broadcast %cst_81 : f32 to vector<8x128xf32>
    %229 = arith.addf %227, %228 : vector<8x128xf32>
    %230 = vector.extract_strided_slice %195 {offsets = [0, 640], sizes = [8, 128], strides = [1, 1]} : vector<8x896xf32> to vector<8x128xf32>
    %cst_82 = arith.constant 5.000000e-01 : f32
    %231 = vector.broadcast %cst_82 : f32 to vector<8x128xf32>
    %232 = arith.mulf %231, %230 : vector<8x128xf32>
    %233 = math.tanh %232 : vector<8x128xf32>
    %cst_83 = arith.constant 5.000000e-01 : f32
    %234 = vector.broadcast %cst_83 : f32 to vector<8x128xf32>
    %235 = arith.mulf %234, %233 : vector<8x128xf32>
    %cst_84 = arith.constant 5.000000e-01 : f32
    %236 = vector.broadcast %cst_84 : f32 to vector<8x128xf32>
    %237 = arith.addf %235, %236 : vector<8x128xf32>
    %238 = vector.extract_strided_slice %195 {offsets = [0, 768], sizes = [8, 128], strides = [1, 1]} : vector<8x896xf32> to vector<8x128xf32>
    %cst_85 = arith.constant 0.000000e+00 : f32
    %239 = vector.broadcast %cst_85 : f32 to vector<8x128xf32>
    %240 = arith.maximumf %238, %239 : vector<8x128xf32>
    %241 = vector.broadcast %cst_85 : f32 to vector<8x128xf32>
    %242 = arith.subf %238, %241 : vector<8x128xf32>
    %243 = arith.cmpf one, %242, %242 : vector<8x128xf32>
    %244 = vector.broadcast %cst_85 : f32 to vector<8x128xf32>
    %245 = arith.addf %238, %244 : vector<8x128xf32>
    %246 = math.absf %242 : vector<8x128xf32>
    %cst_86 = arith.constant 0.000000e+00 : f32
    %247 = vector.broadcast %cst_86 : f32 to vector<8x128xf32>
    %248 = arith.subf %247, %246 : vector<8x128xf32>
    %249 = math.exp %248 : vector<8x128xf32>
    %250 = math.log1p %249 : vector<8x128xf32>
    %251 = arith.addf %240, %250 : vector<8x128xf32>
    %252 = arith.select %243, %245, %251 : vector<8x128xi1>, vector<8x128xf32>
    %253 = arith.mulf %211, %182 : vector<8x128xf32>
    %254 = arith.mulf %203, %221 : vector<8x128xf32>
    %255 = arith.addf %253, %254 : vector<8x128xf32>
    %256 = arith.mulf %237, %171 : vector<8x128xf32>
    %257 = arith.mulf %229, %221 : vector<8x128xf32>
    %258 = arith.addf %256, %257 : vector<8x128xf32>
    %c0_87 = arith.constant 0 : index
    %259 = arith.index_cast %190 : i32 to index
    %c0_88 = arith.constant 0 : index
    %260 = vector.load %arg3[%c0_87, %259, %c0_88] : memref<1x64x1xf32, #tpu.memory_space<vmem>>, vector<1x8x1xf32>
    %261 = vector.shape_cast %260 : vector<1x8x1xf32> to vector<8x1xf32>
    %262 = arith.subf %255, %258 : vector<8x128xf32>
    %cst_89 = arith.constant 0.000000e+00 : f32
    %263 = vector.broadcast %cst_89 : f32 to vector<8x128xf32>
    %264 = arith.subf %263, %252 : vector<8x128xf32>
    %265 = vector.broadcast %261 : vector<8x1xf32> to vector<8x128xf32>
    %266 = arith.mulf %264, %265 : vector<8x128xf32>
    %267 = math.exp %266 : vector<8x128xf32>
    %268 = arith.mulf %262, %267 : vector<8x128xf32>
    %269 = arith.addf %258, %268 : vector<8x128xf32>
    %270 = math.tanh %269 : vector<8x128xf32>
    %271 = arith.mulf %219, %270 : vector<8x128xf32>
    %c0_90 = arith.constant 0 : index
    %272 = arith.index_cast %190 : i32 to index
    %c0_91 = arith.constant 0 : index
    %273 = vector.load %arg7[%c0_90, %272, %c0_91] : memref<1x64x128xf32, #tpu.memory_space<vmem>>, vector<1x8x128xf32>
    %274 = vector.shape_cast %273 : vector<1x8x128xf32> to vector<8x128xf32>
    %275 = vector.shape_cast %271 : vector<8x128xf32> to vector<1x8x128xf32>
    tpu.vector_store %arg7[%c0_90, %272, %c0_91], %275 {strides = array<i32>} : memref<1x64x128xf32, #tpu.memory_space<vmem>>, vector<1x8x128xf32>,
    %c3_i32 = arith.constant 3 : i32
    %c8_i32_92 = arith.constant 8 : i32
    %276 = arith.muli %c3_i32, %c8_i32_92 : i32
    %277 = tpu.assume_multiple %276, 8 : i32
    %278 = arith.truncf %271 : vector<8x128xf32> to vector<8x128xbf16>
    %cst_93 = arith.constant dense<0.000000e+00> : vector<8x896xf32>
    %279 = tpu.matmul %278, %11, %cst_93 {dimension_numbers = #tpu.dot_dimension_numbers<[1], [0], [0], [1], [0, 0, 1, 1], [], []>} : vector<8x128xbf16>, vector<128x896xbf16>, vector<8x896xf32> -> vector<8x896xf32>
    %280 = arith.index_cast %277 : i32 to index
    %c0_94 = arith.constant 0 : index
    %281 = vector.load %arg8[%280, %c0_94] : memref<64x896xf32, #tpu.memory_space<vmem>>, vector<8x896xf32>
    %282 = arith.addf %279, %281 : vector<8x896xf32>
    %283 = vector.extract_strided_slice %282 {offsets = [0, 0], sizes = [8, 128], strides = [1, 1]} : vector<8x896xf32> to vector<8x128xf32>
    %cst_95 = arith.constant 5.000000e-01 : f32
    %284 = vector.broadcast %cst_95 : f32 to vector<8x128xf32>
    %285 = arith.mulf %284, %283 : vector<8x128xf32>
    %286 = math.tanh %285 : vector<8x128xf32>
    %cst_96 = arith.constant 5.000000e-01 : f32
    %287 = vector.broadcast %cst_96 : f32 to vector<8x128xf32>
    %288 = arith.mulf %287, %286 : vector<8x128xf32>
    %cst_97 = arith.constant 5.000000e-01 : f32
    %289 = vector.broadcast %cst_97 : f32 to vector<8x128xf32>
    %290 = arith.addf %288, %289 : vector<8x128xf32>
    %291 = vector.extract_strided_slice %282 {offsets = [0, 128], sizes = [8, 128], strides = [1, 1]} : vector<8x896xf32> to vector<8x128xf32>
    %cst_98 = arith.constant 5.000000e-01 : f32
    %292 = vector.broadcast %cst_98 : f32 to vector<8x128xf32>
    %293 = arith.mulf %292, %291 : vector<8x128xf32>
    %294 = math.tanh %293 : vector<8x128xf32>
    %cst_99 = arith.constant 5.000000e-01 : f32
    %295 = vector.broadcast %cst_99 : f32 to vector<8x128xf32>
    %296 = arith.mulf %295, %294 : vector<8x128xf32>
    %cst_100 = arith.constant 5.000000e-01 : f32
    %297 = vector.broadcast %cst_100 : f32 to vector<8x128xf32>
    %298 = arith.addf %296, %297 : vector<8x128xf32>
    %299 = vector.extract_strided_slice %282 {offsets = [0, 256], sizes = [8, 128], strides = [1, 1]} : vector<8x896xf32> to vector<8x128xf32>
    %cst_101 = arith.constant 5.000000e-01 : f32
    %300 = vector.broadcast %cst_101 : f32 to vector<8x128xf32>
    %301 = arith.mulf %300, %299 : vector<8x128xf32>
    %302 = math.tanh %301 : vector<8x128xf32>
    %cst_102 = arith.constant 5.000000e-01 : f32
    %303 = vector.broadcast %cst_102 : f32 to vector<8x128xf32>
    %304 = arith.mulf %303, %302 : vector<8x128xf32>
    %cst_103 = arith.constant 5.000000e-01 : f32
    %305 = vector.broadcast %cst_103 : f32 to vector<8x128xf32>
    %306 = arith.addf %304, %305 : vector<8x128xf32>
    %307 = vector.extract_strided_slice %282 {offsets = [0, 384], sizes = [8, 128], strides = [1, 1]} : vector<8x896xf32> to vector<8x128xf32>
    %308 = math.tanh %307 : vector<8x128xf32>
    %309 = vector.extract_strided_slice %282 {offsets = [0, 512], sizes = [8, 128], strides = [1, 1]} : vector<8x896xf32> to vector<8x128xf32>
    %cst_104 = arith.constant 5.000000e-01 : f32
    %310 = vector.broadcast %cst_104 : f32 to vector<8x128xf32>
    %311 = arith.mulf %310, %309 : vector<8x128xf32>
    %312 = math.tanh %311 : vector<8x128xf32>
    %cst_105 = arith.constant 5.000000e-01 : f32
    %313 = vector.broadcast %cst_105 : f32 to vector<8x128xf32>
    %314 = arith.mulf %313, %312 : vector<8x128xf32>
    %cst_106 = arith.constant 5.000000e-01 : f32
    %315 = vector.broadcast %cst_106 : f32 to vector<8x128xf32>
    %316 = arith.addf %314, %315 : vector<8x128xf32>
    %317 = vector.extract_strided_slice %282 {offsets = [0, 640], sizes = [8, 128], strides = [1, 1]} : vector<8x896xf32> to vector<8x128xf32>
    %cst_107 = arith.constant 5.000000e-01 : f32
    %318 = vector.broadcast %cst_107 : f32 to vector<8x128xf32>
    %319 = arith.mulf %318, %317 : vector<8x128xf32>
    %320 = math.tanh %319 : vector<8x128xf32>
    %cst_108 = arith.constant 5.000000e-01 : f32
    %321 = vector.broadcast %cst_108 : f32 to vector<8x128xf32>
    %322 = arith.mulf %321, %320 : vector<8x128xf32>
    %cst_109 = arith.constant 5.000000e-01 : f32
    %323 = vector.broadcast %cst_109 : f32 to vector<8x128xf32>
    %324 = arith.addf %322, %323 : vector<8x128xf32>
    %325 = vector.extract_strided_slice %282 {offsets = [0, 768], sizes = [8, 128], strides = [1, 1]} : vector<8x896xf32> to vector<8x128xf32>
    %cst_110 = arith.constant 0.000000e+00 : f32
    %326 = vector.broadcast %cst_110 : f32 to vector<8x128xf32>
    %327 = arith.maximumf %325, %326 : vector<8x128xf32>
    %328 = vector.broadcast %cst_110 : f32 to vector<8x128xf32>
    %329 = arith.subf %325, %328 : vector<8x128xf32>
    %330 = arith.cmpf one, %329, %329 : vector<8x128xf32>
    %331 = vector.broadcast %cst_110 : f32 to vector<8x128xf32>
    %332 = arith.addf %325, %331 : vector<8x128xf32>
    %333 = math.absf %329 : vector<8x128xf32>
    %cst_111 = arith.constant 0.000000e+00 : f32
    %334 = vector.broadcast %cst_111 : f32 to vector<8x128xf32>
    %335 = arith.subf %334, %333 : vector<8x128xf32>
    %336 = math.exp %335 : vector<8x128xf32>
    %337 = math.log1p %336 : vector<8x128xf32>
    %338 = arith.addf %327, %337 : vector<8x128xf32>
    %339 = arith.select %330, %332, %338 : vector<8x128xi1>, vector<8x128xf32>
    %340 = arith.mulf %298, %269 : vector<8x128xf32>
    %341 = arith.mulf %290, %308 : vector<8x128xf32>
    %342 = arith.addf %340, %341 : vector<8x128xf32>
    %343 = arith.mulf %324, %258 : vector<8x128xf32>
    %344 = arith.mulf %316, %308 : vector<8x128xf32>
    %345 = arith.addf %343, %344 : vector<8x128xf32>
    %c0_112 = arith.constant 0 : index
    %346 = arith.index_cast %277 : i32 to index
    %c0_113 = arith.constant 0 : index
    %347 = vector.load %arg3[%c0_112, %346, %c0_113] : memref<1x64x1xf32, #tpu.memory_space<vmem>>, vector<1x8x1xf32>
    %348 = vector.shape_cast %347 : vector<1x8x1xf32> to vector<8x1xf32>
    %349 = arith.subf %342, %345 : vector<8x128xf32>
    %cst_114 = arith.constant 0.000000e+00 : f32
    %350 = vector.broadcast %cst_114 : f32 to vector<8x128xf32>
    %351 = arith.subf %350, %339 : vector<8x128xf32>
    %352 = vector.broadcast %348 : vector<8x1xf32> to vector<8x128xf32>
    %353 = arith.mulf %351, %352 : vector<8x128xf32>
    %354 = math.exp %353 : vector<8x128xf32>
    %355 = arith.mulf %349, %354 : vector<8x128xf32>
    %356 = arith.addf %345, %355 : vector<8x128xf32>
    %357 = math.tanh %356 : vector<8x128xf32>
    %358 = arith.mulf %306, %357 : vector<8x128xf32>
    %c0_115 = arith.constant 0 : index
    %359 = arith.index_cast %277 : i32 to index
    %c0_116 = arith.constant 0 : index
    %360 = vector.load %arg7[%c0_115, %359, %c0_116] : memref<1x64x128xf32, #tpu.memory_space<vmem>>, vector<1x8x128xf32>
    %361 = vector.shape_cast %360 : vector<1x8x128xf32> to vector<8x128xf32>
    %362 = vector.shape_cast %358 : vector<8x128xf32> to vector<1x8x128xf32>
    tpu.vector_store %arg7[%c0_115, %359, %c0_116], %362 {strides = array<i32>} : memref<1x64x128xf32, #tpu.memory_space<vmem>>, vector<1x8x128xf32>,
    %c4_i32 = arith.constant 4 : i32
    %c8_i32_117 = arith.constant 8 : i32
    %363 = arith.muli %c4_i32, %c8_i32_117 : i32
    %364 = tpu.assume_multiple %363, 8 : i32
    %365 = arith.truncf %358 : vector<8x128xf32> to vector<8x128xbf16>
    %cst_118 = arith.constant dense<0.000000e+00> : vector<8x896xf32>
    %366 = tpu.matmul %365, %11, %cst_118 {dimension_numbers = #tpu.dot_dimension_numbers<[1], [0], [0], [1], [0, 0, 1, 1], [], []>} : vector<8x128xbf16>, vector<128x896xbf16>, vector<8x896xf32> -> vector<8x896xf32>
    %367 = arith.index_cast %364 : i32 to index
    %c0_119 = arith.constant 0 : index
    %368 = vector.load %arg8[%367, %c0_119] : memref<64x896xf32, #tpu.memory_space<vmem>>, vector<8x896xf32>
    %369 = arith.addf %366, %368 : vector<8x896xf32>
    %370 = vector.extract_strided_slice %369 {offsets = [0, 0], sizes = [8, 128], strides = [1, 1]} : vector<8x896xf32> to vector<8x128xf32>
    %cst_120 = arith.constant 5.000000e-01 : f32
    %371 = vector.broadcast %cst_120 : f32 to vector<8x128xf32>
    %372 = arith.mulf %371, %370 : vector<8x128xf32>
    %373 = math.tanh %372 : vector<8x128xf32>
    %cst_121 = arith.constant 5.000000e-01 : f32
    %374 = vector.broadcast %cst_121 : f32 to vector<8x128xf32>
    %375 = arith.mulf %374, %373 : vector<8x128xf32>
    %cst_122 = arith.constant 5.000000e-01 : f32
    %376 = vector.broadcast %cst_122 : f32 to vector<8x128xf32>
    %377 = arith.addf %375, %376 : vector<8x128xf32>
    %378 = vector.extract_strided_slice %369 {offsets = [0, 128], sizes = [8, 128], strides = [1, 1]} : vector<8x896xf32> to vector<8x128xf32>
    %cst_123 = arith.constant 5.000000e-01 : f32
    %379 = vector.broadcast %cst_123 : f32 to vector<8x128xf32>
    %380 = arith.mulf %379, %378 : vector<8x128xf32>
    %381 = math.tanh %380 : vector<8x128xf32>
    %cst_124 = arith.constant 5.000000e-01 : f32
    %382 = vector.broadcast %cst_124 : f32 to vector<8x128xf32>
    %383 = arith.mulf %382, %381 : vector<8x128xf32>
    %cst_125 = arith.constant 5.000000e-01 : f32
    %384 = vector.broadcast %cst_125 : f32 to vector<8x128xf32>
    %385 = arith.addf %383, %384 : vector<8x128xf32>
    %386 = vector.extract_strided_slice %369 {offsets = [0, 256], sizes = [8, 128], strides = [1, 1]} : vector<8x896xf32> to vector<8x128xf32>
    %cst_126 = arith.constant 5.000000e-01 : f32
    %387 = vector.broadcast %cst_126 : f32 to vector<8x128xf32>
    %388 = arith.mulf %387, %386 : vector<8x128xf32>
    %389 = math.tanh %388 : vector<8x128xf32>
    %cst_127 = arith.constant 5.000000e-01 : f32
    %390 = vector.broadcast %cst_127 : f32 to vector<8x128xf32>
    %391 = arith.mulf %390, %389 : vector<8x128xf32>
    %cst_128 = arith.constant 5.000000e-01 : f32
    %392 = vector.broadcast %cst_128 : f32 to vector<8x128xf32>
    %393 = arith.addf %391, %392 : vector<8x128xf32>
    %394 = vector.extract_strided_slice %369 {offsets = [0, 384], sizes = [8, 128], strides = [1, 1]} : vector<8x896xf32> to vector<8x128xf32>
    %395 = math.tanh %394 : vector<8x128xf32>
    %396 = vector.extract_strided_slice %369 {offsets = [0, 512], sizes = [8, 128], strides = [1, 1]} : vector<8x896xf32> to vector<8x128xf32>
    %cst_129 = arith.constant 5.000000e-01 : f32
    %397 = vector.broadcast %cst_129 : f32 to vector<8x128xf32>
    %398 = arith.mulf %397, %396 : vector<8x128xf32>
    %399 = math.tanh %398 : vector<8x128xf32>
    %cst_130 = arith.constant 5.000000e-01 : f32
    %400 = vector.broadcast %cst_130 : f32 to vector<8x128xf32>
    %401 = arith.mulf %400, %399 : vector<8x128xf32>
    %cst_131 = arith.constant 5.000000e-01 : f32
    %402 = vector.broadcast %cst_131 : f32 to vector<8x128xf32>
    %403 = arith.addf %401, %402 : vector<8x128xf32>
    %404 = vector.extract_strided_slice %369 {offsets = [0, 640], sizes = [8, 128], strides = [1, 1]} : vector<8x896xf32> to vector<8x128xf32>
    %cst_132 = arith.constant 5.000000e-01 : f32
    %405 = vector.broadcast %cst_132 : f32 to vector<8x128xf32>
    %406 = arith.mulf %405, %404 : vector<8x128xf32>
    %407 = math.tanh %406 : vector<8x128xf32>
    %cst_133 = arith.constant 5.000000e-01 : f32
    %408 = vector.broadcast %cst_133 : f32 to vector<8x128xf32>
    %409 = arith.mulf %408, %407 : vector<8x128xf32>
    %cst_134 = arith.constant 5.000000e-01 : f32
    %410 = vector.broadcast %cst_134 : f32 to vector<8x128xf32>
    %411 = arith.addf %409, %410 : vector<8x128xf32>
    %412 = vector.extract_strided_slice %369 {offsets = [0, 768], sizes = [8, 128], strides = [1, 1]} : vector<8x896xf32> to vector<8x128xf32>
    %cst_135 = arith.constant 0.000000e+00 : f32
    %413 = vector.broadcast %cst_135 : f32 to vector<8x128xf32>
    %414 = arith.maximumf %412, %413 : vector<8x128xf32>
    %415 = vector.broadcast %cst_135 : f32 to vector<8x128xf32>
    %416 = arith.subf %412, %415 : vector<8x128xf32>
    %417 = arith.cmpf one, %416, %416 : vector<8x128xf32>
    %418 = vector.broadcast %cst_135 : f32 to vector<8x128xf32>
    %419 = arith.addf %412, %418 : vector<8x128xf32>
    %420 = math.absf %416 : vector<8x128xf32>
    %cst_136 = arith.constant 0.000000e+00 : f32
    %421 = vector.broadcast %cst_136 : f32 to vector<8x128xf32>
    %422 = arith.subf %421, %420 : vector<8x128xf32>
    %423 = math.exp %422 : vector<8x128xf32>
    %424 = math.log1p %423 : vector<8x128xf32>
    %425 = arith.addf %414, %424 : vector<8x128xf32>
    %426 = arith.select %417, %419, %425 : vector<8x128xi1>, vector<8x128xf32>
    %427 = arith.mulf %385, %356 : vector<8x128xf32>
    %428 = arith.mulf %377, %395 : vector<8x128xf32>
    %429 = arith.addf %427, %428 : vector<8x128xf32>
    %430 = arith.mulf %411, %345 : vector<8x128xf32>
    %431 = arith.mulf %403, %395 : vector<8x128xf32>
    %432 = arith.addf %430, %431 : vector<8x128xf32>
    %c0_137 = arith.constant 0 : index
    %433 = arith.index_cast %364 : i32 to index
    %c0_138 = arith.constant 0 : index
    %434 = vector.load %arg3[%c0_137, %433, %c0_138] : memref<1x64x1xf32, #tpu.memory_space<vmem>>, vector<1x8x1xf32>
    %435 = vector.shape_cast %434 : vector<1x8x1xf32> to vector<8x1xf32>
    %436 = arith.subf %429, %432 : vector<8x128xf32>
    %cst_139 = arith.constant 0.000000e+00 : f32
    %437 = vector.broadcast %cst_139 : f32 to vector<8x128xf32>
    %438 = arith.subf %437, %426 : vector<8x128xf32>
    %439 = vector.broadcast %435 : vector<8x1xf32> to vector<8x128xf32>
    %440 = arith.mulf %438, %439 : vector<8x128xf32>
    %441 = math.exp %440 : vector<8x128xf32>
    %442 = arith.mulf %436, %441 : vector<8x128xf32>
    %443 = arith.addf %432, %442 : vector<8x128xf32>
    %444 = math.tanh %443 : vector<8x128xf32>
    %445 = arith.mulf %393, %444 : vector<8x128xf32>
    %c0_140 = arith.constant 0 : index
    %446 = arith.index_cast %364 : i32 to index
    %c0_141 = arith.constant 0 : index
    %447 = vector.load %arg7[%c0_140, %446, %c0_141] : memref<1x64x128xf32, #tpu.memory_space<vmem>>, vector<1x8x128xf32>
    %448 = vector.shape_cast %447 : vector<1x8x128xf32> to vector<8x128xf32>
    %449 = vector.shape_cast %445 : vector<8x128xf32> to vector<1x8x128xf32>
    tpu.vector_store %arg7[%c0_140, %446, %c0_141], %449 {strides = array<i32>} : memref<1x64x128xf32, #tpu.memory_space<vmem>>, vector<1x8x128xf32>,
    %c5_i32 = arith.constant 5 : i32
    %c8_i32_142 = arith.constant 8 : i32
    %450 = arith.muli %c5_i32, %c8_i32_142 : i32
    %451 = tpu.assume_multiple %450, 8 : i32
    %452 = arith.truncf %445 : vector<8x128xf32> to vector<8x128xbf16>
    %cst_143 = arith.constant dense<0.000000e+00> : vector<8x896xf32>
    %453 = tpu.matmul %452, %11, %cst_143 {dimension_numbers = #tpu.dot_dimension_numbers<[1], [0], [0], [1], [0, 0, 1, 1], [], []>} : vector<8x128xbf16>, vector<128x896xbf16>, vector<8x896xf32> -> vector<8x896xf32>
    %454 = arith.index_cast %451 : i32 to index
    %c0_144 = arith.constant 0 : index
    %455 = vector.load %arg8[%454, %c0_144] : memref<64x896xf32, #tpu.memory_space<vmem>>, vector<8x896xf32>
    %456 = arith.addf %453, %455 : vector<8x896xf32>
    %457 = vector.extract_strided_slice %456 {offsets = [0, 0], sizes = [8, 128], strides = [1, 1]} : vector<8x896xf32> to vector<8x128xf32>
    %cst_145 = arith.constant 5.000000e-01 : f32
    %458 = vector.broadcast %cst_145 : f32 to vector<8x128xf32>
    %459 = arith.mulf %458, %457 : vector<8x128xf32>
    %460 = math.tanh %459 : vector<8x128xf32>
    %cst_146 = arith.constant 5.000000e-01 : f32
    %461 = vector.broadcast %cst_146 : f32 to vector<8x128xf32>
    %462 = arith.mulf %461, %460 : vector<8x128xf32>
    %cst_147 = arith.constant 5.000000e-01 : f32
    %463 = vector.broadcast %cst_147 : f32 to vector<8x128xf32>
    %464 = arith.addf %462, %463 : vector<8x128xf32>
    %465 = vector.extract_strided_slice %456 {offsets = [0, 128], sizes = [8, 128], strides = [1, 1]} : vector<8x896xf32> to vector<8x128xf32>
    %cst_148 = arith.constant 5.000000e-01 : f32
    %466 = vector.broadcast %cst_148 : f32 to vector<8x128xf32>
    %467 = arith.mulf %466, %465 : vector<8x128xf32>
    %468 = math.tanh %467 : vector<8x128xf32>
    %cst_149 = arith.constant 5.000000e-01 : f32
    %469 = vector.broadcast %cst_149 : f32 to vector<8x128xf32>
    %470 = arith.mulf %469, %468 : vector<8x128xf32>
    %cst_150 = arith.constant 5.000000e-01 : f32
    %471 = vector.broadcast %cst_150 : f32 to vector<8x128xf32>
    %472 = arith.addf %470, %471 : vector<8x128xf32>
    %473 = vector.extract_strided_slice %456 {offsets = [0, 256], sizes = [8, 128], strides = [1, 1]} : vector<8x896xf32> to vector<8x128xf32>
    %cst_151 = arith.constant 5.000000e-01 : f32
    %474 = vector.broadcast %cst_151 : f32 to vector<8x128xf32>
    %475 = arith.mulf %474, %473 : vector<8x128xf32>
    %476 = math.tanh %475 : vector<8x128xf32>
    %cst_152 = arith.constant 5.000000e-01 : f32
    %477 = vector.broadcast %cst_152 : f32 to vector<8x128xf32>
    %478 = arith.mulf %477, %476 : vector<8x128xf32>
    %cst_153 = arith.constant 5.000000e-01 : f32
    %479 = vector.broadcast %cst_153 : f32 to vector<8x128xf32>
    %480 = arith.addf %478, %479 : vector<8x128xf32>
    %481 = vector.extract_strided_slice %456 {offsets = [0, 384], sizes = [8, 128], strides = [1, 1]} : vector<8x896xf32> to vector<8x128xf32>
    %482 = math.tanh %481 : vector<8x128xf32>
    %483 = vector.extract_strided_slice %456 {offsets = [0, 512], sizes = [8, 128], strides = [1, 1]} : vector<8x896xf32> to vector<8x128xf32>
    %cst_154 = arith.constant 5.000000e-01 : f32
    %484 = vector.broadcast %cst_154 : f32 to vector<8x128xf32>
    %485 = arith.mulf %484, %483 : vector<8x128xf32>
    %486 = math.tanh %485 : vector<8x128xf32>
    %cst_155 = arith.constant 5.000000e-01 : f32
    %487 = vector.broadcast %cst_155 : f32 to vector<8x128xf32>
    %488 = arith.mulf %487, %486 : vector<8x128xf32>
    %cst_156 = arith.constant 5.000000e-01 : f32
    %489 = vector.broadcast %cst_156 : f32 to vector<8x128xf32>
    %490 = arith.addf %488, %489 : vector<8x128xf32>
    %491 = vector.extract_strided_slice %456 {offsets = [0, 640], sizes = [8, 128], strides = [1, 1]} : vector<8x896xf32> to vector<8x128xf32>
    %cst_157 = arith.constant 5.000000e-01 : f32
    %492 = vector.broadcast %cst_157 : f32 to vector<8x128xf32>
    %493 = arith.mulf %492, %491 : vector<8x128xf32>
    %494 = math.tanh %493 : vector<8x128xf32>
    %cst_158 = arith.constant 5.000000e-01 : f32
    %495 = vector.broadcast %cst_158 : f32 to vector<8x128xf32>
    %496 = arith.mulf %495, %494 : vector<8x128xf32>
    %cst_159 = arith.constant 5.000000e-01 : f32
    %497 = vector.broadcast %cst_159 : f32 to vector<8x128xf32>
    %498 = arith.addf %496, %497 : vector<8x128xf32>
    %499 = vector.extract_strided_slice %456 {offsets = [0, 768], sizes = [8, 128], strides = [1, 1]} : vector<8x896xf32> to vector<8x128xf32>
    %cst_160 = arith.constant 0.000000e+00 : f32
    %500 = vector.broadcast %cst_160 : f32 to vector<8x128xf32>
    %501 = arith.maximumf %499, %500 : vector<8x128xf32>
    %502 = vector.broadcast %cst_160 : f32 to vector<8x128xf32>
    %503 = arith.subf %499, %502 : vector<8x128xf32>
    %504 = arith.cmpf one, %503, %503 : vector<8x128xf32>
    %505 = vector.broadcast %cst_160 : f32 to vector<8x128xf32>
    %506 = arith.addf %499, %505 : vector<8x128xf32>
    %507 = math.absf %503 : vector<8x128xf32>
    %cst_161 = arith.constant 0.000000e+00 : f32
    %508 = vector.broadcast %cst_161 : f32 to vector<8x128xf32>
    %509 = arith.subf %508, %507 : vector<8x128xf32>
    %510 = math.exp %509 : vector<8x128xf32>
    %511 = math.log1p %510 : vector<8x128xf32>
    %512 = arith.addf %501, %511 : vector<8x128xf32>
    %513 = arith.select %504, %506, %512 : vector<8x128xi1>, vector<8x128xf32>
    %514 = arith.mulf %472, %443 : vector<8x128xf32>
    %515 = arith.mulf %464, %482 : vector<8x128xf32>
    %516 = arith.addf %514, %515 : vector<8x128xf32>
    %517 = arith.mulf %498, %432 : vector<8x128xf32>
    %518 = arith.mulf %490, %482 : vector<8x128xf32>
    %519 = arith.addf %517, %518 : vector<8x128xf32>
    %c0_162 = arith.constant 0 : index
    %520 = arith.index_cast %451 : i32 to index
    %c0_163 = arith.constant 0 : index
    %521 = vector.load %arg3[%c0_162, %520, %c0_163] : memref<1x64x1xf32, #tpu.memory_space<vmem>>, vector<1x8x1xf32>
    %522 = vector.shape_cast %521 : vector<1x8x1xf32> to vector<8x1xf32>
    %523 = arith.subf %516, %519 : vector<8x128xf32>
    %cst_164 = arith.constant 0.000000e+00 : f32
    %524 = vector.broadcast %cst_164 : f32 to vector<8x128xf32>
    %525 = arith.subf %524, %513 : vector<8x128xf32>
    %526 = vector.broadcast %522 : vector<8x1xf32> to vector<8x128xf32>
    %527 = arith.mulf %525, %526 : vector<8x128xf32>
    %528 = math.exp %527 : vector<8x128xf32>
    %529 = arith.mulf %523, %528 : vector<8x128xf32>
    %530 = arith.addf %519, %529 : vector<8x128xf32>
    %531 = math.tanh %530 : vector<8x128xf32>
    %532 = arith.mulf %480, %531 : vector<8x128xf32>
    %c0_165 = arith.constant 0 : index
    %533 = arith.index_cast %451 : i32 to index
    %c0_166 = arith.constant 0 : index
    %534 = vector.load %arg7[%c0_165, %533, %c0_166] : memref<1x64x128xf32, #tpu.memory_space<vmem>>, vector<1x8x128xf32>
    %535 = vector.shape_cast %534 : vector<1x8x128xf32> to vector<8x128xf32>
    %536 = vector.shape_cast %532 : vector<8x128xf32> to vector<1x8x128xf32>
    tpu.vector_store %arg7[%c0_165, %533, %c0_166], %536 {strides = array<i32>} : memref<1x64x128xf32, #tpu.memory_space<vmem>>, vector<1x8x128xf32>,
    %c6_i32 = arith.constant 6 : i32
    %c8_i32_167 = arith.constant 8 : i32
    %537 = arith.muli %c6_i32, %c8_i32_167 : i32
    %538 = tpu.assume_multiple %537, 8 : i32
    %539 = arith.truncf %532 : vector<8x128xf32> to vector<8x128xbf16>
    %cst_168 = arith.constant dense<0.000000e+00> : vector<8x896xf32>
    %540 = tpu.matmul %539, %11, %cst_168 {dimension_numbers = #tpu.dot_dimension_numbers<[1], [0], [0], [1], [0, 0, 1, 1], [], []>} : vector<8x128xbf16>, vector<128x896xbf16>, vector<8x896xf32> -> vector<8x896xf32>
    %541 = arith.index_cast %538 : i32 to index
    %c0_169 = arith.constant 0 : index
    %542 = vector.load %arg8[%541, %c0_169] : memref<64x896xf32, #tpu.memory_space<vmem>>, vector<8x896xf32>
    %543 = arith.addf %540, %542 : vector<8x896xf32>
    %544 = vector.extract_strided_slice %543 {offsets = [0, 0], sizes = [8, 128], strides = [1, 1]} : vector<8x896xf32> to vector<8x128xf32>
    %cst_170 = arith.constant 5.000000e-01 : f32
    %545 = vector.broadcast %cst_170 : f32 to vector<8x128xf32>
    %546 = arith.mulf %545, %544 : vector<8x128xf32>
    %547 = math.tanh %546 : vector<8x128xf32>
    %cst_171 = arith.constant 5.000000e-01 : f32
    %548 = vector.broadcast %cst_171 : f32 to vector<8x128xf32>
    %549 = arith.mulf %548, %547 : vector<8x128xf32>
    %cst_172 = arith.constant 5.000000e-01 : f32
    %550 = vector.broadcast %cst_172 : f32 to vector<8x128xf32>
    %551 = arith.addf %549, %550 : vector<8x128xf32>
    %552 = vector.extract_strided_slice %543 {offsets = [0, 128], sizes = [8, 128], strides = [1, 1]} : vector<8x896xf32> to vector<8x128xf32>
    %cst_173 = arith.constant 5.000000e-01 : f32
    %553 = vector.broadcast %cst_173 : f32 to vector<8x128xf32>
    %554 = arith.mulf %553, %552 : vector<8x128xf32>
    %555 = math.tanh %554 : vector<8x128xf32>
    %cst_174 = arith.constant 5.000000e-01 : f32
    %556 = vector.broadcast %cst_174 : f32 to vector<8x128xf32>
    %557 = arith.mulf %556, %555 : vector<8x128xf32>
    %cst_175 = arith.constant 5.000000e-01 : f32
    %558 = vector.broadcast %cst_175 : f32 to vector<8x128xf32>
    %559 = arith.addf %557, %558 : vector<8x128xf32>
    %560 = vector.extract_strided_slice %543 {offsets = [0, 256], sizes = [8, 128], strides = [1, 1]} : vector<8x896xf32> to vector<8x128xf32>
    %cst_176 = arith.constant 5.000000e-01 : f32
    %561 = vector.broadcast %cst_176 : f32 to vector<8x128xf32>
    %562 = arith.mulf %561, %560 : vector<8x128xf32>
    %563 = math.tanh %562 : vector<8x128xf32>
    %cst_177 = arith.constant 5.000000e-01 : f32
    %564 = vector.broadcast %cst_177 : f32 to vector<8x128xf32>
    %565 = arith.mulf %564, %563 : vector<8x128xf32>
    %cst_178 = arith.constant 5.000000e-01 : f32
    %566 = vector.broadcast %cst_178 : f32 to vector<8x128xf32>
    %567 = arith.addf %565, %566 : vector<8x128xf32>
    %568 = vector.extract_strided_slice %543 {offsets = [0, 384], sizes = [8, 128], strides = [1, 1]} : vector<8x896xf32> to vector<8x128xf32>
    %569 = math.tanh %568 : vector<8x128xf32>
    %570 = vector.extract_strided_slice %543 {offsets = [0, 512], sizes = [8, 128], strides = [1, 1]} : vector<8x896xf32> to vector<8x128xf32>
    %cst_179 = arith.constant 5.000000e-01 : f32
    %571 = vector.broadcast %cst_179 : f32 to vector<8x128xf32>
    %572 = arith.mulf %571, %570 : vector<8x128xf32>
    %573 = math.tanh %572 : vector<8x128xf32>
    %cst_180 = arith.constant 5.000000e-01 : f32
    %574 = vector.broadcast %cst_180 : f32 to vector<8x128xf32>
    %575 = arith.mulf %574, %573 : vector<8x128xf32>
    %cst_181 = arith.constant 5.000000e-01 : f32
    %576 = vector.broadcast %cst_181 : f32 to vector<8x128xf32>
    %577 = arith.addf %575, %576 : vector<8x128xf32>
    %578 = vector.extract_strided_slice %543 {offsets = [0, 640], sizes = [8, 128], strides = [1, 1]} : vector<8x896xf32> to vector<8x128xf32>
    %cst_182 = arith.constant 5.000000e-01 : f32
    %579 = vector.broadcast %cst_182 : f32 to vector<8x128xf32>
    %580 = arith.mulf %579, %578 : vector<8x128xf32>
    %581 = math.tanh %580 : vector<8x128xf32>
    %cst_183 = arith.constant 5.000000e-01 : f32
    %582 = vector.broadcast %cst_183 : f32 to vector<8x128xf32>
    %583 = arith.mulf %582, %581 : vector<8x128xf32>
    %cst_184 = arith.constant 5.000000e-01 : f32
    %584 = vector.broadcast %cst_184 : f32 to vector<8x128xf32>
    %585 = arith.addf %583, %584 : vector<8x128xf32>
    %586 = vector.extract_strided_slice %543 {offsets = [0, 768], sizes = [8, 128], strides = [1, 1]} : vector<8x896xf32> to vector<8x128xf32>
    %cst_185 = arith.constant 0.000000e+00 : f32
    %587 = vector.broadcast %cst_185 : f32 to vector<8x128xf32>
    %588 = arith.maximumf %586, %587 : vector<8x128xf32>
    %589 = vector.broadcast %cst_185 : f32 to vector<8x128xf32>
    %590 = arith.subf %586, %589 : vector<8x128xf32>
    %591 = arith.cmpf one, %590, %590 : vector<8x128xf32>
    %592 = vector.broadcast %cst_185 : f32 to vector<8x128xf32>
    %593 = arith.addf %586, %592 : vector<8x128xf32>
    %594 = math.absf %590 : vector<8x128xf32>
    %cst_186 = arith.constant 0.000000e+00 : f32
    %595 = vector.broadcast %cst_186 : f32 to vector<8x128xf32>
    %596 = arith.subf %595, %594 : vector<8x128xf32>
    %597 = math.exp %596 : vector<8x128xf32>
    %598 = math.log1p %597 : vector<8x128xf32>
    %599 = arith.addf %588, %598 : vector<8x128xf32>
    %600 = arith.select %591, %593, %599 : vector<8x128xi1>, vector<8x128xf32>
    %601 = arith.mulf %559, %530 : vector<8x128xf32>
    %602 = arith.mulf %551, %569 : vector<8x128xf32>
    %603 = arith.addf %601, %602 : vector<8x128xf32>
    %604 = arith.mulf %585, %519 : vector<8x128xf32>
    %605 = arith.mulf %577, %569 : vector<8x128xf32>
    %606 = arith.addf %604, %605 : vector<8x128xf32>
    %c0_187 = arith.constant 0 : index
    %607 = arith.index_cast %538 : i32 to index
    %c0_188 = arith.constant 0 : index
    %608 = vector.load %arg3[%c0_187, %607, %c0_188] : memref<1x64x1xf32, #tpu.memory_space<vmem>>, vector<1x8x1xf32>
    %609 = vector.shape_cast %608 : vector<1x8x1xf32> to vector<8x1xf32>
    %610 = arith.subf %603, %606 : vector<8x128xf32>
    %cst_189 = arith.constant 0.000000e+00 : f32
    %611 = vector.broadcast %cst_189 : f32 to vector<8x128xf32>
    %612 = arith.subf %611, %600 : vector<8x128xf32>
    %613 = vector.broadcast %609 : vector<8x1xf32> to vector<8x128xf32>
    %614 = arith.mulf %612, %613 : vector<8x128xf32>
    %615 = math.exp %614 : vector<8x128xf32>
    %616 = arith.mulf %610, %615 : vector<8x128xf32>
    %617 = arith.addf %606, %616 : vector<8x128xf32>
    %618 = math.tanh %617 : vector<8x128xf32>
    %619 = arith.mulf %567, %618 : vector<8x128xf32>
    %c0_190 = arith.constant 0 : index
    %620 = arith.index_cast %538 : i32 to index
    %c0_191 = arith.constant 0 : index
    %621 = vector.load %arg7[%c0_190, %620, %c0_191] : memref<1x64x128xf32, #tpu.memory_space<vmem>>, vector<1x8x128xf32>
    %622 = vector.shape_cast %621 : vector<1x8x128xf32> to vector<8x128xf32>
    %623 = vector.shape_cast %619 : vector<8x128xf32> to vector<1x8x128xf32>
    tpu.vector_store %arg7[%c0_190, %620, %c0_191], %623 {strides = array<i32>} : memref<1x64x128xf32, #tpu.memory_space<vmem>>, vector<1x8x128xf32>,
    %c7_i32 = arith.constant 7 : i32
    %c8_i32_192 = arith.constant 8 : i32
    %624 = arith.muli %c7_i32, %c8_i32_192 : i32
    %625 = tpu.assume_multiple %624, 8 : i32
    %626 = arith.truncf %619 : vector<8x128xf32> to vector<8x128xbf16>
    %cst_193 = arith.constant dense<0.000000e+00> : vector<8x896xf32>
    %627 = tpu.matmul %626, %11, %cst_193 {dimension_numbers = #tpu.dot_dimension_numbers<[1], [0], [0], [1], [0, 0, 1, 1], [], []>} : vector<8x128xbf16>, vector<128x896xbf16>, vector<8x896xf32> -> vector<8x896xf32>
    %628 = arith.index_cast %625 : i32 to index
    %c0_194 = arith.constant 0 : index
    %629 = vector.load %arg8[%628, %c0_194] : memref<64x896xf32, #tpu.memory_space<vmem>>, vector<8x896xf32>
    %630 = arith.addf %627, %629 : vector<8x896xf32>
    %631 = vector.extract_strided_slice %630 {offsets = [0, 0], sizes = [8, 128], strides = [1, 1]} : vector<8x896xf32> to vector<8x128xf32>
    %cst_195 = arith.constant 5.000000e-01 : f32
    %632 = vector.broadcast %cst_195 : f32 to vector<8x128xf32>
    %633 = arith.mulf %632, %631 : vector<8x128xf32>
    %634 = math.tanh %633 : vector<8x128xf32>
    %cst_196 = arith.constant 5.000000e-01 : f32
    %635 = vector.broadcast %cst_196 : f32 to vector<8x128xf32>
    %636 = arith.mulf %635, %634 : vector<8x128xf32>
    %cst_197 = arith.constant 5.000000e-01 : f32
    %637 = vector.broadcast %cst_197 : f32 to vector<8x128xf32>
    %638 = arith.addf %636, %637 : vector<8x128xf32>
    %639 = vector.extract_strided_slice %630 {offsets = [0, 128], sizes = [8, 128], strides = [1, 1]} : vector<8x896xf32> to vector<8x128xf32>
    %cst_198 = arith.constant 5.000000e-01 : f32
    %640 = vector.broadcast %cst_198 : f32 to vector<8x128xf32>
    %641 = arith.mulf %640, %639 : vector<8x128xf32>
    %642 = math.tanh %641 : vector<8x128xf32>
    %cst_199 = arith.constant 5.000000e-01 : f32
    %643 = vector.broadcast %cst_199 : f32 to vector<8x128xf32>
    %644 = arith.mulf %643, %642 : vector<8x128xf32>
    %cst_200 = arith.constant 5.000000e-01 : f32
    %645 = vector.broadcast %cst_200 : f32 to vector<8x128xf32>
    %646 = arith.addf %644, %645 : vector<8x128xf32>
    %647 = vector.extract_strided_slice %630 {offsets = [0, 256], sizes = [8, 128], strides = [1, 1]} : vector<8x896xf32> to vector<8x128xf32>
    %cst_201 = arith.constant 5.000000e-01 : f32
    %648 = vector.broadcast %cst_201 : f32 to vector<8x128xf32>
    %649 = arith.mulf %648, %647 : vector<8x128xf32>
    %650 = math.tanh %649 : vector<8x128xf32>
    %cst_202 = arith.constant 5.000000e-01 : f32
    %651 = vector.broadcast %cst_202 : f32 to vector<8x128xf32>
    %652 = arith.mulf %651, %650 : vector<8x128xf32>
    %cst_203 = arith.constant 5.000000e-01 : f32
    %653 = vector.broadcast %cst_203 : f32 to vector<8x128xf32>
    %654 = arith.addf %652, %653 : vector<8x128xf32>
    %655 = vector.extract_strided_slice %630 {offsets = [0, 384], sizes = [8, 128], strides = [1, 1]} : vector<8x896xf32> to vector<8x128xf32>
    %656 = math.tanh %655 : vector<8x128xf32>
    %657 = vector.extract_strided_slice %630 {offsets = [0, 512], sizes = [8, 128], strides = [1, 1]} : vector<8x896xf32> to vector<8x128xf32>
    %cst_204 = arith.constant 5.000000e-01 : f32
    %658 = vector.broadcast %cst_204 : f32 to vector<8x128xf32>
    %659 = arith.mulf %658, %657 : vector<8x128xf32>
    %660 = math.tanh %659 : vector<8x128xf32>
    %cst_205 = arith.constant 5.000000e-01 : f32
    %661 = vector.broadcast %cst_205 : f32 to vector<8x128xf32>
    %662 = arith.mulf %661, %660 : vector<8x128xf32>
    %cst_206 = arith.constant 5.000000e-01 : f32
    %663 = vector.broadcast %cst_206 : f32 to vector<8x128xf32>
    %664 = arith.addf %662, %663 : vector<8x128xf32>
    %665 = vector.extract_strided_slice %630 {offsets = [0, 640], sizes = [8, 128], strides = [1, 1]} : vector<8x896xf32> to vector<8x128xf32>
    %cst_207 = arith.constant 5.000000e-01 : f32
    %666 = vector.broadcast %cst_207 : f32 to vector<8x128xf32>
    %667 = arith.mulf %666, %665 : vector<8x128xf32>
    %668 = math.tanh %667 : vector<8x128xf32>
    %cst_208 = arith.constant 5.000000e-01 : f32
    %669 = vector.broadcast %cst_208 : f32 to vector<8x128xf32>
    %670 = arith.mulf %669, %668 : vector<8x128xf32>
    %cst_209 = arith.constant 5.000000e-01 : f32
    %671 = vector.broadcast %cst_209 : f32 to vector<8x128xf32>
    %672 = arith.addf %670, %671 : vector<8x128xf32>
    %673 = vector.extract_strided_slice %630 {offsets = [0, 768], sizes = [8, 128], strides = [1, 1]} : vector<8x896xf32> to vector<8x128xf32>
    %cst_210 = arith.constant 0.000000e+00 : f32
    %674 = vector.broadcast %cst_210 : f32 to vector<8x128xf32>
    %675 = arith.maximumf %673, %674 : vector<8x128xf32>
    %676 = vector.broadcast %cst_210 : f32 to vector<8x128xf32>
    %677 = arith.subf %673, %676 : vector<8x128xf32>
    %678 = arith.cmpf one, %677, %677 : vector<8x128xf32>
    %679 = vector.broadcast %cst_210 : f32 to vector<8x128xf32>
    %680 = arith.addf %673, %679 : vector<8x128xf32>
    %681 = math.absf %677 : vector<8x128xf32>
    %cst_211 = arith.constant 0.000000e+00 : f32
    %682 = vector.broadcast %cst_211 : f32 to vector<8x128xf32>
    %683 = arith.subf %682, %681 : vector<8x128xf32>
    %684 = math.exp %683 : vector<8x128xf32>
    %685 = math.log1p %684 : vector<8x128xf32>
    %686 = arith.addf %675, %685 : vector<8x128xf32>
    %687 = arith.select %678, %680, %686 : vector<8x128xi1>, vector<8x128xf32>
    %688 = arith.mulf %646, %617 : vector<8x128xf32>
    %689 = arith.mulf %638, %656 : vector<8x128xf32>
    %690 = arith.addf %688, %689 : vector<8x128xf32>
    %691 = arith.mulf %672, %606 : vector<8x128xf32>
    %692 = arith.mulf %664, %656 : vector<8x128xf32>
    %693 = arith.addf %691, %692 : vector<8x128xf32>
    %c0_212 = arith.constant 0 : index
    %694 = arith.index_cast %625 : i32 to index
    %c0_213 = arith.constant 0 : index
    %695 = vector.load %arg3[%c0_212, %694, %c0_213] : memref<1x64x1xf32, #tpu.memory_space<vmem>>, vector<1x8x1xf32>
    %696 = vector.shape_cast %695 : vector<1x8x1xf32> to vector<8x1xf32>
    %697 = arith.subf %690, %693 : vector<8x128xf32>
    %cst_214 = arith.constant 0.000000e+00 : f32
    %698 = vector.broadcast %cst_214 : f32 to vector<8x128xf32>
    %699 = arith.subf %698, %687 : vector<8x128xf32>
    %700 = vector.broadcast %696 : vector<8x1xf32> to vector<8x128xf32>
    %701 = arith.mulf %699, %700 : vector<8x128xf32>
    %702 = math.exp %701 : vector<8x128xf32>
    %703 = arith.mulf %697, %702 : vector<8x128xf32>
    %704 = arith.addf %693, %703 : vector<8x128xf32>
    %705 = math.tanh %704 : vector<8x128xf32>
    %706 = arith.mulf %654, %705 : vector<8x128xf32>
    %c0_215 = arith.constant 0 : index
    %707 = arith.index_cast %625 : i32 to index
    %c0_216 = arith.constant 0 : index
    %708 = vector.load %arg7[%c0_215, %707, %c0_216] : memref<1x64x128xf32, #tpu.memory_space<vmem>>, vector<1x8x128xf32>
    %709 = vector.shape_cast %708 : vector<1x8x128xf32> to vector<8x128xf32>
    %710 = vector.shape_cast %706 : vector<8x128xf32> to vector<1x8x128xf32>
    tpu.vector_store %arg7[%c0_215, %707, %c0_216], %710 {strides = array<i32>} : memref<1x64x128xf32, #tpu.memory_space<vmem>>, vector<1x8x128xf32>,
    %c8_i32_217 = arith.constant 8 : i32
    %c0_218 = arith.constant 0 : index
    %c0_219 = arith.constant 0 : index
    %711 = vector.load %arg9[%c0_218, %c0_219] : memref<8x128xf32, #tpu.memory_space<vmem>>, vector<8x128xf32>
    tpu.vector_store %arg9[%c0_218, %c0_219], %706 {strides = array<i32>} : memref<8x128xf32, #tpu.memory_space<vmem>>, vector<8x128xf32>,
    %c0_220 = arith.constant 0 : index
    %c0_221 = arith.constant 0 : index
    %712 = vector.load %arg10[%c0_220, %c0_221] : memref<8x128xf32, #tpu.memory_space<vmem>>, vector<8x128xf32>
    tpu.vector_store %arg10[%c0_220, %c0_221], %704 {strides = array<i32>} : memref<8x128xf32, #tpu.memory_space<vmem>>, vector<8x128xf32>,
    %c0_222 = arith.constant 0 : index
    %c0_223 = arith.constant 0 : index
    %713 = vector.load %arg11[%c0_222, %c0_223] : memref<8x128xf32, #tpu.memory_space<vmem>>, vector<8x128xf32>
    tpu.vector_store %arg11[%c0_222, %c0_223], %693 {strides = array<i32>} : memref<8x128xf32, #tpu.memory_space<vmem>>, vector<8x128xf32>,
    return
  }
  func.func @transform_0(%arg0: i32, %arg1: i32) -> (i32, i32, i32) {
    %c0_i32 = arith.constant 0 : i32
    %c0_i32_0 = arith.constant 0 : i32
    return %arg0, %arg1, %c0_i32 : i32, i32, i32
  }
  func.func @transform_1(%arg0: i32, %arg1: i32) -> (i32, i32, i32) {
    %c0_i32 = arith.constant 0 : i32
    %c0_i32_0 = arith.constant 0 : i32
    return %arg0, %arg1, %c0_i32 : i32, i32, i32
  }
  func.func @transform_2(%arg0: i32, %arg1: i32) -> (i32, i32) {
    %c0_i32 = arith.constant 0 : i32
    %c0_i32_0 = arith.constant 0 : i32
    %c0_i32_1 = arith.constant 0 : i32
    return %c0_i32, %c0_i32_0 : i32, i32
  }
  func.func @transform_3(%arg0: i32, %arg1: i32) -> (i32, i32) {
    %c0_i32 = arith.constant 0 : i32
    %c0_i32_0 = arith.constant 0 : i32
    %c0_i32_1 = arith.constant 0 : i32
    return %c0_i32, %c0_i32_0 : i32, i32
  }
  func.func @transform_4(%arg0: i32, %arg1: i32) -> (i32, i32) {
    %c0_i32 = arith.constant 0 : i32
    %c0_i32_0 = arith.constant 0 : i32
    %c0_i32_1 = arith.constant 0 : i32
    return %c0_i32, %c0_i32_0 : i32, i32
  }
  func.func @transform_5(%arg0: i32, %arg1: i32) -> (i32, i32, i32) {
    %c0_i32 = arith.constant 0 : i32
    %c0_i32_0 = arith.constant 0 : i32
    return %arg0, %arg1, %c0_i32 : i32, i32, i32
  }
}

</mosaic_0001>

<llo_original>
// kernel: tpu_custom_call.1
$region0: #{tpu_custom_call.1}
  #allocation0 [shape = 'u32[]', space=smem, size = 0x4, offset = 0x4, fixed_abs, tag = 'smem constant byte address 0x4 - core index']
  #allocation1 [shape = 'u32[72,128]{1,0:T(1,128)}', space=vmem, size = 0x9000, scoped, tag = 'internal scratch']
  #allocation2 [shape = 'f32[64,896]{1,0:T(8,128)}', space=vmem, size = 0x38000, scoped, tag = 'scratch operand']
  #allocation3 [shape = 'f32[8,128]{1,0:T(8,128)}', space=vmem, size = 0x1000, scoped, tag = 'scratch operand']
  #allocation4 [shape = 'f32[8,128]{1,0:T(8,128)}', space=vmem, size = 0x1000, scoped, tag = 'scratch operand']
  #allocation5 [shape = 'f32[8,128]{1,0:T(8,128)}', space=vmem, size = 0x1000, scoped, tag = 'scratch operand']
  %s0 = inlined_call_operand.vmem [shape: bf16[1,64,256], index: 0, kind: input, shape index: {}]
  %s1 = inlined_call_operand.vmem [shape: f32[1,64,1], index: 1, kind: input, shape index: {}]
  %s2 = inlined_call_operand.hbm [shape: bf16[256,896], index: 2, kind: input, shape index: {}]
  %s3 = inlined_call_operand.hbm [shape: bf16[128,896], index: 3, kind: input, shape index: {}]
  %s4 = inlined_call_operand.hbm [shape: f32[1,896], index: 4, kind: input, shape index: {}]
  %s5 = inlined_call_operand.hbm [shape: f32[1,64,128], index: 5, kind: output, shape index: {}]
  %s6 = sld [smem:[#allocation0]]
  $region46: #{tpu_custom_call.1} parent=0
    _
  %s8 = ssub.s32 1, %s6
  %s9 = scalar_select 0, %s8, %s6
  $region1: #{tpu_custom_call.1} parent=0
    #allocation6 [shape = 'u8[458752]{0}', space=vmem, size = 0x70000, scoped, tag = 'input window, operand 2, single buffered']
    #allocation7 [shape = 's32[1]{0}', space=sflag, size = 0x4, scoped, tag = 'scoped memory for tpu_custom_call.1']
    #allocation8 [shape = 's32[1]{0}', space=sflag, size = 0x4, scoped, tag = 'scoped memory for tpu_custom_call.1']
    #allocation9 [shape = 'u8[229376]{0}', space=vmem, size = 0x38000, scoped, tag = 'input window, operand 3, single buffered']
    #allocation10 [shape = 's32[1]{0}', space=sflag, size = 0x4, scoped, tag = 'scoped memory for tpu_custom_call.1']
    #allocation11 [shape = 'u8[3584]{0}', space=vmem, size = 0x1000, scoped, tag = 'input window, operand 4, single buffered']
    #allocation12 [shape = 'u8[32768]{0}', space=vmem, size = 0x8000, scoped, tag = 'output window, operand 0, single buffered']
    %10 = vsyncpa [#allocation7], 0
    %11 = vsyncpa [#allocation10], 0
    %12 = vsyncpa [#allocation8], 0
    // Predicated region
    $region2: #{tpu_custom_call.1} parent=1 // pred_check
      _
    $region3: #{tpu_custom_call.1} parent=1 // pred_check_branch
      %14 = sbr.rel (0) target = $region5
    $region4: #{tpu_custom_call.1} parent=1 // pred_region
      _
    $region5: #{tpu_custom_call.1} parent=1 // pred_fallthru
      _
    // Predicated region
    $region6: #{tpu_custom_call.1} parent=1 // pred_check
      _
    $region7: #{tpu_custom_call.1} parent=1 // pred_check_branch
      %16 = sbr.rel (0) target = $region9
    $region8: #{tpu_custom_call.1} parent=1 // pred_region
      _
    $region9: #{tpu_custom_call.1} parent=1 // pred_fallthru
      _
    // Predicated region
    $region10: #{tpu_custom_call.1} parent=1 // pred_check
      _
    $region11: #{tpu_custom_call.1} parent=1 // pred_check_branch
      %18 = sbr.rel (0) target = $region13
    $region12: #{tpu_custom_call.1} parent=1 // pred_region
      %20 = vsyncadd [#allocation7], 0
      %s21 = sshll.u32 %s2, 4
      %s22 = int_to_ptr.hbm [resolvable:$true] %s21
      %s23 = sshll.u32 [#allocation6], 4
      %s24 = int_to_ptr.vmem [resolvable:$true] %s23
      %29 = dma.hbm_to_vmem [thread:$0]  %s22, 14336, %s24, [#allocation7], 448, 448, 28
    $region13: #{tpu_custom_call.1} parent=1 // pred_fallthru
      _
    // Predicated region
    $region14: #{tpu_custom_call.1} parent=1 // pred_check
      _
    $region15: #{tpu_custom_call.1} parent=1 // pred_check_branch
      %31 = sbr.rel (0) target = $region17
    $region16: #{tpu_custom_call.1} parent=1 // pred_region
      %33 = vsyncadd [#allocation10], 0
      %s34 = sshll.u32 %s3, 4
      %s35 = int_to_ptr.hbm [resolvable:$true] %s34
      %s36 = sshll.u32 [#allocation9], 4
      %s37 = int_to_ptr.vmem [resolvable:$true] %s36
      %42 = dma.hbm_to_vmem [thread:$0]  %s35, 7168, %s37, [#allocation10], 448, 448, 28
    $region17: #{tpu_custom_call.1} parent=1 // pred_fallthru
      _
    // Predicated region
    $region18: #{tpu_custom_call.1} parent=1 // pred_check
      _
    $region19: #{tpu_custom_call.1} parent=1 // pred_check_branch
      %44 = sbr.rel (0) target = $region21
    $region20: #{tpu_custom_call.1} parent=1 // pred_region
      %46 = vsyncadd [#allocation10], 0
      %s48 = sshll.u32 %s4, 4
      %s49 = int_to_ptr.hbm [resolvable:$true] %s48
      %s50 = sshll.u32 [#allocation11], 4
      %s51 = int_to_ptr.vmem [resolvable:$true] %s50
      %53 = dma.hbm_to_vmem [thread:$0]  %s49, 112, %s51, [#allocation10]
    $region21: #{tpu_custom_call.1} parent=1 // pred_fallthru
      _
    // Predicated region
    $region22: #{tpu_custom_call.1} parent=1 // pred_check
      _
    $region23: #{tpu_custom_call.1} parent=1 // pred_check_branch
      %55 = sbr.rel (0) target = $region25
    $region24: #{tpu_custom_call.1} parent=1 // pred_region
      %57 = dma.done [#allocation7], 14336
    $region25: #{tpu_custom_call.1} parent=1 // pred_fallthru
      _
    // Predicated region
    $region26: #{tpu_custom_call.1} parent=1 // pred_check
      _
    $region27: #{tpu_custom_call.1} parent=1 // pred_check_branch
      %59 = sbr.rel (0) target = $region29
    $region28: #{tpu_custom_call.1} parent=1 // pred_region
      %61 = dma.done [#allocation10], 7168
    $region29: #{tpu_custom_call.1} parent=1 // pred_fallthru
      _
    // Predicated region
    $region30: #{tpu_custom_call.1} parent=1 // pred_check
      _
    $region31: #{tpu_custom_call.1} parent=1 // pred_check_branch
      %63 = sbr.rel (0) target = $region33
    $region32: #{tpu_custom_call.1} parent=1 // pred_region
      %65 = dma.done [#allocation10], 112
    $region33: #{tpu_custom_call.1} parent=1 // pred_fallthru
      _
    %p66 = scmp.eq.s32.totalorder 0, 0
    // Predicated region
    $region34: #{tpu_custom_call.1} parent=1 // pred_check
      %p67 = pneg %p66
    $region35: #{tpu_custom_call.1} parent=1 // pred_check_branch
      %69 = sbr.rel (%p67) target = $region37
    $region36: #{tpu_custom_call.1} parent=1 // pred_region
      %70 = vst [vmem:[#allocation3] sm:$0xff] 0.0
      %71 = vst [vmem:[#allocation4] sm:$0xff] 0.0
      %72 = vst [vmem:[#allocation5] sm:$0xff] 0.0
    $region37: #{tpu_custom_call.1} parent=1 // pred_fallthru
      _
    %v73 = vld [vmem:[%s0] sm:$0xff]
    %v74 = vld [vmem:[%s0 + $0x8] sm:$0xff]
    %v75 = vld [vmem:[%s0 + $0x10] sm:$0xff]
    %v76 = vld [vmem:[%s0 + $0x18] sm:$0xff]
    %v77 = vld [vmem:[%s0 + $0x20] sm:$0xff]
    %v78 = vld [vmem:[%s0 + $0x28] sm:$0xff]
    %v79 = vld [vmem:[%s0 + $0x30] sm:$0xff]
    %v80 = vld [vmem:[%s0 + $0x38] sm:$0xff]
    %v81 = vld [vmem:[#allocation6] sm:$0xff]
    %v82 = vld [vmem:[#allocation6 + $0x8] sm:$0xff]
    %v83 = vld [vmem:[#allocation6 + $0x10] sm:$0xff]
    %v84 = vld [vmem:[#allocation6 + $0x18] sm:$0xf]
    %v85 = vld [vmem:[#allocation6 + $0x1c] sm:$0xff]
    %v86 = vld [vmem:[#allocation6 + $0x24] sm:$0xff]
    %v87 = vld [vmem:[#allocation6 + $0x2c] sm:$0xff]
    %v88 = vld [vmem:[#allocation6 + $0x34] sm:$0xf]
    %v89 = vld [vmem:[#allocation6 + $0x38] sm:$0xff]
    %v90 = vld [vmem:[#allocation6 + $0x40] sm:$0xff]
    %v91 = vld [vmem:[#allocation6 + $0x48] sm:$0xff]
    %v92 = vld [vmem:[#allocation6 + $0x50] sm:$0xf]
    %v93 = vld [vmem:[#allocation6 + $0x54] sm:$0xff]
    %v94 = vld [vmem:[#allocation6 + $0x5c] sm:$0xff]
    %v95 = vld [vmem:[#allocation6 + $0x64] sm:$0xff]
    %v96 = vld [vmem:[#allocation6 + $0x6c] sm:$0xf]
    %v97 = vld [vmem:[#allocation6 + $0x70] sm:$0xff]
    %v98 = vld [vmem:[#allocation6 + $0x78] sm:$0xff]
    %v99 = vld [vmem:[#allocation6 + $0x80] sm:$0xff]
    %v100 = vld [vmem:[#allocation6 + $0x88] sm:$0xf]
    %v101 = vld [vmem:[#allocation6 + $0x8c] sm:$0xff]
    %v102 = vld [vmem:[#allocation6 + $0x94] sm:$0xff]
    %v103 = vld [vmem:[#allocation6 + $0x9c] sm:$0xff]
    %v104 = vld [vmem:[#allocation6 + $0xa4] sm:$0xf]
    %v105 = vld [vmem:[#allocation6 + $0xa8] sm:$0xff]
    %v106 = vld [vmem:[#allocation6 + $0xb0] sm:$0xff]
    %v107 = vld [vmem:[#allocation6 + $0xb8] sm:$0xff]
    %v108 = vld [vmem:[#allocation6 + $0xc0] sm:$0xf]
    %v109 = vld [vmem:[#allocation6 + $0xc4] sm:$0xff]
    %v110 = vld [vmem:[#allocation6 + $0xcc] sm:$0xff]
    %v111 = vld [vmem:[#allocation6 + $0xd4] sm:$0xff]
    %v112 = vld [vmem:[#allocation6 + $0xdc] sm:$0xf]
    %v113 = vld [vmem:[#allocation6 + $0xe0] sm:$0xff]
    %v114 = vld [vmem:[#allocation6 + $0xe8] sm:$0xff]
    %v115 = vld [vmem:[#allocation6 + $0xf0] sm:$0xff]
    %v116 = vld [vmem:[#allocation6 + $0xf8] sm:$0xf]
    %v117 = vld [vmem:[#allocation6 + $0xfc] sm:$0xff]
    %v118 = vld [vmem:[#allocation6 + $0x104] sm:$0xff]
    %v119 = vld [vmem:[#allocation6 + $0x10c] sm:$0xff]
    %v120 = vld [vmem:[#allocation6 + $0x114] sm:$0xf]
    %v121 = vld [vmem:[#allocation6 + $0x118] sm:$0xff]
    %v122 = vld [vmem:[#allocation6 + $0x120] sm:$0xff]
    %v123 = vld [vmem:[#allocation6 + $0x128] sm:$0xff]
    %v124 = vld [vmem:[#allocation6 + $0x130] sm:$0xf]
    %v125 = vld [vmem:[#allocation6 + $0x134] sm:$0xff]
    %v126 = vld [vmem:[#allocation6 + $0x13c] sm:$0xff]
    %v127 = vld [vmem:[#allocation6 + $0x144] sm:$0xff]
    %v128 = vld [vmem:[#allocation6 + $0x14c] sm:$0xf]
    %v129 = vld [vmem:[#allocation6 + $0x150] sm:$0xff]
    %v130 = vld [vmem:[#allocation6 + $0x158] sm:$0xff]
    %v131 = vld [vmem:[#allocation6 + $0x160] sm:$0xff]
    %v132 = vld [vmem:[#allocation6 + $0x168] sm:$0xf]
    %v133 = vld [vmem:[#allocation6 + $0x16c] sm:$0xff]
    %v134 = vld [vmem:[#allocation6 + $0x174] sm:$0xff]
    %v135 = vld [vmem:[#allocation6 + $0x17c] sm:$0xff]
    %v136 = vld [vmem:[#allocation6 + $0x184] sm:$0xf]
    %v137 = vld [vmem:[#allocation6 + $0x188] sm:$0xff]
    %v138 = vld [vmem:[#allocation6 + $0x190] sm:$0xff]
    %v139 = vld [vmem:[#allocation6 + $0x198] sm:$0xff]
    %v140 = vld [vmem:[#allocation6 + $0x1a0] sm:$0xf]
    %v141 = vld [vmem:[#allocation6 + $0x1a4] sm:$0xff]
    %v142 = vld [vmem:[#allocation6 + $0x1ac] sm:$0xff]
    %v143 = vld [vmem:[#allocation6 + $0x1b4] sm:$0xff]
    %v144 = vld [vmem:[#allocation6 + $0x1bc] sm:$0xf]
    %v145 = vld [vmem:[#allocation6 + $0x1c0] sm:$0xff]
    %v146 = vld [vmem:[#allocation6 + $0x1c8] sm:$0xff]
    %v147 = vld [vmem:[#allocation6 + $0x1d0] sm:$0xff]
    %v148 = vld [vmem:[#allocation6 + $0x1d8] sm:$0xf]
    %v149 = vld [vmem:[#allocation6 + $0x1dc] sm:$0xff]
    %v150 = vld [vmem:[#allocation6 + $0x1e4] sm:$0xff]
    %v151 = vld [vmem:[#allocation6 + $0x1ec] sm:$0xff]
    %v152 = vld [vmem:[#allocation6 + $0x1f4] sm:$0xf]
    %v153 = vld [vmem:[#allocation6 + $0x1f8] sm:$0xff]
    %v154 = vld [vmem:[#allocation6 + $0x200] sm:$0xff]
    %v155 = vld [vmem:[#allocation6 + $0x208] sm:$0xff]
    %v156 = vld [vmem:[#allocation6 + $0x210] sm:$0xf]
    %v157 = vld [vmem:[#allocation6 + $0x214] sm:$0xff]
    %v158 = vld [vmem:[#allocation6 + $0x21c] sm:$0xff]
    %v159 = vld [vmem:[#allocation6 + $0x224] sm:$0xff]
    %v160 = vld [vmem:[#allocation6 + $0x22c] sm:$0xf]
    %v161 = vld [vmem:[#allocation6 + $0x230] sm:$0xff]
    %v162 = vld [vmem:[#allocation6 + $0x238] sm:$0xff]
    %v163 = vld [vmem:[#allocation6 + $0x240] sm:$0xff]
    %v164 = vld [vmem:[#allocation6 + $0x248] sm:$0xf]
    %v165 = vld [vmem:[#allocation6 + $0x24c] sm:$0xff]
    %v166 = vld [vmem:[#allocation6 + $0x254] sm:$0xff]
    %v167 = vld [vmem:[#allocation6 + $0x25c] sm:$0xff]
    %v168 = vld [vmem:[#allocation6 + $0x264] sm:$0xf]
    %v169 = vld [vmem:[#allocation6 + $0x268] sm:$0xff]
    %v170 = vld [vmem:[#allocation6 + $0x270] sm:$0xff]
    %v171 = vld [vmem:[#allocation6 + $0x278] sm:$0xff]
    %v172 = vld [vmem:[#allocation6 + $0x280] sm:$0xf]
    %v173 = vld [vmem:[#allocation6 + $0x284] sm:$0xff]
    %v174 = vld [vmem:[#allocation6 + $0x28c] sm:$0xff]
    %v175 = vld [vmem:[#allocation6 + $0x294] sm:$0xff]
    %v176 = vld [vmem:[#allocation6 + $0x29c] sm:$0xf]
    %v177 = vld [vmem:[#allocation6 + $0x2a0] sm:$0xff]
    %v178 = vld [vmem:[#allocation6 + $0x2a8] sm:$0xff]
    %v179 = vld [vmem:[#allocation6 + $0x2b0] sm:$0xff]
    %v180 = vld [vmem:[#allocation6 + $0x2b8] sm:$0xf]
    %v181 = vld [vmem:[#allocation6 + $0x2bc] sm:$0xff]
    %v182 = vld [vmem:[#allocation6 + $0x2c4] sm:$0xff]
    %v183 = vld [vmem:[#allocation6 + $0x2cc] sm:$0xff]
    %v184 = vld [vmem:[#allocation6 + $0x2d4] sm:$0xf]
    %v185 = vld [vmem:[#allocation6 + $0x2d8] sm:$0xff]
    %v186 = vld [vmem:[#allocation6 + $0x2e0] sm:$0xff]
    %v187 = vld [vmem:[#allocation6 + $0x2e8] sm:$0xff]
    %v188 = vld [vmem:[#allocation6 + $0x2f0] sm:$0xf]
    %v189 = vld [vmem:[#allocation6 + $0x2f4] sm:$0xff]
    %v190 = vld [vmem:[#allocation6 + $0x2fc] sm:$0xff]
    %v191 = vld [vmem:[#allocation6 + $0x304] sm:$0xff]
    %v192 = vld [vmem:[#allocation6 + $0x30c] sm:$0xf]
    %v193 = vld [vmem:[#allocation6 + $0x310] sm:$0xff]
    %v194 = vld [vmem:[#allocation6 + $0x318] sm:$0xff]
    %v195 = vld [vmem:[#allocation6 + $0x320] sm:$0xff]
    %v196 = vld [vmem:[#allocation6 + $0x328] sm:$0xf]
    %v197 = vld [vmem:[#allocation6 + $0x32c] sm:$0xff]
    %v198 = vld [vmem:[#allocation6 + $0x334] sm:$0xff]
    %v199 = vld [vmem:[#allocation6 + $0x33c] sm:$0xff]
    %v200 = vld [vmem:[#allocation6 + $0x344] sm:$0xf]
    %v201 = vld [vmem:[#allocation6 + $0x348] sm:$0xff]
    %v202 = vld [vmem:[#allocation6 + $0x350] sm:$0xff]
    %v203 = vld [vmem:[#allocation6 + $0x358] sm:$0xff]
    %v204 = vld [vmem:[#allocation6 + $0x360] sm:$0xf]
    %v205 = vld [vmem:[#allocation6 + $0x364] sm:$0xff]
    %v206 = vld [vmem:[#allocation6 + $0x36c] sm:$0xff]
    %v207 = vld [vmem:[#allocation6 + $0x374] sm:$0xff]
    %v208 = vld [vmem:[#allocation6 + $0x37c] sm:$0xf]
    %v209 = vld [vmem:[#allocation11] sm:$0xff]
    %v211 = vperm.slane %v209, 0
    %v212 = vperm.slane %v209, 1
    %v213 = vperm.slane %v209, 2
    %v214 = vperm.slane %v209, 3
    %v215 = vperm.slane %v209, 4
    %v216 = vperm.slane %v209, 5
    %v217 = vperm.slane %v209, 6
    %v233 = vunpack.c.l.b16 %v73
    %v234 = vunpack.c.h.b16 %v73
    %v235 = vunpack.c.l.b16 %v74
    %v236 = vunpack.c.h.b16 %v74
    %v237 = vunpack.c.l.b16 %v75
    %v238 = vunpack.c.h.b16 %v75
    %v239 = vunpack.c.l.b16 %v76
    %v240 = vunpack.c.h.b16 %v76
    %v241 = vunpack.c.l.b16 %v77
    %v242 = vunpack.c.h.b16 %v77
    %v243 = vunpack.c.l.b16 %v78
    %v244 = vunpack.c.h.b16 %v78
    %v245 = vunpack.c.l.b16 %v79
    %v246 = vunpack.c.h.b16 %v79
    %v247 = vunpack.c.l.b16 %v80
    %v248 = vunpack.c.h.b16 %v80
    %v249 = vpack.c.b16 %v235, %v233
    %v250 = vpack.c.b16 %v236, %v234
    %v251 = vpack.c.b16 %v239, %v237
    %v252 = vpack.c.b16 %v240, %v238
    %v253 = vpack.c.b16 %v243, %v241
    %v254 = vpack.c.b16 %v244, %v242
    %v255 = vpack.c.b16 %v247, %v245
    %v256 = vpack.c.b16 %v248, %v246
    %v393 = vunpack.c.l.b16 %v81
    %v394 = vunpack.c.h.b16 %v81
    %v395 = vunpack.c.l.b16 %v82
    %v396 = vunpack.c.h.b16 %v82
    %v397 = vunpack.c.l.b16 %v83
    %v398 = vunpack.c.h.b16 %v83
    %v399 = vunpack.c.l.b16 %v84
    %v400 = vunpack.c.l.b16 %v85
    %v401 = vunpack.c.h.b16 %v85
    %v402 = vunpack.c.l.b16 %v86
    %v403 = vunpack.c.h.b16 %v86
    %v404 = vunpack.c.l.b16 %v87
    %v405 = vunpack.c.h.b16 %v87
    %v406 = vunpack.c.l.b16 %v88
    %v407 = vunpack.c.l.b16 %v89
    %v408 = vunpack.c.h.b16 %v89
    %v409 = vunpack.c.l.b16 %v90
    %v410 = vunpack.c.h.b16 %v90
    %v411 = vunpack.c.l.b16 %v91
    %v412 = vunpack.c.h.b16 %v91
    %v413 = vunpack.c.l.b16 %v92
    %v414 = vunpack.c.l.b16 %v93
    %v415 = vunpack.c.h.b16 %v93
    %v416 = vunpack.c.l.b16 %v94
    %v417 = vunpack.c.h.b16 %v94
    %v418 = vunpack.c.l.b16 %v95
    %v419 = vunpack.c.h.b16 %v95
    %v420 = vunpack.c.l.b16 %v96
    %v421 = vunpack.c.l.b16 %v97
    %v422 = vunpack.c.h.b16 %v97
    %v423 = vunpack.c.l.b16 %v98
    %v424 = vunpack.c.h.b16 %v98
    %v425 = vunpack.c.l.b16 %v99
    %v426 = vunpack.c.h.b16 %v99
    %v427 = vunpack.c.l.b16 %v100
    %v428 = vunpack.c.l.b16 %v101
    %v429 = vunpack.c.h.b16 %v101
    %v430 = vunpack.c.l.b16 %v102
    %v431 = vunpack.c.h.b16 %v102
    %v432 = vunpack.c.l.b16 %v103
    %v433 = vunpack.c.h.b16 %v103
    %v434 = vunpack.c.l.b16 %v104
    %v435 = vunpack.c.l.b16 %v105
    %v436 = vunpack.c.h.b16 %v105
    %v437 = vunpack.c.l.b16 %v106
    %v438 = vunpack.c.h.b16 %v106
    %v439 = vunpack.c.l.b16 %v107
    %v440 = vunpack.c.h.b16 %v107
    %v441 = vunpack.c.l.b16 %v108
    %v442 = vunpack.c.l.b16 %v109
    %v443 = vunpack.c.h.b16 %v109
    %v444 = vunpack.c.l.b16 %v110
    %v445 = vunpack.c.h.b16 %v110
    %v446 = vunpack.c.l.b16 %v111
    %v447 = vunpack.c.h.b16 %v111
    %v448 = vunpack.c.l.b16 %v112
    %v449 = vunpack.c.l.b16 %v113
    %v450 = vunpack.c.h.b16 %v113
    %v451 = vunpack.c.l.b16 %v114
    %v452 = vunpack.c.h.b16 %v114
    %v453 = vunpack.c.l.b16 %v115
    %v454 = vunpack.c.h.b16 %v115
    %v455 = vunpack.c.l.b16 %v116
    %v456 = vunpack.c.l.b16 %v117
    %v457 = vunpack.c.h.b16 %v117
    %v458 = vunpack.c.l.b16 %v118
    %v459 = vunpack.c.h.b16 %v118
    %v460 = vunpack.c.l.b16 %v119
    %v461 = vunpack.c.h.b16 %v119
    %v462 = vunpack.c.l.b16 %v120
    %v463 = vunpack.c.l.b16 %v121
    %v464 = vunpack.c.h.b16 %v121
    %v465 = vunpack.c.l.b16 %v122
    %v466 = vunpack.c.h.b16 %v122
    %v467 = vunpack.c.l.b16 %v123
    %v468 = vunpack.c.h.b16 %v123
    %v469 = vunpack.c.l.b16 %v124
    %v470 = vunpack.c.l.b16 %v125
    %v471 = vunpack.c.h.b16 %v125
    %v472 = vunpack.c.l.b16 %v126
    %v473 = vunpack.c.h.b16 %v126
    %v474 = vunpack.c.l.b16 %v127
    %v475 = vunpack.c.h.b16 %v127
    %v476 = vunpack.c.l.b16 %v128
    %v477 = vunpack.c.l.b16 %v129
    %v478 = vunpack.c.h.b16 %v129
    %v479 = vunpack.c.l.b16 %v130
    %v480 = vunpack.c.h.b16 %v130
    %v481 = vunpack.c.l.b16 %v131
    %v482 = vunpack.c.h.b16 %v131
    %v483 = vunpack.c.l.b16 %v132
    %v484 = vunpack.c.l.b16 %v133
    %v485 = vunpack.c.h.b16 %v133
    %v486 = vunpack.c.l.b16 %v134
    %v487 = vunpack.c.h.b16 %v134
    %v488 = vunpack.c.l.b16 %v135
    %v489 = vunpack.c.h.b16 %v135
    %v490 = vunpack.c.l.b16 %v136
    %v491 = vunpack.c.l.b16 %v137
    %v492 = vunpack.c.h.b16 %v137
    %v493 = vunpack.c.l.b16 %v138
    %v494 = vunpack.c.h.b16 %v138
    %v495 = vunpack.c.l.b16 %v139
    %v496 = vunpack.c.h.b16 %v139
    %v497 = vunpack.c.l.b16 %v140
    %v498 = vunpack.c.l.b16 %v141
    %v499 = vunpack.c.h.b16 %v141
    %v500 = vunpack.c.l.b16 %v142
    %v501 = vunpack.c.h.b16 %v142
    %v502 = vunpack.c.l.b16 %v143
    %v503 = vunpack.c.h.b16 %v143
    %v504 = vunpack.c.l.b16 %v144
    %v505 = vunpack.c.l.b16 %v145
    %v506 = vunpack.c.h.b16 %v145
    %v507 = vunpack.c.l.b16 %v146
    %v508 = vunpack.c.h.b16 %v146
    %v509 = vunpack.c.l.b16 %v147
    %v510 = vunpack.c.h.b16 %v147
    %v511 = vunpack.c.l.b16 %v148
    %v512 = vunpack.c.l.b16 %v149
    %v513 = vunpack.c.h.b16 %v149
    %v514 = vunpack.c.l.b16 %v150
    %v515 = vunpack.c.h.b16 %v150
    %v516 = vunpack.c.l.b16 %v151
    %v517 = vunpack.c.h.b16 %v151
    %v518 = vunpack.c.l.b16 %v152
    %v519 = vunpack.c.l.b16 %v153
    %v520 = vunpack.c.h.b16 %v153
    %v521 = vunpack.c.l.b16 %v154
    %v522 = vunpack.c.h.b16 %v154
    %v523 = vunpack.c.l.b16 %v155
    %v524 = vunpack.c.h.b16 %v155
    %v525 = vunpack.c.l.b16 %v156
    %v526 = vunpack.c.l.b16 %v157
    %v527 = vunpack.c.h.b16 %v157
    %v528 = vunpack.c.l.b16 %v158
    %v529 = vunpack.c.h.b16 %v158
    %v530 = vunpack.c.l.b16 %v159
    %v531 = vunpack.c.h.b16 %v159
    %v532 = vunpack.c.l.b16 %v160
    %v533 = vunpack.c.l.b16 %v161
    %v534 = vunpack.c.h.b16 %v161
    %v535 = vunpack.c.l.b16 %v162
    %v536 = vunpack.c.h.b16 %v162
    %v537 = vunpack.c.l.b16 %v163
    %v538 = vunpack.c.h.b16 %v163
    %v539 = vunpack.c.l.b16 %v164
    %v540 = vunpack.c.l.b16 %v165
    %v541 = vunpack.c.h.b16 %v165
    %v542 = vunpack.c.l.b16 %v166
    %v543 = vunpack.c.h.b16 %v166
    %v544 = vunpack.c.l.b16 %v167
    %v545 = vunpack.c.h.b16 %v167
    %v546 = vunpack.c.l.b16 %v168
    %v547 = vunpack.c.l.b16 %v169
    %v548 = vunpack.c.h.b16 %v169
    %v549 = vunpack.c.l.b16 %v170
    %v550 = vunpack.c.h.b16 %v170
    %v551 = vunpack.c.l.b16 %v171
    %v552 = vunpack.c.h.b16 %v171
    %v553 = vunpack.c.l.b16 %v172
    %v554 = vunpack.c.l.b16 %v173
    %v555 = vunpack.c.h.b16 %v173
    %v556 = vunpack.c.l.b16 %v174
    %v557 = vunpack.c.h.b16 %v174
    %v558 = vunpack.c.l.b16 %v175
    %v559 = vunpack.c.h.b16 %v175
    %v560 = vunpack.c.l.b16 %v176
    %v561 = vunpack.c.l.b16 %v177
    %v562 = vunpack.c.h.b16 %v177
    %v563 = vunpack.c.l.b16 %v178
    %v564 = vunpack.c.h.b16 %v178
    %v565 = vunpack.c.l.b16 %v179
    %v566 = vunpack.c.h.b16 %v179
    %v567 = vunpack.c.l.b16 %v180
    %v568 = vunpack.c.l.b16 %v181
    %v569 = vunpack.c.h.b16 %v181
    %v570 = vunpack.c.l.b16 %v182
    %v571 = vunpack.c.h.b16 %v182
    %v572 = vunpack.c.l.b16 %v183
    %v573 = vunpack.c.h.b16 %v183
    %v574 = vunpack.c.l.b16 %v184
    %v575 = vunpack.c.l.b16 %v185
    %v576 = vunpack.c.h.b16 %v185
    %v577 = vunpack.c.l.b16 %v186
    %v578 = vunpack.c.h.b16 %v186
    %v579 = vunpack.c.l.b16 %v187
    %v580 = vunpack.c.h.b16 %v187
    %v581 = vunpack.c.l.b16 %v188
    %v582 = vunpack.c.l.b16 %v189
    %v583 = vunpack.c.h.b16 %v189
    %v584 = vunpack.c.l.b16 %v190
    %v585 = vunpack.c.h.b16 %v190
    %v586 = vunpack.c.l.b16 %v191
    %v587 = vunpack.c.h.b16 %v191
    %v588 = vunpack.c.l.b16 %v192
    %v589 = vunpack.c.l.b16 %v193
    %v590 = vunpack.c.h.b16 %v193
    %v591 = vunpack.c.l.b16 %v194
    %v592 = vunpack.c.h.b16 %v194
    %v593 = vunpack.c.l.b16 %v195
    %v594 = vunpack.c.h.b16 %v195
    %v595 = vunpack.c.l.b16 %v196
    %v596 = vunpack.c.l.b16 %v197
    %v597 = vunpack.c.h.b16 %v197
    %v598 = vunpack.c.l.b16 %v198
    %v599 = vunpack.c.h.b16 %v198
    %v600 = vunpack.c.l.b16 %v199
    %v601 = vunpack.c.h.b16 %v199
    %v602 = vunpack.c.l.b16 %v200
    %v603 = vunpack.c.l.b16 %v201
    %v604 = vunpack.c.h.b16 %v201
    %v605 = vunpack.c.l.b16 %v202
    %v606 = vunpack.c.h.b16 %v202
    %v607 = vunpack.c.l.b16 %v203
    %v608 = vunpack.c.h.b16 %v203
    %v609 = vunpack.c.l.b16 %v204
    %v610 = vunpack.c.l.b16 %v205
    %v611 = vunpack.c.h.b16 %v205
    %v612 = vunpack.c.l.b16 %v206
    %v613 = vunpack.c.h.b16 %v206
    %v614 = vunpack.c.l.b16 %v207
    %v615 = vunpack.c.h.b16 %v207
    %v616 = vunpack.c.l.b16 %v208
    %v617 = vpack.c.b16 %v400, %v393
    %v618 = vpack.c.b16 %v401, %v394
    %v619 = vpack.c.b16 %v402, %v395
    %v620 = vpack.c.b16 %v403, %v396
    %v621 = vpack.c.b16 %v404, %v397
    %v622 = vpack.c.b16 %v405, %v398
    %v623 = vpack.c.b16 %v406, %v399
    %v624 = vpack.c.b16 %v414, %v407
    %v625 = vpack.c.b16 %v415, %v408
    %v626 = vpack.c.b16 %v416, %v409
    %v627 = vpack.c.b16 %v417, %v410
    %v628 = vpack.c.b16 %v418, %v411
    %v629 = vpack.c.b16 %v419, %v412
    %v630 = vpack.c.b16 %v420, %v413
    %v631 = vpack.c.b16 %v428, %v421
    %v632 = vpack.c.b16 %v429, %v422
    %v633 = vpack.c.b16 %v430, %v423
    %v634 = vpack.c.b16 %v431, %v424
    %v635 = vpack.c.b16 %v432, %v425
    %v636 = vpack.c.b16 %v433, %v426
    %v637 = vpack.c.b16 %v434, %v427
    %v638 = vpack.c.b16 %v442, %v435
    %v639 = vpack.c.b16 %v443, %v436
    %v640 = vpack.c.b16 %v444, %v437
    %v641 = vpack.c.b16 %v445, %v438
    %v642 = vpack.c.b16 %v446, %v439
    %v643 = vpack.c.b16 %v447, %v440
    %v644 = vpack.c.b16 %v448, %v441
    %v645 = vpack.c.b16 %v456, %v449
    %v646 = vpack.c.b16 %v457, %v450
    %v647 = vpack.c.b16 %v458, %v451
    %v648 = vpack.c.b16 %v459, %v452
    %v649 = vpack.c.b16 %v460, %v453
    %v650 = vpack.c.b16 %v461, %v454
    %v651 = vpack.c.b16 %v462, %v455
    %v652 = vpack.c.b16 %v470, %v463
    %v653 = vpack.c.b16 %v471, %v464
    %v654 = vpack.c.b16 %v472, %v465
    %v655 = vpack.c.b16 %v473, %v466
    %v656 = vpack.c.b16 %v474, %v467
    %v657 = vpack.c.b16 %v475, %v468
    %v658 = vpack.c.b16 %v476, %v469
    %v659 = vpack.c.b16 %v484, %v477
    %v660 = vpack.c.b16 %v485, %v478
    %v661 = vpack.c.b16 %v486, %v479
    %v662 = vpack.c.b16 %v487, %v480
    %v663 = vpack.c.b16 %v488, %v481
    %v664 = vpack.c.b16 %v489, %v482
    %v665 = vpack.c.b16 %v490, %v483
    %v666 = vpack.c.b16 %v498, %v491
    %v667 = vpack.c.b16 %v499, %v492
    %v668 = vpack.c.b16 %v500, %v493
    %v669 = vpack.c.b16 %v501, %v494
    %v670 = vpack.c.b16 %v502, %v495
    %v671 = vpack.c.b16 %v503, %v496
    %v672 = vpack.c.b16 %v504, %v497
    %v673 = vpack.c.b16 %v512, %v505
    %v674 = vpack.c.b16 %v513, %v506
    %v675 = vpack.c.b16 %v514, %v507
    %v676 = vpack.c.b16 %v515, %v508
    %v677 = vpack.c.b16 %v516, %v509
    %v678 = vpack.c.b16 %v517, %v510
    %v679 = vpack.c.b16 %v518, %v511
    %v680 = vpack.c.b16 %v526, %v519
    %v681 = vpack.c.b16 %v527, %v520
    %v682 = vpack.c.b16 %v528, %v521
    %v683 = vpack.c.b16 %v529, %v522
    %v684 = vpack.c.b16 %v530, %v523
    %v685 = vpack.c.b16 %v531, %v524
    %v686 = vpack.c.b16 %v532, %v525
    %v687 = vpack.c.b16 %v540, %v533
    %v688 = vpack.c.b16 %v541, %v534
    %v689 = vpack.c.b16 %v542, %v535
    %v690 = vpack.c.b16 %v543, %v536
    %v691 = vpack.c.b16 %v544, %v537
    %v692 = vpack.c.b16 %v545, %v538
    %v693 = vpack.c.b16 %v546, %v539
    %v694 = vpack.c.b16 %v554, %v547
    %v695 = vpack.c.b16 %v555, %v548
    %v696 = vpack.c.b16 %v556, %v549
    %v697 = vpack.c.b16 %v557, %v550
    %v698 = vpack.c.b16 %v558, %v551
    %v699 = vpack.c.b16 %v559, %v552
    %v700 = vpack.c.b16 %v560, %v553
    %v701 = vpack.c.b16 %v568, %v561
    %v702 = vpack.c.b16 %v569, %v562
    %v703 = vpack.c.b16 %v570, %v563
    %v704 = vpack.c.b16 %v571, %v564
    %v705 = vpack.c.b16 %v572, %v565
    %v706 = vpack.c.b16 %v573, %v566
    %v707 = vpack.c.b16 %v574, %v567
    %v708 = vpack.c.b16 %v582, %v575
    %v709 = vpack.c.b16 %v583, %v576
    %v710 = vpack.c.b16 %v584, %v577
    %v711 = vpack.c.b16 %v585, %v578
    %v712 = vpack.c.b16 %v586, %v579
    %v713 = vpack.c.b16 %v587, %v580
    %v714 = vpack.c.b16 %v588, %v581
    %v715 = vpack.c.b16 %v596, %v589
    %v716 = vpack.c.b16 %v597, %v590
    %v717 = vpack.c.b16 %v598, %v591
    %v718 = vpack.c.b16 %v599, %v592
    %v719 = vpack.c.b16 %v600, %v593
    %v720 = vpack.c.b16 %v601, %v594
    %v721 = vpack.c.b16 %v602, %v595
    %v722 = vpack.c.b16 %v610, %v603
    %v723 = vpack.c.b16 %v611, %v604
    %v724 = vpack.c.b16 %v612, %v605
    %v725 = vpack.c.b16 %v613, %v606
    %v726 = vpack.c.b16 %v614, %v607
    %v727 = vpack.c.b16 %v615, %v608
    %v728 = vpack.c.b16 %v616, %v609
    %841 = vmatpush.bf16.msra.mxu0 %v666
    %842 = vmatpush.bf16.msra.mxu0 %v659
    %843 = vmatpush.bf16.msra.mxu0 %v652
    %844 = vmatpush.bf16.msra.mxu0 %v645
    %845 = vmatpush.bf16.msra.mxu0 %v638
    %846 = vmatpush.bf16.msra.mxu0 %v631
    %847 = vmatpush.bf16.msra.mxu0 %v624
    %848 = vmatpush.bf16.msra.mxu0 %v617
    %849 = vmatmul.bf16.gmra.mxu0 %v249
    %v850 = vpop.f32.mrf.mxu0
    %v851 = vadd.f32 %v211, %v850
    %v852 = vpop.f32.mrf.mxu0
    %v853 = vadd.f32 %v211, %v852
    %854 = vmatmul.bf16.gmra.mxu0 %v251
    %v855 = vpop.f32.mrf.mxu0
    %v856 = vadd.f32 %v211, %v855
    %v857 = vpop.f32.mrf.mxu0
    %v858 = vadd.f32 %v211, %v857
    %859 = vmatmul.bf16.gmra.mxu0 %v253
    %v860 = vpop.f32.mrf.mxu0
    %v861 = vadd.f32 %v211, %v860
    %v862 = vpop.f32.mrf.mxu0
    %v863 = vadd.f32 %v211, %v862
    %864 = vmatmul.bf16.gmra.mxu0 %v255
    %v865 = vpop.f32.mrf.mxu0
    %v866 = vadd.f32 %v211, %v865
    %v867 = vpop.f32.mrf.mxu0
    %v868 = vadd.f32 %v211, %v867
    %869 = vdwg.mxu0
    %870 = vmatpush.bf16.msra.mxu0 %v722
    %871 = vmatpush.bf16.msra.mxu0 %v715
    %872 = vmatpush.bf16.msra.mxu0 %v708
    %873 = vmatpush.bf16.msra.mxu0 %v701
    %874 = vmatpush.bf16.msra.mxu0 %v694
    %875 = vmatpush.bf16.msra.mxu0 %v687
    %876 = vmatpush.bf16.msra.mxu0 %v680
    %877 = vmatpush.bf16.msra.mxu0 %v673
    %878 = vmatmul.bf16.gmra.mxu0 %v250
    %v879 = vpop.f32.mrf.mxu0
    %v880 = vadd.f32 %v851, %v879
    %v881 = vpop.f32.mrf.mxu0
    %v882 = vadd.f32 %v853, %v881
    %883 = vmatmul.bf16.gmra.mxu0 %v252
    %v884 = vpop.f32.mrf.mxu0
    %v885 = vadd.f32 %v856, %v884
    %v886 = vpop.f32.mrf.mxu0
    %v887 = vadd.f32 %v858, %v886
    %888 = vmatmul.bf16.gmra.mxu0 %v254
    %v889 = vpop.f32.mrf.mxu0
    %v890 = vadd.f32 %v861, %v889
    %v891 = vpop.f32.mrf.mxu0
    %v892 = vadd.f32 %v863, %v891
    %893 = vmatmul.bf16.gmra.mxu0 %v256
    %v894 = vpop.f32.mrf.mxu0
    %v895 = vadd.f32 %v866, %v894
    %v896 = vpop.f32.mrf.mxu0
    %v897 = vadd.f32 %v868, %v896
    %898 = vdwg.mxu0
    %899 = vmatpush.bf16.msra.mxu0 %v667
    %900 = vmatpush.bf16.msra.mxu0 %v660
    %901 = vmatpush.bf16.msra.mxu0 %v653
    %902 = vmatpush.bf16.msra.mxu0 %v646
    %903 = vmatpush.bf16.msra.mxu0 %v639
    %904 = vmatpush.bf16.msra.mxu0 %v632
    %905 = vmatpush.bf16.msra.mxu0 %v625
    %906 = vmatpush.bf16.msra.mxu0 %v618
    %907 = vmatmul.bf16.gmra.mxu0 %v249
    %v908 = vpop.f32.mrf.mxu0
    %v909 = vadd.f32 %v212, %v908
    %v910 = vpop.f32.mrf.mxu0
    %v911 = vadd.f32 %v212, %v910
    %912 = vmatmul.bf16.gmra.mxu0 %v251
    %v913 = vpop.f32.mrf.mxu0
    %v914 = vadd.f32 %v212, %v913
    %v915 = vpop.f32.mrf.mxu0
    %v916 = vadd.f32 %v212, %v915
    %917 = vmatmul.bf16.gmra.mxu0 %v253
    %v918 = vpop.f32.mrf.mxu0
    %v919 = vadd.f32 %v212, %v918
    %v920 = vpop.f32.mrf.mxu0
    %v921 = vadd.f32 %v212, %v920
    %922 = vmatmul.bf16.gmra.mxu0 %v255
    %v923 = vpop.f32.mrf.mxu0
    %v924 = vadd.f32 %v212, %v923
    %v925 = vpop.f32.mrf.mxu0
    %v926 = vadd.f32 %v212, %v925
    %927 = vdwg.mxu0
    %928 = vmatpush.bf16.msra.mxu0 %v723
    %929 = vmatpush.bf16.msra.mxu0 %v716
    %930 = vmatpush.bf16.msra.mxu0 %v709
    %931 = vmatpush.bf16.msra.mxu0 %v702
    %932 = vmatpush.bf16.msra.mxu0 %v695
    %933 = vmatpush.bf16.msra.mxu0 %v688
    %934 = vmatpush.bf16.msra.mxu0 %v681
    %935 = vmatpush.bf16.msra.mxu0 %v674
    %936 = vmatmul.bf16.gmra.mxu0 %v250
    %v937 = vpop.f32.mrf.mxu0
    %v938 = vadd.f32 %v909, %v937
    %v939 = vpop.f32.mrf.mxu0
    %v940 = vadd.f32 %v911, %v939
    %941 = vmatmul.bf16.gmra.mxu0 %v252
    %v942 = vpop.f32.mrf.mxu0
    %v943 = vadd.f32 %v914, %v942
    %v944 = vpop.f32.mrf.mxu0
    %v945 = vadd.f32 %v916, %v944
    %946 = vmatmul.bf16.gmra.mxu0 %v254
    %v947 = vpop.f32.mrf.mxu0
    %v948 = vadd.f32 %v919, %v947
    %v949 = vpop.f32.mrf.mxu0
    %v950 = vadd.f32 %v921, %v949
    %951 = vmatmul.bf16.gmra.mxu0 %v256
    %v952 = vpop.f32.mrf.mxu0
    %v953 = vadd.f32 %v924, %v952
    %v954 = vpop.f32.mrf.mxu0
    %v955 = vadd.f32 %v926, %v954
    %956 = vdwg.mxu0
    %957 = vmatpush.bf16.msra.mxu0 %v668
    %958 = vmatpush.bf16.msra.mxu0 %v661
    %959 = vmatpush.bf16.msra.mxu0 %v654
    %960 = vmatpush.bf16.msra.mxu0 %v647
    %961 = vmatpush.bf16.msra.mxu0 %v640
    %962 = vmatpush.bf16.msra.mxu0 %v633
    %963 = vmatpush.bf16.msra.mxu0 %v626
    %964 = vmatpush.bf16.msra.mxu0 %v619
    %965 = vmatmul.bf16.gmra.mxu0 %v249
    %v966 = vpop.f32.mrf.mxu0
    %v967 = vadd.f32 %v213, %v966
    %v968 = vpop.f32.mrf.mxu0
    %v969 = vadd.f32 %v213, %v968
    %970 = vmatmul.bf16.gmra.mxu0 %v251
    %v971 = vpop.f32.mrf.mxu0
    %v972 = vadd.f32 %v213, %v971
    %v973 = vpop.f32.mrf.mxu0
    %v974 = vadd.f32 %v213, %v973
    %975 = vmatmul.bf16.gmra.mxu0 %v253
    %v976 = vpop.f32.mrf.mxu0
    %v977 = vadd.f32 %v213, %v976
    %v978 = vpop.f32.mrf.mxu0
    %v979 = vadd.f32 %v213, %v978
    %980 = vmatmul.bf16.gmra.mxu0 %v255
    %v981 = vpop.f32.mrf.mxu0
    %v982 = vadd.f32 %v213, %v981
    %v983 = vpop.f32.mrf.mxu0
    %v984 = vadd.f32 %v213, %v983
    %985 = vdwg.mxu0
    %986 = vmatpush.bf16.msra.mxu0 %v724
    %987 = vmatpush.bf16.msra.mxu0 %v717
    %988 = vmatpush.bf16.msra.mxu0 %v710
    %989 = vmatpush.bf16.msra.mxu0 %v703
    %990 = vmatpush.bf16.msra.mxu0 %v696
    %991 = vmatpush.bf16.msra.mxu0 %v689
    %992 = vmatpush.bf16.msra.mxu0 %v682
    %993 = vmatpush.bf16.msra.mxu0 %v675
    %994 = vmatmul.bf16.gmra.mxu0 %v250
    %v995 = vpop.f32.mrf.mxu0
    %v996 = vadd.f32 %v967, %v995
    %v997 = vpop.f32.mrf.mxu0
    %v998 = vadd.f32 %v969, %v997
    %999 = vmatmul.bf16.gmra.mxu0 %v252
    %v1000 = vpop.f32.mrf.mxu0
    %v1001 = vadd.f32 %v972, %v1000
    %v1002 = vpop.f32.mrf.mxu0
    %v1003 = vadd.f32 %v974, %v1002
    %1004 = vmatmul.bf16.gmra.mxu0 %v254
    %v1005 = vpop.f32.mrf.mxu0
    %v1006 = vadd.f32 %v977, %v1005
    %v1007 = vpop.f32.mrf.mxu0
    %v1008 = vadd.f32 %v979, %v1007
    %1009 = vmatmul.bf16.gmra.mxu0 %v256
    %v1010 = vpop.f32.mrf.mxu0
    %v1011 = vadd.f32 %v982, %v1010
    %v1012 = vpop.f32.mrf.mxu0
    %v1013 = vadd.f32 %v984, %v1012
    %1014 = vdwg.mxu0
    %1015 = vmatpush.bf16.msra.mxu0 %v669
    %1016 = vmatpush.bf16.msra.mxu0 %v662
    %1017 = vmatpush.bf16.msra.mxu0 %v655
    %1018 = vmatpush.bf16.msra.mxu0 %v648
    %1019 = vmatpush.bf16.msra.mxu0 %v641
    %1020 = vmatpush.bf16.msra.mxu0 %v634
    %1021 = vmatpush.bf16.msra.mxu0 %v627
    %1022 = vmatpush.bf16.msra.mxu0 %v620
    %1023 = vmatmul.bf16.gmra.mxu0 %v249
    %v1024 = vpop.f32.mrf.mxu0
    %v1025 = vadd.f32 %v214, %v1024
    %v1026 = vpop.f32.mrf.mxu0
    %v1027 = vadd.f32 %v214, %v1026
    %1028 = vmatmul.bf16.gmra.mxu0 %v251
    %v1029 = vpop.f32.mrf.mxu0
    %v1030 = vadd.f32 %v214, %v1029
    %v1031 = vpop.f32.mrf.mxu0
    %v1032 = vadd.f32 %v214, %v1031
    %1033 = vmatmul.bf16.gmra.mxu0 %v253
    %v1034 = vpop.f32.mrf.mxu0
    %v1035 = vadd.f32 %v214, %v1034
    %v1036 = vpop.f32.mrf.mxu0
    %v1037 = vadd.f32 %v214, %v1036
    %1038 = vmatmul.bf16.gmra.mxu0 %v255
    %v1039 = vpop.f32.mrf.mxu0
    %v1040 = vadd.f32 %v214, %v1039
    %v1041 = vpop.f32.mrf.mxu0
    %v1042 = vadd.f32 %v214, %v1041
    %1043 = vdwg.mxu0
    %1044 = vmatpush.bf16.msra.mxu0 %v725
    %1045 = vmatpush.bf16.msra.mxu0 %v718
    %1046 = vmatpush.bf16.msra.mxu0 %v711
    %1047 = vmatpush.bf16.msra.mxu0 %v704
    %1048 = vmatpush.bf16.msra.mxu0 %v697
    %1049 = vmatpush.bf16.msra.mxu0 %v690
    %1050 = vmatpush.bf16.msra.mxu0 %v683
    %1051 = vmatpush.bf16.msra.mxu0 %v676
    %1052 = vmatmul.bf16.gmra.mxu0 %v250
    %v1053 = vpop.f32.mrf.mxu0
    %v1054 = vadd.f32 %v1025, %v1053
    %v1055 = vpop.f32.mrf.mxu0
    %v1056 = vadd.f32 %v1027, %v1055
    %1057 = vmatmul.bf16.gmra.mxu0 %v252
    %v1058 = vpop.f32.mrf.mxu0
    %v1059 = vadd.f32 %v1030, %v1058
    %v1060 = vpop.f32.mrf.mxu0
    %v1061 = vadd.f32 %v1032, %v1060
    %1062 = vmatmul.bf16.gmra.mxu0 %v254
    %v1063 = vpop.f32.mrf.mxu0
    %v1064 = vadd.f32 %v1035, %v1063
    %v1065 = vpop.f32.mrf.mxu0
    %v1066 = vadd.f32 %v1037, %v1065
    %1067 = vmatmul.bf16.gmra.mxu0 %v256
    %v1068 = vpop.f32.mrf.mxu0
    %v1069 = vadd.f32 %v1040, %v1068
    %v1070 = vpop.f32.mrf.mxu0
    %v1071 = vadd.f32 %v1042, %v1070
    %1072 = vdwg.mxu0
    %1073 = vmatpush.bf16.msra.mxu0 %v670
    %1074 = vmatpush.bf16.msra.mxu0 %v663
    %1075 = vmatpush.bf16.msra.mxu0 %v656
    %1076 = vmatpush.bf16.msra.mxu0 %v649
    %1077 = vmatpush.bf16.msra.mxu0 %v642
    %1078 = vmatpush.bf16.msra.mxu0 %v635
    %1079 = vmatpush.bf16.msra.mxu0 %v628
    %1080 = vmatpush.bf16.msra.mxu0 %v621
    %1081 = vmatmul.bf16.gmra.mxu0 %v249
    %v1082 = vpop.f32.mrf.mxu0
    %v1083 = vadd.f32 %v215, %v1082
    %v1084 = vpop.f32.mrf.mxu0
    %v1085 = vadd.f32 %v215, %v1084
    %1086 = vmatmul.bf16.gmra.mxu0 %v251
    %v1087 = vpop.f32.mrf.mxu0
    %v1088 = vadd.f32 %v215, %v1087
    %v1089 = vpop.f32.mrf.mxu0
    %v1090 = vadd.f32 %v215, %v1089
    %1091 = vmatmul.bf16.gmra.mxu0 %v253
    %v1092 = vpop.f32.mrf.mxu0
    %v1093 = vadd.f32 %v215, %v1092
    %v1094 = vpop.f32.mrf.mxu0
    %v1095 = vadd.f32 %v215, %v1094
    %1096 = vmatmul.bf16.gmra.mxu0 %v255
    %v1097 = vpop.f32.mrf.mxu0
    %v1098 = vadd.f32 %v215, %v1097
    %v1099 = vpop.f32.mrf.mxu0
    %v1100 = vadd.f32 %v215, %v1099
    %1101 = vdwg.mxu0
    %1102 = vmatpush.bf16.msra.mxu0 %v726
    %1103 = vmatpush.bf16.msra.mxu0 %v719
    %1104 = vmatpush.bf16.msra.mxu0 %v712
    %1105 = vmatpush.bf16.msra.mxu0 %v705
    %1106 = vmatpush.bf16.msra.mxu0 %v698
    %1107 = vmatpush.bf16.msra.mxu0 %v691
    %1108 = vmatpush.bf16.msra.mxu0 %v684
    %1109 = vmatpush.bf16.msra.mxu0 %v677
    %1110 = vmatmul.bf16.gmra.mxu0 %v250
    %v1111 = vpop.f32.mrf.mxu0
    %v1112 = vadd.f32 %v1083, %v1111
    %v1113 = vpop.f32.mrf.mxu0
    %v1114 = vadd.f32 %v1085, %v1113
    %1115 = vmatmul.bf16.gmra.mxu0 %v252
    %v1116 = vpop.f32.mrf.mxu0
    %v1117 = vadd.f32 %v1088, %v1116
    %v1118 = vpop.f32.mrf.mxu0
    %v1119 = vadd.f32 %v1090, %v1118
    %1120 = vmatmul.bf16.gmra.mxu0 %v254
    %v1121 = vpop.f32.mrf.mxu0
    %v1122 = vadd.f32 %v1093, %v1121
    %v1123 = vpop.f32.mrf.mxu0
    %v1124 = vadd.f32 %v1095, %v1123
    %1125 = vmatmul.bf16.gmra.mxu0 %v256
    %v1126 = vpop.f32.mrf.mxu0
    %v1127 = vadd.f32 %v1098, %v1126
    %v1128 = vpop.f32.mrf.mxu0
    %v1129 = vadd.f32 %v1100, %v1128
    %1130 = vdwg.mxu0
    %1131 = vmatpush.bf16.msra.mxu0 %v671
    %1132 = vmatpush.bf16.msra.mxu0 %v664
    %1133 = vmatpush.bf16.msra.mxu0 %v657
    %1134 = vmatpush.bf16.msra.mxu0 %v650
    %1135 = vmatpush.bf16.msra.mxu0 %v643
    %1136 = vmatpush.bf16.msra.mxu0 %v636
    %1137 = vmatpush.bf16.msra.mxu0 %v629
    %1138 = vmatpush.bf16.msra.mxu0 %v622
    %1139 = vmatmul.bf16.gmra.mxu0 %v249
    %v1140 = vpop.f32.mrf.mxu0
    %v1141 = vadd.f32 %v216, %v1140
    %v1142 = vpop.f32.mrf.mxu0
    %v1143 = vadd.f32 %v216, %v1142
    %1144 = vmatmul.bf16.gmra.mxu0 %v251
    %v1145 = vpop.f32.mrf.mxu0
    %v1146 = vadd.f32 %v216, %v1145
    %v1147 = vpop.f32.mrf.mxu0
    %v1148 = vadd.f32 %v216, %v1147
    %1149 = vmatmul.bf16.gmra.mxu0 %v253
    %v1150 = vpop.f32.mrf.mxu0
    %v1151 = vadd.f32 %v216, %v1150
    %v1152 = vpop.f32.mrf.mxu0
    %v1153 = vadd.f32 %v216, %v1152
    %1154 = vmatmul.bf16.gmra.mxu0 %v255
    %v1155 = vpop.f32.mrf.mxu0
    %v1156 = vadd.f32 %v216, %v1155
    %v1157 = vpop.f32.mrf.mxu0
    %v1158 = vadd.f32 %v216, %v1157
    %1159 = vdwg.mxu0
    %1160 = vmatpush.bf16.msra.mxu0 %v727
    %1161 = vmatpush.bf16.msra.mxu0 %v720
    %1162 = vmatpush.bf16.msra.mxu0 %v713
    %1163 = vmatpush.bf16.msra.mxu0 %v706
    %1164 = vmatpush.bf16.msra.mxu0 %v699
    %1165 = vmatpush.bf16.msra.mxu0 %v692
    %1166 = vmatpush.bf16.msra.mxu0 %v685
    %1167 = vmatpush.bf16.msra.mxu0 %v678
    %1168 = vmatmul.bf16.gmra.mxu0 %v250
    %v1169 = vpop.f32.mrf.mxu0
    %v1170 = vadd.f32 %v1141, %v1169
    %v1171 = vpop.f32.mrf.mxu0
    %v1172 = vadd.f32 %v1143, %v1171
    %1173 = vmatmul.bf16.gmra.mxu0 %v252
    %v1174 = vpop.f32.mrf.mxu0
    %v1175 = vadd.f32 %v1146, %v1174
    %v1176 = vpop.f32.mrf.mxu0
    %v1177 = vadd.f32 %v1148, %v1176
    %1178 = vmatmul.bf16.gmra.mxu0 %v254
    %v1179 = vpop.f32.mrf.mxu0
    %v1180 = vadd.f32 %v1151, %v1179
    %v1181 = vpop.f32.mrf.mxu0
    %v1182 = vadd.f32 %v1153, %v1181
    %1183 = vmatmul.bf16.gmra.mxu0 %v256
    %v1184 = vpop.f32.mrf.mxu0
    %v1185 = vadd.f32 %v1156, %v1184
    %v1186 = vpop.f32.mrf.mxu0
    %v1187 = vadd.f32 %v1158, %v1186
    %1188 = vdwg.mxu0
    %1189 = vmatpush.bf16.msra.mxu0 %v672
    %1190 = vmatpush.bf16.msra.mxu0 %v665
    %1191 = vmatpush.bf16.msra.mxu0 %v658
    %1192 = vmatpush.bf16.msra.mxu0 %v651
    %1193 = vmatpush.bf16.msra.mxu0 %v644
    %1194 = vmatpush.bf16.msra.mxu0 %v637
    %1195 = vmatpush.bf16.msra.mxu0 %v630
    %1196 = vmatpush.bf16.msra.mxu0 %v623
    %1197 = vmatmul.bf16.gmra.mxu0 %v249
    %v1198 = vpop.f32.mrf.mxu0
    %v1199 = vadd.f32 %v217, %v1198
    %v1200 = vpop.f32.mrf.mxu0
    %v1201 = vadd.f32 %v217, %v1200
    %1202 = vmatmul.bf16.gmra.mxu0 %v251
    %v1203 = vpop.f32.mrf.mxu0
    %v1204 = vadd.f32 %v217, %v1203
    %v1205 = vpop.f32.mrf.mxu0
    %v1206 = vadd.f32 %v217, %v1205
    %1207 = vmatmul.bf16.gmra.mxu0 %v253
    %v1208 = vpop.f32.mrf.mxu0
    %v1209 = vadd.f32 %v217, %v1208
    %v1210 = vpop.f32.mrf.mxu0
    %v1211 = vadd.f32 %v217, %v1210
    %1212 = vmatmul.bf16.gmra.mxu0 %v255
    %v1213 = vpop.f32.mrf.mxu0
    %v1214 = vadd.f32 %v217, %v1213
    %v1215 = vpop.f32.mrf.mxu0
    %v1216 = vadd.f32 %v217, %v1215
    %1217 = vdwg.mxu0
    %1218 = vmatpush.bf16.msra.mxu0 %v728
    %1219 = vmatpush.bf16.msra.mxu0 %v721
    %1220 = vmatpush.bf16.msra.mxu0 %v714
    %1221 = vmatpush.bf16.msra.mxu0 %v707
    %1222 = vmatpush.bf16.msra.mxu0 %v700
    %1223 = vmatpush.bf16.msra.mxu0 %v693
    %1224 = vmatpush.bf16.msra.mxu0 %v686
    %1225 = vmatpush.bf16.msra.mxu0 %v679
    %1226 = vmatmul.bf16.gmra.mxu0 %v250
    %v1227 = vpop.f32.mrf.mxu0
    %v1228 = vadd.f32 %v1199, %v1227
    %v1229 = vpop.f32.mrf.mxu0
    %v1230 = vadd.f32 %v1201, %v1229
    %1231 = vmatmul.bf16.gmra.mxu0 %v252
    %v1232 = vpop.f32.mrf.mxu0
    %v1233 = vadd.f32 %v1204, %v1232
    %v1234 = vpop.f32.mrf.mxu0
    %v1235 = vadd.f32 %v1206, %v1234
    %1236 = vmatmul.bf16.gmra.mxu0 %v254
    %v1237 = vpop.f32.mrf.mxu0
    %v1238 = vadd.f32 %v1209, %v1237
    %v1239 = vpop.f32.mrf.mxu0
    %v1240 = vadd.f32 %v1211, %v1239
    %1241 = vmatmul.bf16.gmra.mxu0 %v256
    %v1242 = vpop.f32.mrf.mxu0
    %v1243 = vadd.f32 %v1214, %v1242
    %v1244 = vpop.f32.mrf.mxu0
    %v1245 = vadd.f32 %v1216, %v1244
    %1246 = vdwg.mxu0
    %1247 = vst [vmem:[#allocation2] sm:$0xff] %v880
    %1248 = vst [vmem:[#allocation2 + $0x8] sm:$0xff] %v938
    %1249 = vst [vmem:[#allocation2 + $0x10] sm:$0xff] %v996
    %1250 = vst [vmem:[#allocation2 + $0x18] sm:$0xff] %v1054
    %1251 = vst [vmem:[#allocation2 + $0x20] sm:$0xff] %v1112
    %1252 = vst [vmem:[#allocation2 + $0x28] sm:$0xff] %v1170
    %1253 = vst [vmem:[#allocation2 + $0x30] sm:$0xff] %v1228
    %1254 = vst [vmem:[#allocation2 + $0x38] sm:$0xff] %v882
    %1255 = vst [vmem:[#allocation2 + $0x40] sm:$0xff] %v940
    %1256 = vst [vmem:[#allocation2 + $0x48] sm:$0xff] %v998
    %1257 = vst [vmem:[#allocation2 + $0x50] sm:$0xff] %v1056
    %1258 = vst [vmem:[#allocation2 + $0x58] sm:$0xff] %v1114
    %1259 = vst [vmem:[#allocation2 + $0x60] sm:$0xff] %v1172
    %1260 = vst [vmem:[#allocation2 + $0x68] sm:$0xff] %v1230
    %1261 = vst [vmem:[#allocation2 + $0x70] sm:$0xff] %v885
    %1262 = vst [vmem:[#allocation2 + $0x78] sm:$0xff] %v943
    %1263 = vst [vmem:[#allocation2 + $0x80] sm:$0xff] %v1001
    %1264 = vst [vmem:[#allocation2 + $0x88] sm:$0xff] %v1059
    %1265 = vst [vmem:[#allocation2 + $0x90] sm:$0xff] %v1117
    %1266 = vst [vmem:[#allocation2 + $0x98] sm:$0xff] %v1175
    %1267 = vst [vmem:[#allocation2 + $0xa0] sm:$0xff] %v1233
    %1268 = vst [vmem:[#allocation2 + $0xa8] sm:$0xff] %v887
    %1269 = vst [vmem:[#allocation2 + $0xb0] sm:$0xff] %v945
    %1270 = vst [vmem:[#allocation2 + $0xb8] sm:$0xff] %v1003
    %1271 = vst [vmem:[#allocation2 + $0xc0] sm:$0xff] %v1061
    %1272 = vst [vmem:[#allocation2 + $0xc8] sm:$0xff] %v1119
    %1273 = vst [vmem:[#allocation2 + $0xd0] sm:$0xff] %v1177
    %1274 = vst [vmem:[#allocation2 + $0xd8] sm:$0xff] %v1235
    %1275 = vst [vmem:[#allocation2 + $0xe0] sm:$0xff] %v890
    %1276 = vst [vmem:[#allocation2 + $0xe8] sm:$0xff] %v948
    %1277 = vst [vmem:[#allocation2 + $0xf0] sm:$0xff] %v1006
    %1278 = vst [vmem:[#allocation2 + $0xf8] sm:$0xff] %v1064
    %1279 = vst [vmem:[#allocation2 + $0x100] sm:$0xff] %v1122
    %1280 = vst [vmem:[#allocation2 + $0x108] sm:$0xff] %v1180
    %1281 = vst [vmem:[#allocation2 + $0x110] sm:$0xff] %v1238
    %1282 = vst [vmem:[#allocation2 + $0x118] sm:$0xff] %v892
    %1283 = vst [vmem:[#allocation2 + $0x120] sm:$0xff] %v950
    %1284 = vst [vmem:[#allocation2 + $0x128] sm:$0xff] %v1008
    %1285 = vst [vmem:[#allocation2 + $0x130] sm:$0xff] %v1066
    %1286 = vst [vmem:[#allocation2 + $0x138] sm:$0xff] %v1124
    %1287 = vst [vmem:[#allocation2 + $0x140] sm:$0xff] %v1182
    %1288 = vst [vmem:[#allocation2 + $0x148] sm:$0xff] %v1240
    %1289 = vst [vmem:[#allocation2 + $0x150] sm:$0xff] %v895
    %1290 = vst [vmem:[#allocation2 + $0x158] sm:$0xff] %v953
    %1291 = vst [vmem:[#allocation2 + $0x160] sm:$0xff] %v1011
    %1292 = vst [vmem:[#allocation2 + $0x168] sm:$0xff] %v1069
    %1293 = vst [vmem:[#allocation2 + $0x170] sm:$0xff] %v1127
    %1294 = vst [vmem:[#allocation2 + $0x178] sm:$0xff] %v1185
    %1295 = vst [vmem:[#allocation2 + $0x180] sm:$0xff] %v1243
    %1296 = vst [vmem:[#allocation2 + $0x188] sm:$0xff] %v897
    %1297 = vst [vmem:[#allocation2 + $0x190] sm:$0xff] %v955
    %1298 = vst [vmem:[#allocation2 + $0x198] sm:$0xff] %v1013
    %1299 = vst [vmem:[#allocation2 + $0x1a0] sm:$0xff] %v1071
    %1300 = vst [vmem:[#allocation2 + $0x1a8] sm:$0xff] %v1129
    %1301 = vst [vmem:[#allocation2 + $0x1b0] sm:$0xff] %v1187
    %1302 = vst [vmem:[#allocation2 + $0x1b8] sm:$0xff] %v1245
    %v1303 = vld [vmem:[#allocation9] sm:$0xff]
    %v1304 = vld [vmem:[#allocation9 + $0x8] sm:$0xff]
    %v1305 = vld [vmem:[#allocation9 + $0x10] sm:$0xff]
    %v1306 = vld [vmem:[#allocation9 + $0x18] sm:$0xf]
    %v1307 = vld [vmem:[#allocation9 + $0x1c] sm:$0xff]
    %v1308 = vld [vmem:[#allocation9 + $0x24] sm:$0xff]
    %v1309 = vld [vmem:[#allocation9 + $0x2c] sm:$0xff]
    %v1310 = vld [vmem:[#allocation9 + $0x34] sm:$0xf]
    %v1311 = vld [vmem:[#allocation9 + $0x38] sm:$0xff]
    %v1312 = vld [vmem:[#allocation9 + $0x40] sm:$0xff]
    %v1313 = vld [vmem:[#allocation9 + $0x48] sm:$0xff]
    %v1314 = vld [vmem:[#allocation9 + $0x50] sm:$0xf]
    %v1315 = vld [vmem:[#allocation9 + $0x54] sm:$0xff]
    %v1316 = vld [vmem:[#allocation9 + $0x5c] sm:$0xff]
    %v1317 = vld [vmem:[#allocation9 + $0x64] sm:$0xff]
    %v1318 = vld [vmem:[#allocation9 + $0x6c] sm:$0xf]
    %v1319 = vld [vmem:[#allocation9 + $0x70] sm:$0xff]
    %v1320 = vld [vmem:[#allocation9 + $0x78] sm:$0xff]
    %v1321 = vld [vmem:[#allocation9 + $0x80] sm:$0xff]
    %v1322 = vld [vmem:[#allocation9 + $0x88] sm:$0xf]
    %v1323 = vld [vmem:[#allocation9 + $0x8c] sm:$0xff]
    %v1324 = vld [vmem:[#allocation9 + $0x94] sm:$0xff]
    %v1325 = vld [vmem:[#allocation9 + $0x9c] sm:$0xff]
    %v1326 = vld [vmem:[#allocation9 + $0xa4] sm:$0xf]
    %v1327 = vld [vmem:[#allocation9 + $0xa8] sm:$0xff]
    %v1328 = vld [vmem:[#allocation9 + $0xb0] sm:$0xff]
    %v1329 = vld [vmem:[#allocation9 + $0xb8] sm:$0xff]
    %v1330 = vld [vmem:[#allocation9 + $0xc0] sm:$0xf]
    %v1331 = vld [vmem:[#allocation9 + $0xc4] sm:$0xff]
    %v1332 = vld [vmem:[#allocation9 + $0xcc] sm:$0xff]
    %v1333 = vld [vmem:[#allocation9 + $0xd4] sm:$0xff]
    %v1334 = vld [vmem:[#allocation9 + $0xdc] sm:$0xf]
    %v1335 = vld [vmem:[#allocation9 + $0xe0] sm:$0xff]
    %v1336 = vld [vmem:[#allocation9 + $0xe8] sm:$0xff]
    %v1337 = vld [vmem:[#allocation9 + $0xf0] sm:$0xff]
    %v1338 = vld [vmem:[#allocation9 + $0xf8] sm:$0xf]
    %v1339 = vld [vmem:[#allocation9 + $0xfc] sm:$0xff]
    %v1340 = vld [vmem:[#allocation9 + $0x104] sm:$0xff]
    %v1341 = vld [vmem:[#allocation9 + $0x10c] sm:$0xff]
    %v1342 = vld [vmem:[#allocation9 + $0x114] sm:$0xf]
    %v1343 = vld [vmem:[#allocation9 + $0x118] sm:$0xff]
    %v1344 = vld [vmem:[#allocation9 + $0x120] sm:$0xff]
    %v1345 = vld [vmem:[#allocation9 + $0x128] sm:$0xff]
    %v1346 = vld [vmem:[#allocation9 + $0x130] sm:$0xf]
    %v1347 = vld [vmem:[#allocation9 + $0x134] sm:$0xff]
    %v1348 = vld [vmem:[#allocation9 + $0x13c] sm:$0xff]
    %v1349 = vld [vmem:[#allocation9 + $0x144] sm:$0xff]
    %v1350 = vld [vmem:[#allocation9 + $0x14c] sm:$0xf]
    %v1351 = vld [vmem:[#allocation9 + $0x150] sm:$0xff]
    %v1352 = vld [vmem:[#allocation9 + $0x158] sm:$0xff]
    %v1353 = vld [vmem:[#allocation9 + $0x160] sm:$0xff]
    %v1354 = vld [vmem:[#allocation9 + $0x168] sm:$0xf]
    %v1355 = vld [vmem:[#allocation9 + $0x16c] sm:$0xff]
    %v1356 = vld [vmem:[#allocation9 + $0x174] sm:$0xff]
    %v1357 = vld [vmem:[#allocation9 + $0x17c] sm:$0xff]
    %v1358 = vld [vmem:[#allocation9 + $0x184] sm:$0xf]
    %v1359 = vld [vmem:[#allocation9 + $0x188] sm:$0xff]
    %v1360 = vld [vmem:[#allocation9 + $0x190] sm:$0xff]
    %v1361 = vld [vmem:[#allocation9 + $0x198] sm:$0xff]
    %v1362 = vld [vmem:[#allocation9 + $0x1a0] sm:$0xf]
    %v1363 = vld [vmem:[#allocation9 + $0x1a4] sm:$0xff]
    %v1364 = vld [vmem:[#allocation9 + $0x1ac] sm:$0xff]
    %v1365 = vld [vmem:[#allocation9 + $0x1b4] sm:$0xff]
    %v1366 = vld [vmem:[#allocation9 + $0x1bc] sm:$0xf]
    %v1367 = vld [vmem:[#allocation3] sm:$0xff]
    %v1368 = vld [vmem:[#allocation4] sm:$0xff]
    %v1369 = vld [vmem:[#allocation5] sm:$0xff]
    %v1370 = vpack.c.bf16 %v1367, %v1367
    %s1371 = smul.u32 0, 7
    %s1372 = smul.addr %s1371, 8
    %s1373 = scalar_lea.vmem [#allocation2], %s1372
    %v1374 = vld [vmem:[%s1373] sm:$0xff]
    %v1375 = vld [vmem:[%s1373 + $0x8] sm:$0xff]
    %v1376 = vld [vmem:[%s1373 + $0x10] sm:$0xff]
    %v1377 = vld [vmem:[%s1373 + $0x18] sm:$0xff]
    %v1378 = vld [vmem:[%s1373 + $0x20] sm:$0xff]
    %v1379 = vld [vmem:[%s1373 + $0x28] sm:$0xff]
    %v1380 = vld [vmem:[%s1373 + $0x30] sm:$0xff]
    %v1445 = vunpack.c.l.b16 %v1303
    %v1446 = vunpack.c.h.b16 %v1303
    %v1447 = vunpack.c.l.b16 %v1304
    %v1448 = vunpack.c.h.b16 %v1304
    %v1449 = vunpack.c.l.b16 %v1305
    %v1450 = vunpack.c.h.b16 %v1305
    %v1451 = vunpack.c.l.b16 %v1306
    %v1452 = vunpack.c.l.b16 %v1307
    %v1453 = vunpack.c.h.b16 %v1307
    %v1454 = vunpack.c.l.b16 %v1308
    %v1455 = vunpack.c.h.b16 %v1308
    %v1456 = vunpack.c.l.b16 %v1309
    %v1457 = vunpack.c.h.b16 %v1309
    %v1458 = vunpack.c.l.b16 %v1310
    %v1459 = vunpack.c.l.b16 %v1311
    %v1460 = vunpack.c.h.b16 %v1311
    %v1461 = vunpack.c.l.b16 %v1312
    %v1462 = vunpack.c.h.b16 %v1312
    %v1463 = vunpack.c.l.b16 %v1313
    %v1464 = vunpack.c.h.b16 %v1313
    %v1465 = vunpack.c.l.b16 %v1314
    %v1466 = vunpack.c.l.b16 %v1315
    %v1467 = vunpack.c.h.b16 %v1315
    %v1468 = vunpack.c.l.b16 %v1316
    %v1469 = vunpack.c.h.b16 %v1316
    %v1470 = vunpack.c.l.b16 %v1317
    %v1471 = vunpack.c.h.b16 %v1317
    %v1472 = vunpack.c.l.b16 %v1318
    %v1473 = vunpack.c.l.b16 %v1319
    %v1474 = vunpack.c.h.b16 %v1319
    %v1475 = vunpack.c.l.b16 %v1320
    %v1476 = vunpack.c.h.b16 %v1320
    %v1477 = vunpack.c.l.b16 %v1321
    %v1478 = vunpack.c.h.b16 %v1321
    %v1479 = vunpack.c.l.b16 %v1322
    %v1480 = vunpack.c.l.b16 %v1323
    %v1481 = vunpack.c.h.b16 %v1323
    %v1482 = vunpack.c.l.b16 %v1324
    %v1483 = vunpack.c.h.b16 %v1324
    %v1484 = vunpack.c.l.b16 %v1325
    %v1485 = vunpack.c.h.b16 %v1325
    %v1486 = vunpack.c.l.b16 %v1326
    %v1487 = vunpack.c.l.b16 %v1327
    %v1488 = vunpack.c.h.b16 %v1327
    %v1489 = vunpack.c.l.b16 %v1328
    %v1490 = vunpack.c.h.b16 %v1328
    %v1491 = vunpack.c.l.b16 %v1329
    %v1492 = vunpack.c.h.b16 %v1329
    %v1493 = vunpack.c.l.b16 %v1330
    %v1494 = vunpack.c.l.b16 %v1331
    %v1495 = vunpack.c.h.b16 %v1331
    %v1496 = vunpack.c.l.b16 %v1332
    %v1497 = vunpack.c.h.b16 %v1332
    %v1498 = vunpack.c.l.b16 %v1333
    %v1499 = vunpack.c.h.b16 %v1333
    %v1500 = vunpack.c.l.b16 %v1334
    %v1501 = vunpack.c.l.b16 %v1335
    %v1502 = vunpack.c.h.b16 %v1335
    %v1503 = vunpack.c.l.b16 %v1336
    %v1504 = vunpack.c.h.b16 %v1336
    %v1505 = vunpack.c.l.b16 %v1337
    %v1506 = vunpack.c.h.b16 %v1337
    %v1507 = vunpack.c.l.b16 %v1338
    %v1508 = vunpack.c.l.b16 %v1339
    %v1509 = vunpack.c.h.b16 %v1339
    %v1510 = vunpack.c.l.b16 %v1340
    %v1511 = vunpack.c.h.b16 %v1340
    %v1512 = vunpack.c.l.b16 %v1341
    %v1513 = vunpack.c.h.b16 %v1341
    %v1514 = vunpack.c.l.b16 %v1342
    %v1515 = vunpack.c.l.b16 %v1343
    %v1516 = vunpack.c.h.b16 %v1343
    %v1517 = vunpack.c.l.b16 %v1344
    %v1518 = vunpack.c.h.b16 %v1344
    %v1519 = vunpack.c.l.b16 %v1345
    %v1520 = vunpack.c.h.b16 %v1345
    %v1521 = vunpack.c.l.b16 %v1346
    %v1522 = vunpack.c.l.b16 %v1347
    %v1523 = vunpack.c.h.b16 %v1347
    %v1524 = vunpack.c.l.b16 %v1348
    %v1525 = vunpack.c.h.b16 %v1348
    %v1526 = vunpack.c.l.b16 %v1349
    %v1527 = vunpack.c.h.b16 %v1349
    %v1528 = vunpack.c.l.b16 %v1350
    %v1529 = vunpack.c.l.b16 %v1351
    %v1530 = vunpack.c.h.b16 %v1351
    %v1531 = vunpack.c.l.b16 %v1352
    %v1532 = vunpack.c.h.b16 %v1352
    %v1533 = vunpack.c.l.b16 %v1353
    %v1534 = vunpack.c.h.b16 %v1353
    %v1535 = vunpack.c.l.b16 %v1354
    %v1536 = vunpack.c.l.b16 %v1355
    %v1537 = vunpack.c.h.b16 %v1355
    %v1538 = vunpack.c.l.b16 %v1356
    %v1539 = vunpack.c.h.b16 %v1356
    %v1540 = vunpack.c.l.b16 %v1357
    %v1541 = vunpack.c.h.b16 %v1357
    %v1542 = vunpack.c.l.b16 %v1358
    %v1543 = vunpack.c.l.b16 %v1359
    %v1544 = vunpack.c.h.b16 %v1359
    %v1545 = vunpack.c.l.b16 %v1360
    %v1546 = vunpack.c.h.b16 %v1360
    %v1547 = vunpack.c.l.b16 %v1361
    %v1548 = vunpack.c.h.b16 %v1361
    %v1549 = vunpack.c.l.b16 %v1362
    %v1550 = vunpack.c.l.b16 %v1363
    %v1551 = vunpack.c.h.b16 %v1363
    %v1552 = vunpack.c.l.b16 %v1364
    %v1553 = vunpack.c.h.b16 %v1364
    %v1554 = vunpack.c.l.b16 %v1365
    %v1555 = vunpack.c.h.b16 %v1365
    %v1556 = vunpack.c.l.b16 %v1366
    %v1557 = vpack.c.b16 %v1452, %v1445
    %v1558 = vpack.c.b16 %v1453, %v1446
    %v1559 = vpack.c.b16 %v1454, %v1447
    %v1560 = vpack.c.b16 %v1455, %v1448
    %v1561 = vpack.c.b16 %v1456, %v1449
    %v1562 = vpack.c.b16 %v1457, %v1450
    %v1563 = vpack.c.b16 %v1458, %v1451
    %v1564 = vpack.c.b16 %v1466, %v1459
    %v1565 = vpack.c.b16 %v1467, %v1460
    %v1566 = vpack.c.b16 %v1468, %v1461
    %v1567 = vpack.c.b16 %v1469, %v1462
    %v1568 = vpack.c.b16 %v1470, %v1463
    %v1569 = vpack.c.b16 %v1471, %v1464
    %v1570 = vpack.c.b16 %v1472, %v1465
    %v1571 = vpack.c.b16 %v1480, %v1473
    %v1572 = vpack.c.b16 %v1481, %v1474
    %v1573 = vpack.c.b16 %v1482, %v1475
    %v1574 = vpack.c.b16 %v1483, %v1476
    %v1575 = vpack.c.b16 %v1484, %v1477
    %v1576 = vpack.c.b16 %v1485, %v1478
    %v1577 = vpack.c.b16 %v1486, %v1479
    %v1578 = vpack.c.b16 %v1494, %v1487
    %v1579 = vpack.c.b16 %v1495, %v1488
    %v1580 = vpack.c.b16 %v1496, %v1489
    %v1581 = vpack.c.b16 %v1497, %v1490
    %v1582 = vpack.c.b16 %v1498, %v1491
    %v1583 = vpack.c.b16 %v1499, %v1492
    %v1584 = vpack.c.b16 %v1500, %v1493
    %v1585 = vpack.c.b16 %v1508, %v1501
    %v1586 = vpack.c.b16 %v1509, %v1502
    %v1587 = vpack.c.b16 %v1510, %v1503
    %v1588 = vpack.c.b16 %v1511, %v1504
    %v1589 = vpack.c.b16 %v1512, %v1505
    %v1590 = vpack.c.b16 %v1513, %v1506
    %v1591 = vpack.c.b16 %v1514, %v1507
    %v1592 = vpack.c.b16 %v1522, %v1515
    %v1593 = vpack.c.b16 %v1523, %v1516
    %v1594 = vpack.c.b16 %v1524, %v1517
    %v1595 = vpack.c.b16 %v1525, %v1518
    %v1596 = vpack.c.b16 %v1526, %v1519
    %v1597 = vpack.c.b16 %v1527, %v1520
    %v1598 = vpack.c.b16 %v1528, %v1521
    %v1599 = vpack.c.b16 %v1536, %v1529
    %v1600 = vpack.c.b16 %v1537, %v1530
    %v1601 = vpack.c.b16 %v1538, %v1531
    %v1602 = vpack.c.b16 %v1539, %v1532
    %v1603 = vpack.c.b16 %v1540, %v1533
    %v1604 = vpack.c.b16 %v1541, %v1534
    %v1605 = vpack.c.b16 %v1542, %v1535
    %v1606 = vpack.c.b16 %v1550, %v1543
    %v1607 = vpack.c.b16 %v1551, %v1544
    %v1608 = vpack.c.b16 %v1552, %v1545
    %v1609 = vpack.c.b16 %v1553, %v1546
    %v1610 = vpack.c.b16 %v1554, %v1547
    %v1611 = vpack.c.b16 %v1555, %v1548
    %v1612 = vpack.c.b16 %v1556, %v1549
    %1669 = vmatpush.bf16.msra.mxu0 %v1606
    %1670 = vmatpush.bf16.msra.mxu0 %v1599
    %1671 = vmatpush.bf16.msra.mxu0 %v1592
    %1672 = vmatpush.bf16.msra.mxu0 %v1585
    %1673 = vmatpush.bf16.msra.mxu0 %v1578
    %1674 = vmatpush.bf16.msra.mxu0 %v1571
    %1675 = vmatpush.bf16.msra.mxu0 %v1564
    %1676 = vmatpush.bf16.msra.mxu0 %v1557
    %1677 = vmatmul.bf16.gmra.mxu0 %v1370
    %v1678 = vpop.f32.mrf.mxu0
    %v1679 = vadd.f32 %v1374, %v1678
    %v1680 = vpop.f32.mrf.mxu0
    %1681 = vdwg.mxu0
    %1682 = vmatpush.bf16.msra.mxu0 %v1607
    %1683 = vmatpush.bf16.msra.mxu0 %v1600
    %1684 = vmatpush.bf16.msra.mxu0 %v1593
    %1685 = vmatpush.bf16.msra.mxu0 %v1586
    %1686 = vmatpush.bf16.msra.mxu0 %v1579
    %1687 = vmatpush.bf16.msra.mxu0 %v1572
    %1688 = vmatpush.bf16.msra.mxu0 %v1565
    %1689 = vmatpush.bf16.msra.mxu0 %v1558
    %1690 = vmatmul.bf16.gmra.mxu0 %v1370
    %v1691 = vpop.f32.mrf.mxu0
    %v1692 = vadd.f32 %v1375, %v1691
    %v1693 = vpop.f32.mrf.mxu0
    %1694 = vdwg.mxu0
    %1695 = vmatpush.bf16.msra.mxu0 %v1608
    %1696 = vmatpush.bf16.msra.mxu0 %v1601
    %1697 = vmatpush.bf16.msra.mxu0 %v1594
    %1698 = vmatpush.bf16.msra.mxu0 %v1587
    %1699 = vmatpush.bf16.msra.mxu0 %v1580
    %1700 = vmatpush.bf16.msra.mxu0 %v1573
    %1701 = vmatpush.bf16.msra.mxu0 %v1566
    %1702 = vmatpush.bf16.msra.mxu0 %v1559
    %1703 = vmatmul.bf16.gmra.mxu0 %v1370
    %v1704 = vpop.f32.mrf.mxu0
    %v1705 = vadd.f32 %v1376, %v1704
    %v1706 = vpop.f32.mrf.mxu0
    %1707 = vdwg.mxu0
    %1708 = vmatpush.bf16.msra.mxu0 %v1609
    %1709 = vmatpush.bf16.msra.mxu0 %v1602
    %1710 = vmatpush.bf16.msra.mxu0 %v1595
    %1711 = vmatpush.bf16.msra.mxu0 %v1588
    %1712 = vmatpush.bf16.msra.mxu0 %v1581
    %1713 = vmatpush.bf16.msra.mxu0 %v1574
    %1714 = vmatpush.bf16.msra.mxu0 %v1567
    %1715 = vmatpush.bf16.msra.mxu0 %v1560
    %1716 = vmatmul.bf16.gmra.mxu0 %v1370
    %v1717 = vpop.f32.mrf.mxu0
    %v1718 = vadd.f32 %v1377, %v1717
    %v1719 = vpop.f32.mrf.mxu0
    %1720 = vdwg.mxu0
    %1721 = vmatpush.bf16.msra.mxu0 %v1610
    %1722 = vmatpush.bf16.msra.mxu0 %v1603
    %1723 = vmatpush.bf16.msra.mxu0 %v1596
    %1724 = vmatpush.bf16.msra.mxu0 %v1589
    %1725 = vmatpush.bf16.msra.mxu0 %v1582
    %1726 = vmatpush.bf16.msra.mxu0 %v1575
    %1727 = vmatpush.bf16.msra.mxu0 %v1568
    %1728 = vmatpush.bf16.msra.mxu0 %v1561
    %1729 = vmatmul.bf16.gmra.mxu0 %v1370
    %v1730 = vpop.f32.mrf.mxu0
    %v1731 = vadd.f32 %v1378, %v1730
    %v1732 = vpop.f32.mrf.mxu0
    %1733 = vdwg.mxu0
    %1734 = vmatpush.bf16.msra.mxu0 %v1611
    %1735 = vmatpush.bf16.msra.mxu0 %v1604
    %1736 = vmatpush.bf16.msra.mxu0 %v1597
    %1737 = vmatpush.bf16.msra.mxu0 %v1590
    %1738 = vmatpush.bf16.msra.mxu0 %v1583
    %1739 = vmatpush.bf16.msra.mxu0 %v1576
    %1740 = vmatpush.bf16.msra.mxu0 %v1569
    %1741 = vmatpush.bf16.msra.mxu0 %v1562
    %1742 = vmatmul.bf16.gmra.mxu0 %v1370
    %v1743 = vpop.f32.mrf.mxu0
    %v1744 = vadd.f32 %v1379, %v1743
    %v1745 = vpop.f32.mrf.mxu0
    %1746 = vdwg.mxu0
    %1747 = vmatpush.bf16.msra.mxu0 %v1612
    %1748 = vmatpush.bf16.msra.mxu0 %v1605
    %1749 = vmatpush.bf16.msra.mxu0 %v1598
    %1750 = vmatpush.bf16.msra.mxu0 %v1591
    %1751 = vmatpush.bf16.msra.mxu0 %v1584
    %1752 = vmatpush.bf16.msra.mxu0 %v1577
    %1753 = vmatpush.bf16.msra.mxu0 %v1570
    %1754 = vmatpush.bf16.msra.mxu0 %v1563
    %1755 = vmatmul.bf16.gmra.mxu0 %v1370
    %v1756 = vpop.f32.mrf.mxu0
    %v1757 = vadd.f32 %v1380, %v1756
    %v1758 = vpop.f32.mrf.mxu0
    %1759 = vdwg.mxu0
    %v1760 = vmul.f32 %v1679, 0.5
    %v1761 = vtanh.pop %v1760
    %v1762 = vmul.f32 %v1761, 0.5
    %v1763 = vadd.f32 %v1762, 0.5
    %v1764 = vmul.f32 %v1692, 0.5
    %v1765 = vtanh.pop %v1764
    %v1766 = vmul.f32 %v1765, 0.5
    %v1767 = vadd.f32 %v1766, 0.5
    %v1768 = vmul.f32 %v1705, 0.5
    %v1769 = vtanh.pop %v1768
    %v1770 = vmul.f32 %v1769, 0.5
    %v1771 = vadd.f32 %v1770, 0.5
    %v1772 = vtanh.pop %v1718
    %v1773 = vmul.f32 %v1731, 0.5
    %v1774 = vtanh.pop %v1773
    %v1775 = vmul.f32 %v1774, 0.5
    %v1776 = vadd.f32 %v1775, 0.5
    %v1777 = vmul.f32 %v1744, 0.5
    %v1778 = vtanh.pop %v1777
    %v1779 = vmul.f32 %v1778, 0.5
    %v1780 = vadd.f32 %v1779, 0.5
    %v1781 = vmax.f32 %v1757, 0.0
    %vm1782 = vcmp.ne.f32.partialorder %v1757, %v1757
    %v1783 = vadd.f32 %v1757, 0.0
    %v1784 = vand.u32 2147483647, %v1757
    %v1785 = vsub.f32 0.0, %v1784
    %v1786 = vmul.f32 %v1785, 1.442695
    %v1787 = vpow.pop %v1786
    %v1788 = vadd.f32 %v1787, 1.0
    %v1789 = vlog2.pop %v1788
    %v1790 = vmul.f32 %v1789, 0.6931472
    %v1791 = vmul.f32 -0.5, %v1787
    %v1792 = vadd.f32 %v1791, 1.0
    %v1793 = vmul.f32 %v1792, %v1787
    %v1794 = vand.u32 2147483647, %v1787
    %vm1795 = vcmp.lt.f32.partialorder %v1794, 0.0004427343
    %v1796 = vsel %vm1795, %v1793, %v1790
    %v1797 = vadd.f32 %v1781, %v1796
    %v1798 = vsel %vm1782, %v1783, %v1797
    %v1799 = vmul.f32 %v1767, %v1368
    %v1800 = vmul.f32 %v1763, %v1772
    %v1801 = vadd.f32 %v1799, %v1800
    %v1802 = vmul.f32 %v1780, %v1369
    %v1803 = vmul.f32 %v1776, %v1772
    %v1804 = vadd.f32 %v1802, %v1803
    %v1805 = vld [vmem:[%s1] sm:$0xff]
    %v1806 = vsub.f32 %v1801, %v1804
    %v1807 = vsub.f32 0.0, %v1798
    %1809 = vset.pattern.permute.xlu0 0
    %1810 = vperm.xlu0 %1809, %v1805
    %v1811 = vpop.permute.xlu0 %1810
    %v1813 = vmul.f32 %v1807, %v1811
    %v1814 = vmul.f32 %v1813, 1.442695
    %v1815 = vpow.pop %v1814
    %v1816 = vmul.f32 %v1806, %v1815
    %v1817 = vadd.f32 %v1804, %v1816
    %v1818 = vtanh.pop %v1817
    %v1819 = vmul.f32 %v1771, %v1818
    %1820 = vst [vmem:[#allocation12] sm:$0xff] %v1819
    %v1821 = vpack.c.bf16 %v1819, %v1819
    %s1822 = smul.u32 1, 7
    %s1823 = smul.addr %s1822, 8
    %s1824 = scalar_lea.vmem [#allocation2], %s1823
    %v1825 = vld [vmem:[%s1824] sm:$0xff]
    %v1826 = vld [vmem:[%s1824 + $0x8] sm:$0xff]
    %v1827 = vld [vmem:[%s1824 + $0x10] sm:$0xff]
    %v1828 = vld [vmem:[%s1824 + $0x18] sm:$0xff]
    %v1829 = vld [vmem:[%s1824 + $0x20] sm:$0xff]
    %v1830 = vld [vmem:[%s1824 + $0x28] sm:$0xff]
    %v1831 = vld [vmem:[%s1824 + $0x30] sm:$0xff]
    %1832 = vmatpush.bf16.msra.mxu0 %v1606
    %1833 = vmatpush.bf16.msra.mxu0 %v1599
    %1834 = vmatpush.bf16.msra.mxu0 %v1592
    %1835 = vmatpush.bf16.msra.mxu0 %v1585
    %1836 = vmatpush.bf16.msra.mxu0 %v1578
    %1837 = vmatpush.bf16.msra.mxu0 %v1571
    %1838 = vmatpush.bf16.msra.mxu0 %v1564
    %1839 = vmatpush.bf16.msra.mxu0 %v1557
    %1840 = vmatmul.bf16.gmra.mxu0 %v1821
    %v1841 = vpop.f32.mrf.mxu0
    %v1842 = vadd.f32 %v1825, %v1841
    %v1843 = vpop.f32.mrf.mxu0
    %1844 = vdwg.mxu0
    %1845 = vmatpush.bf16.msra.mxu0 %v1607
    %1846 = vmatpush.bf16.msra.mxu0 %v1600
    %1847 = vmatpush.bf16.msra.mxu0 %v1593
    %1848 = vmatpush.bf16.msra.mxu0 %v1586
    %1849 = vmatpush.bf16.msra.mxu0 %v1579
    %1850 = vmatpush.bf16.msra.mxu0 %v1572
    %1851 = vmatpush.bf16.msra.mxu0 %v1565
    %1852 = vmatpush.bf16.msra.mxu0 %v1558
    %1853 = vmatmul.bf16.gmra.mxu0 %v1821
    %v1854 = vpop.f32.mrf.mxu0
    %v1855 = vadd.f32 %v1826, %v1854
    %v1856 = vpop.f32.mrf.mxu0
    %1857 = vdwg.mxu0
    %1858 = vmatpush.bf16.msra.mxu0 %v1608
    %1859 = vmatpush.bf16.msra.mxu0 %v1601
    %1860 = vmatpush.bf16.msra.mxu0 %v1594
    %1861 = vmatpush.bf16.msra.mxu0 %v1587
    %1862 = vmatpush.bf16.msra.mxu0 %v1580
    %1863 = vmatpush.bf16.msra.mxu0 %v1573
    %1864 = vmatpush.bf16.msra.mxu0 %v1566
    %1865 = vmatpush.bf16.msra.mxu0 %v1559
    %1866 = vmatmul.bf16.gmra.mxu0 %v1821
    %v1867 = vpop.f32.mrf.mxu0
    %v1868 = vadd.f32 %v1827, %v1867
    %v1869 = vpop.f32.mrf.mxu0
    %1870 = vdwg.mxu0
    %1871 = vmatpush.bf16.msra.mxu0 %v1609
    %1872 = vmatpush.bf16.msra.mxu0 %v1602
    %1873 = vmatpush.bf16.msra.mxu0 %v1595
    %1874 = vmatpush.bf16.msra.mxu0 %v1588
    %1875 = vmatpush.bf16.msra.mxu0 %v1581
    %1876 = vmatpush.bf16.msra.mxu0 %v1574
    %1877 = vmatpush.bf16.msra.mxu0 %v1567
    %1878 = vmatpush.bf16.msra.mxu0 %v1560
    %1879 = vmatmul.bf16.gmra.mxu0 %v1821
    %v1880 = vpop.f32.mrf.mxu0
    %v1881 = vadd.f32 %v1828, %v1880
    %v1882 = vpop.f32.mrf.mxu0
    %1883 = vdwg.mxu0
    %1884 = vmatpush.bf16.msra.mxu0 %v1610
    %1885 = vmatpush.bf16.msra.mxu0 %v1603
    %1886 = vmatpush.bf16.msra.mxu0 %v1596
    %1887 = vmatpush.bf16.msra.mxu0 %v1589
    %1888 = vmatpush.bf16.msra.mxu0 %v1582
    %1889 = vmatpush.bf16.msra.mxu0 %v1575
    %1890 = vmatpush.bf16.msra.mxu0 %v1568
    %1891 = vmatpush.bf16.msra.mxu0 %v1561
    %1892 = vmatmul.bf16.gmra.mxu0 %v1821
    %v1893 = vpop.f32.mrf.mxu0
    %v1894 = vadd.f32 %v1829, %v1893
    %v1895 = vpop.f32.mrf.mxu0
    %1896 = vdwg.mxu0
    %1897 = vmatpush.bf16.msra.mxu0 %v1611
    %1898 = vmatpush.bf16.msra.mxu0 %v1604
    %1899 = vmatpush.bf16.msra.mxu0 %v1597
    %1900 = vmatpush.bf16.msra.mxu0 %v1590
    %1901 = vmatpush.bf16.msra.mxu0 %v1583
    %1902 = vmatpush.bf16.msra.mxu0 %v1576
    %1903 = vmatpush.bf16.msra.mxu0 %v1569
    %1904 = vmatpush.bf16.msra.mxu0 %v1562
    %1905 = vmatmul.bf16.gmra.mxu0 %v1821
    %v1906 = vpop.f32.mrf.mxu0
    %v1907 = vadd.f32 %v1830, %v1906
    %v1908 = vpop.f32.mrf.mxu0
    %1909 = vdwg.mxu0
    %1910 = vmatpush.bf16.msra.mxu0 %v1612
    %1911 = vmatpush.bf16.msra.mxu0 %v1605
    %1912 = vmatpush.bf16.msra.mxu0 %v1598
    %1913 = vmatpush.bf16.msra.mxu0 %v1591
    %1914 = vmatpush.bf16.msra.mxu0 %v1584
    %1915 = vmatpush.bf16.msra.mxu0 %v1577
    %1916 = vmatpush.bf16.msra.mxu0 %v1570
    %1917 = vmatpush.bf16.msra.mxu0 %v1563
    %1918 = vmatmul.bf16.gmra.mxu0 %v1821
    %v1919 = vpop.f32.mrf.mxu0
    %v1920 = vadd.f32 %v1831, %v1919
    %v1921 = vpop.f32.mrf.mxu0
    %1922 = vdwg.mxu0
    %v1923 = vmul.f32 %v1842, 0.5
    %v1924 = vtanh.pop %v1923
    %v1925 = vmul.f32 %v1924, 0.5
    %v1926 = vadd.f32 %v1925, 0.5
    %v1927 = vmul.f32 %v1855, 0.5
    %v1928 = vtanh.pop %v1927
    %v1929 = vmul.f32 %v1928, 0.5
    %v1930 = vadd.f32 %v1929, 0.5
    %v1931 = vmul.f32 %v1868, 0.5
    %v1932 = vtanh.pop %v1931
    %v1933 = vmul.f32 %v1932, 0.5
    %v1934 = vadd.f32 %v1933, 0.5
    %v1935 = vtanh.pop %v1881
    %v1936 = vmul.f32 %v1894, 0.5
    %v1937 = vtanh.pop %v1936
    %v1938 = vmul.f32 %v1937, 0.5
    %v1939 = vadd.f32 %v1938, 0.5
    %v1940 = vmul.f32 %v1907, 0.5
    %v1941 = vtanh.pop %v1940
    %v1942 = vmul.f32 %v1941, 0.5
    %v1943 = vadd.f32 %v1942, 0.5
    %v1944 = vmax.f32 %v1920, 0.0
    %vm1945 = vcmp.ne.f32.partialorder %v1920, %v1920
    %v1946 = vadd.f32 %v1920, 0.0
    %v1947 = vand.u32 2147483647, %v1920
    %v1948 = vsub.f32 0.0, %v1947
    %v1949 = vmul.f32 %v1948, 1.442695
    %v1950 = vpow.pop %v1949
    %v1951 = vadd.f32 %v1950, 1.0
    %v1952 = vlog2.pop %v1951
    %v1953 = vmul.f32 %v1952, 0.6931472
    %v1954 = vmul.f32 -0.5, %v1950
    %v1955 = vadd.f32 %v1954, 1.0
    %v1956 = vmul.f32 %v1955, %v1950
    %v1957 = vand.u32 2147483647, %v1950
    %vm1958 = vcmp.lt.f32.partialorder %v1957, 0.0004427343
    %v1959 = vsel %vm1958, %v1956, %v1953
    %v1960 = vadd.f32 %v1944, %v1959
    %v1961 = vsel %vm1945, %v1946, %v1960
    %v1962 = vmul.f32 %v1930, %v1817
    %v1963 = vmul.f32 %v1926, %v1935
    %v1964 = vadd.f32 %v1962, %v1963
    %v1965 = vmul.f32 %v1943, %v1804
    %v1966 = vmul.f32 %v1939, %v1935
    %v1967 = vadd.f32 %v1965, %v1966
    %s1968 = scalar_lea.vmem %s1, 8
    %v1969 = vld [vmem:[%s1968] sm:$0xff]
    %v1970 = vsub.f32 %v1964, %v1967
    %v1971 = vsub.f32 0.0, %v1961
    %1973 = vset.pattern.permute.xlu0 0
    %1974 = vperm.xlu0 %1973, %v1969
    %v1975 = vpop.permute.xlu0 %1974
    %v1977 = vmul.f32 %v1971, %v1975
    %v1978 = vmul.f32 %v1977, 1.442695
    %v1979 = vpow.pop %v1978
    %v1980 = vmul.f32 %v1970, %v1979
    %v1981 = vadd.f32 %v1967, %v1980
    %v1982 = vtanh.pop %v1981
    %v1983 = vmul.f32 %v1934, %v1982
    %s1984 = scalar_lea.vmem [#allocation12], 8
    %1985 = vst [vmem:[%s1984] sm:$0xff] %v1983
    %v1986 = vpack.c.bf16 %v1983, %v1983
    %s1987 = smul.u32 2, 7
    %s1988 = smul.addr %s1987, 8
    %s1989 = scalar_lea.vmem [#allocation2], %s1988
    %v1990 = vld [vmem:[%s1989] sm:$0xff]
    %v1991 = vld [vmem:[%s1989 + $0x8] sm:$0xff]
    %v1992 = vld [vmem:[%s1989 + $0x10] sm:$0xff]
    %v1993 = vld [vmem:[%s1989 + $0x18] sm:$0xff]
    %v1994 = vld [vmem:[%s1989 + $0x20] sm:$0xff]
    %v1995 = vld [vmem:[%s1989 + $0x28] sm:$0xff]
    %v1996 = vld [vmem:[%s1989 + $0x30] sm:$0xff]
    %1997 = vmatpush.bf16.msra.mxu0 %v1606
    %1998 = vmatpush.bf16.msra.mxu0 %v1599
    %1999 = vmatpush.bf16.msra.mxu0 %v1592
    %2000 = vmatpush.bf16.msra.mxu0 %v1585
    %2001 = vmatpush.bf16.msra.mxu0 %v1578
    %2002 = vmatpush.bf16.msra.mxu0 %v1571
    %2003 = vmatpush.bf16.msra.mxu0 %v1564
    %2004 = vmatpush.bf16.msra.mxu0 %v1557
    %2005 = vmatmul.bf16.gmra.mxu0 %v1986
    %v2006 = vpop.f32.mrf.mxu0
    %v2007 = vadd.f32 %v1990, %v2006
    %v2008 = vpop.f32.mrf.mxu0
    %2009 = vdwg.mxu0
    %2010 = vmatpush.bf16.msra.mxu0 %v1607
    %2011 = vmatpush.bf16.msra.mxu0 %v1600
    %2012 = vmatpush.bf16.msra.mxu0 %v1593
    %2013 = vmatpush.bf16.msra.mxu0 %v1586
    %2014 = vmatpush.bf16.msra.mxu0 %v1579
    %2015 = vmatpush.bf16.msra.mxu0 %v1572
    %2016 = vmatpush.bf16.msra.mxu0 %v1565
    %2017 = vmatpush.bf16.msra.mxu0 %v1558
    %2018 = vmatmul.bf16.gmra.mxu0 %v1986
    %v2019 = vpop.f32.mrf.mxu0
    %v2020 = vadd.f32 %v1991, %v2019
    %v2021 = vpop.f32.mrf.mxu0
    %2022 = vdwg.mxu0
    %2023 = vmatpush.bf16.msra.mxu0 %v1608
    %2024 = vmatpush.bf16.msra.mxu0 %v1601
    %2025 = vmatpush.bf16.msra.mxu0 %v1594
    %2026 = vmatpush.bf16.msra.mxu0 %v1587
    %2027 = vmatpush.bf16.msra.mxu0 %v1580
    %2028 = vmatpush.bf16.msra.mxu0 %v1573
    %2029 = vmatpush.bf16.msra.mxu0 %v1566
    %2030 = vmatpush.bf16.msra.mxu0 %v1559
    %2031 = vmatmul.bf16.gmra.mxu0 %v1986
    %v2032 = vpop.f32.mrf.mxu0
    %v2033 = vadd.f32 %v1992, %v2032
    %v2034 = vpop.f32.mrf.mxu0
    %2035 = vdwg.mxu0
    %2036 = vmatpush.bf16.msra.mxu0 %v1609
    %2037 = vmatpush.bf16.msra.mxu0 %v1602
    %2038 = vmatpush.bf16.msra.mxu0 %v1595
    %2039 = vmatpush.bf16.msra.mxu0 %v1588
    %2040 = vmatpush.bf16.msra.mxu0 %v1581
    %2041 = vmatpush.bf16.msra.mxu0 %v1574
    %2042 = vmatpush.bf16.msra.mxu0 %v1567
    %2043 = vmatpush.bf16.msra.mxu0 %v1560
    %2044 = vmatmul.bf16.gmra.mxu0 %v1986
    %v2045 = vpop.f32.mrf.mxu0
    %v2046 = vadd.f32 %v1993, %v2045
    %v2047 = vpop.f32.mrf.mxu0
    %2048 = vdwg.mxu0
    %2049 = vmatpush.bf16.msra.mxu0 %v1610
    %2050 = vmatpush.bf16.msra.mxu0 %v1603
    %2051 = vmatpush.bf16.msra.mxu0 %v1596
    %2052 = vmatpush.bf16.msra.mxu0 %v1589
    %2053 = vmatpush.bf16.msra.mxu0 %v1582
    %2054 = vmatpush.bf16.msra.mxu0 %v1575
    %2055 = vmatpush.bf16.msra.mxu0 %v1568
    %2056 = vmatpush.bf16.msra.mxu0 %v1561
    %2057 = vmatmul.bf16.gmra.mxu0 %v1986
    %v2058 = vpop.f32.mrf.mxu0
    %v2059 = vadd.f32 %v1994, %v2058
    %v2060 = vpop.f32.mrf.mxu0
    %2061 = vdwg.mxu0
    %2062 = vmatpush.bf16.msra.mxu0 %v1611
    %2063 = vmatpush.bf16.msra.mxu0 %v1604
    %2064 = vmatpush.bf16.msra.mxu0 %v1597
    %2065 = vmatpush.bf16.msra.mxu0 %v1590
    %2066 = vmatpush.bf16.msra.mxu0 %v1583
    %2067 = vmatpush.bf16.msra.mxu0 %v1576
    %2068 = vmatpush.bf16.msra.mxu0 %v1569
    %2069 = vmatpush.bf16.msra.mxu0 %v1562
    %2070 = vmatmul.bf16.gmra.mxu0 %v1986
    %v2071 = vpop.f32.mrf.mxu0
    %v2072 = vadd.f32 %v1995, %v2071
    %v2073 = vpop.f32.mrf.mxu0
    %2074 = vdwg.mxu0
    %2075 = vmatpush.bf16.msra.mxu0 %v1612
    %2076 = vmatpush.bf16.msra.mxu0 %v1605
    %2077 = vmatpush.bf16.msra.mxu0 %v1598
    %2078 = vmatpush.bf16.msra.mxu0 %v1591
    %2079 = vmatpush.bf16.msra.mxu0 %v1584
    %2080 = vmatpush.bf16.msra.mxu0 %v1577
    %2081 = vmatpush.bf16.msra.mxu0 %v1570
    %2082 = vmatpush.bf16.msra.mxu0 %v1563
    %2083 = vmatmul.bf16.gmra.mxu0 %v1986
    %v2084 = vpop.f32.mrf.mxu0
    %v2085 = vadd.f32 %v1996, %v2084
    %v2086 = vpop.f32.mrf.mxu0
    %2087 = vdwg.mxu0
    %v2088 = vmul.f32 %v2007, 0.5
    %v2089 = vtanh.pop %v2088
    %v2090 = vmul.f32 %v2089, 0.5
    %v2091 = vadd.f32 %v2090, 0.5
    %v2092 = vmul.f32 %v2020, 0.5
    %v2093 = vtanh.pop %v2092
    %v2094 = vmul.f32 %v2093, 0.5
    %v2095 = vadd.f32 %v2094, 0.5
    %v2096 = vmul.f32 %v2033, 0.5
    %v2097 = vtanh.pop %v2096
    %v2098 = vmul.f32 %v2097, 0.5
    %v2099 = vadd.f32 %v2098, 0.5
    %v2100 = vtanh.pop %v2046
    %v2101 = vmul.f32 %v2059, 0.5
    %v2102 = vtanh.pop %v2101
    %v2103 = vmul.f32 %v2102, 0.5
    %v2104 = vadd.f32 %v2103, 0.5
    %v2105 = vmul.f32 %v2072, 0.5
    %v2106 = vtanh.pop %v2105
    %v2107 = vmul.f32 %v2106, 0.5
    %v2108 = vadd.f32 %v2107, 0.5
    %v2109 = vmax.f32 %v2085, 0.0
    %vm2110 = vcmp.ne.f32.partialorder %v2085, %v2085
    %v2111 = vadd.f32 %v2085, 0.0
    %v2112 = vand.u32 2147483647, %v2085
    %v2113 = vsub.f32 0.0, %v2112
    %v2114 = vmul.f32 %v2113, 1.442695
    %v2115 = vpow.pop %v2114
    %v2116 = vadd.f32 %v2115, 1.0
    %v2117 = vlog2.pop %v2116
    %v2118 = vmul.f32 %v2117, 0.6931472
    %v2119 = vmul.f32 -0.5, %v2115
    %v2120 = vadd.f32 %v2119, 1.0
    %v2121 = vmul.f32 %v2120, %v2115
    %v2122 = vand.u32 2147483647, %v2115
    %vm2123 = vcmp.lt.f32.partialorder %v2122, 0.0004427343
    %v2124 = vsel %vm2123, %v2121, %v2118
    %v2125 = vadd.f32 %v2109, %v2124
    %v2126 = vsel %vm2110, %v2111, %v2125
    %v2127 = vmul.f32 %v2095, %v1981
    %v2128 = vmul.f32 %v2091, %v2100
    %v2129 = vadd.f32 %v2127, %v2128
    %v2130 = vmul.f32 %v2108, %v1967
    %v2131 = vmul.f32 %v2104, %v2100
    %v2132 = vadd.f32 %v2130, %v2131
    %s2133 = scalar_lea.vmem %s1, 16
    %v2134 = vld [vmem:[%s2133] sm:$0xff]
    %v2135 = vsub.f32 %v2129, %v2132
    %v2136 = vsub.f32 0.0, %v2126
    %2138 = vset.pattern.permute.xlu0 0
    %2139 = vperm.xlu0 %2138, %v2134
    %v2140 = vpop.permute.xlu0 %2139
    %v2142 = vmul.f32 %v2136, %v2140
    %v2143 = vmul.f32 %v2142, 1.442695
    %v2144 = vpow.pop %v2143
    %v2145 = vmul.f32 %v2135, %v2144
    %v2146 = vadd.f32 %v2132, %v2145
    %v2147 = vtanh.pop %v2146
    %v2148 = vmul.f32 %v2099, %v2147
    %s2149 = scalar_lea.vmem [#allocation12], 16
    %2150 = vst [vmem:[%s2149] sm:$0xff] %v2148
    %v2151 = vpack.c.bf16 %v2148, %v2148
    %s2152 = smul.u32 3, 7
    %s2153 = smul.addr %s2152, 8
    %s2154 = scalar_lea.vmem [#allocation2], %s2153
    %v2155 = vld [vmem:[%s2154] sm:$0xff]
    %v2156 = vld [vmem:[%s2154 + $0x8] sm:$0xff]
    %v2157 = vld [vmem:[%s2154 + $0x10] sm:$0xff]
    %v2158 = vld [vmem:[%s2154 + $0x18] sm:$0xff]
    %v2159 = vld [vmem:[%s2154 + $0x20] sm:$0xff]
    %v2160 = vld [vmem:[%s2154 + $0x28] sm:$0xff]
    %v2161 = vld [vmem:[%s2154 + $0x30] sm:$0xff]
    %2162 = vmatpush.bf16.msra.mxu0 %v1606
    %2163 = vmatpush.bf16.msra.mxu0 %v1599
    %2164 = vmatpush.bf16.msra.mxu0 %v1592
    %2165 = vmatpush.bf16.msra.mxu0 %v1585
    %2166 = vmatpush.bf16.msra.mxu0 %v1578
    %2167 = vmatpush.bf16.msra.mxu0 %v1571
    %2168 = vmatpush.bf16.msra.mxu0 %v1564
    %2169 = vmatpush.bf16.msra.mxu0 %v1557
    %2170 = vmatmul.bf16.gmra.mxu0 %v2151
    %v2171 = vpop.f32.mrf.mxu0
    %v2172 = vadd.f32 %v2155, %v2171
    %v2173 = vpop.f32.mrf.mxu0
    %2174 = vdwg.mxu0
    %2175 = vmatpush.bf16.msra.mxu0 %v1607
    %2176 = vmatpush.bf16.msra.mxu0 %v1600
    %2177 = vmatpush.bf16.msra.mxu0 %v1593
    %2178 = vmatpush.bf16.msra.mxu0 %v1586
    %2179 = vmatpush.bf16.msra.mxu0 %v1579
    %2180 = vmatpush.bf16.msra.mxu0 %v1572
    %2181 = vmatpush.bf16.msra.mxu0 %v1565
    %2182 = vmatpush.bf16.msra.mxu0 %v1558
    %2183 = vmatmul.bf16.gmra.mxu0 %v2151
    %v2184 = vpop.f32.mrf.mxu0
    %v2185 = vadd.f32 %v2156, %v2184
    %v2186 = vpop.f32.mrf.mxu0
    %2187 = vdwg.mxu0
    %2188 = vmatpush.bf16.msra.mxu0 %v1608
    %2189 = vmatpush.bf16.msra.mxu0 %v1601
    %2190 = vmatpush.bf16.msra.mxu0 %v1594
    %2191 = vmatpush.bf16.msra.mxu0 %v1587
    %2192 = vmatpush.bf16.msra.mxu0 %v1580
    %2193 = vmatpush.bf16.msra.mxu0 %v1573
    %2194 = vmatpush.bf16.msra.mxu0 %v1566
    %2195 = vmatpush.bf16.msra.mxu0 %v1559
    %2196 = vmatmul.bf16.gmra.mxu0 %v2151
    %v2197 = vpop.f32.mrf.mxu0
    %v2198 = vadd.f32 %v2157, %v2197
    %v2199 = vpop.f32.mrf.mxu0
    %2200 = vdwg.mxu0
    %2201 = vmatpush.bf16.msra.mxu0 %v1609
    %2202 = vmatpush.bf16.msra.mxu0 %v1602
    %2203 = vmatpush.bf16.msra.mxu0 %v1595
    %2204 = vmatpush.bf16.msra.mxu0 %v1588
    %2205 = vmatpush.bf16.msra.mxu0 %v1581
    %2206 = vmatpush.bf16.msra.mxu0 %v1574
    %2207 = vmatpush.bf16.msra.mxu0 %v1567
    %2208 = vmatpush.bf16.msra.mxu0 %v1560
    %2209 = vmatmul.bf16.gmra.mxu0 %v2151
    %v2210 = vpop.f32.mrf.mxu0
    %v2211 = vadd.f32 %v2158, %v2210
    %v2212 = vpop.f32.mrf.mxu0
    %2213 = vdwg.mxu0
    %2214 = vmatpush.bf16.msra.mxu0 %v1610
    %2215 = vmatpush.bf16.msra.mxu0 %v1603
    %2216 = vmatpush.bf16.msra.mxu0 %v1596
    %2217 = vmatpush.bf16.msra.mxu0 %v1589
    %2218 = vmatpush.bf16.msra.mxu0 %v1582
    %2219 = vmatpush.bf16.msra.mxu0 %v1575
    %2220 = vmatpush.bf16.msra.mxu0 %v1568
    %2221 = vmatpush.bf16.msra.mxu0 %v1561
    %2222 = vmatmul.bf16.gmra.mxu0 %v2151
    %v2223 = vpop.f32.mrf.mxu0
    %v2224 = vadd.f32 %v2159, %v2223
    %v2225 = vpop.f32.mrf.mxu0
    %2226 = vdwg.mxu0
    %2227 = vmatpush.bf16.msra.mxu0 %v1611
    %2228 = vmatpush.bf16.msra.mxu0 %v1604
    %2229 = vmatpush.bf16.msra.mxu0 %v1597
    %2230 = vmatpush.bf16.msra.mxu0 %v1590
    %2231 = vmatpush.bf16.msra.mxu0 %v1583
    %2232 = vmatpush.bf16.msra.mxu0 %v1576
    %2233 = vmatpush.bf16.msra.mxu0 %v1569
    %2234 = vmatpush.bf16.msra.mxu0 %v1562
    %2235 = vmatmul.bf16.gmra.mxu0 %v2151
    %v2236 = vpop.f32.mrf.mxu0
    %v2237 = vadd.f32 %v2160, %v2236
    %v2238 = vpop.f32.mrf.mxu0
    %2239 = vdwg.mxu0
    %2240 = vmatpush.bf16.msra.mxu0 %v1612
    %2241 = vmatpush.bf16.msra.mxu0 %v1605
    %2242 = vmatpush.bf16.msra.mxu0 %v1598
    %2243 = vmatpush.bf16.msra.mxu0 %v1591
    %2244 = vmatpush.bf16.msra.mxu0 %v1584
    %2245 = vmatpush.bf16.msra.mxu0 %v1577
    %2246 = vmatpush.bf16.msra.mxu0 %v1570
    %2247 = vmatpush.bf16.msra.mxu0 %v1563
    %2248 = vmatmul.bf16.gmra.mxu0 %v2151
    %v2249 = vpop.f32.mrf.mxu0
    %v2250 = vadd.f32 %v2161, %v2249
    %v2251 = vpop.f32.mrf.mxu0
    %2252 = vdwg.mxu0
    %v2253 = vmul.f32 %v2172, 0.5
    %v2254 = vtanh.pop %v2253
    %v2255 = vmul.f32 %v2254, 0.5
    %v2256 = vadd.f32 %v2255, 0.5
    %v2257 = vmul.f32 %v2185, 0.5
    %v2258 = vtanh.pop %v2257
    %v2259 = vmul.f32 %v2258, 0.5
    %v2260 = vadd.f32 %v2259, 0.5
    %v2261 = vmul.f32 %v2198, 0.5
    %v2262 = vtanh.pop %v2261
    %v2263 = vmul.f32 %v2262, 0.5
    %v2264 = vadd.f32 %v2263, 0.5
    %v2265 = vtanh.pop %v2211
    %v2266 = vmul.f32 %v2224, 0.5
    %v2267 = vtanh.pop %v2266
    %v2268 = vmul.f32 %v2267, 0.5
    %v2269 = vadd.f32 %v2268, 0.5
    %v2270 = vmul.f32 %v2237, 0.5
    %v2271 = vtanh.pop %v2270
    %v2272 = vmul.f32 %v2271, 0.5
    %v2273 = vadd.f32 %v2272, 0.5
    %v2274 = vmax.f32 %v2250, 0.0
    %vm2275 = vcmp.ne.f32.partialorder %v2250, %v2250
    %v2276 = vadd.f32 %v2250, 0.0
    %v2277 = vand.u32 2147483647, %v2250
    %v2278 = vsub.f32 0.0, %v2277
    %v2279 = vmul.f32 %v2278, 1.442695
    %v2280 = vpow.pop %v2279
    %v2281 = vadd.f32 %v2280, 1.0
    %v2282 = vlog2.pop %v2281
    %v2283 = vmul.f32 %v2282, 0.6931472
    %v2284 = vmul.f32 -0.5, %v2280
    %v2285 = vadd.f32 %v2284, 1.0
    %v2286 = vmul.f32 %v2285, %v2280
    %v2287 = vand.u32 2147483647, %v2280
    %vm2288 = vcmp.lt.f32.partialorder %v2287, 0.0004427343
    %v2289 = vsel %vm2288, %v2286, %v2283
    %v2290 = vadd.f32 %v2274, %v2289
    %v2291 = vsel %vm2275, %v2276, %v2290
    %v2292 = vmul.f32 %v2260, %v2146
    %v2293 = vmul.f32 %v2256, %v2265
    %v2294 = vadd.f32 %v2292, %v2293
    %v2295 = vmul.f32 %v2273, %v2132
    %v2296 = vmul.f32 %v2269, %v2265
    %v2297 = vadd.f32 %v2295, %v2296
    %s2298 = scalar_lea.vmem %s1, 24
    %v2299 = vld [vmem:[%s2298] sm:$0xff]
    %v2300 = vsub.f32 %v2294, %v2297
    %v2301 = vsub.f32 0.0, %v2291
    %2303 = vset.pattern.permute.xlu0 0
    %2304 = vperm.xlu0 %2303, %v2299
    %v2305 = vpop.permute.xlu0 %2304
    %v2307 = vmul.f32 %v2301, %v2305
    %v2308 = vmul.f32 %v2307, 1.442695
    %v2309 = vpow.pop %v2308
    %v2310 = vmul.f32 %v2300, %v2309
    %v2311 = vadd.f32 %v2297, %v2310
    %v2312 = vtanh.pop %v2311
    %v2313 = vmul.f32 %v2264, %v2312
    %s2314 = scalar_lea.vmem [#allocation12], 24
    %2315 = vst [vmem:[%s2314] sm:$0xff] %v2313
    %v2316 = vpack.c.bf16 %v2313, %v2313
    %s2317 = smul.u32 4, 7
    %s2318 = smul.addr %s2317, 8
    %s2319 = scalar_lea.vmem [#allocation2], %s2318
    %v2320 = vld [vmem:[%s2319] sm:$0xff]
    %v2321 = vld [vmem:[%s2319 + $0x8] sm:$0xff]
    %v2322 = vld [vmem:[%s2319 + $0x10] sm:$0xff]
    %v2323 = vld [vmem:[%s2319 + $0x18] sm:$0xff]
    %v2324 = vld [vmem:[%s2319 + $0x20] sm:$0xff]
    %v2325 = vld [vmem:[%s2319 + $0x28] sm:$0xff]
    %v2326 = vld [vmem:[%s2319 + $0x30] sm:$0xff]
    %2327 = vmatpush.bf16.msra.mxu0 %v1606
    %2328 = vmatpush.bf16.msra.mxu0 %v1599
    %2329 = vmatpush.bf16.msra.mxu0 %v1592
    %2330 = vmatpush.bf16.msra.mxu0 %v1585
    %2331 = vmatpush.bf16.msra.mxu0 %v1578
    %2332 = vmatpush.bf16.msra.mxu0 %v1571
    %2333 = vmatpush.bf16.msra.mxu0 %v1564
    %2334 = vmatpush.bf16.msra.mxu0 %v1557
    %2335 = vmatmul.bf16.gmra.mxu0 %v2316
    %v2336 = vpop.f32.mrf.mxu0
    %v2337 = vadd.f32 %v2320, %v2336
    %v2338 = vpop.f32.mrf.mxu0
    %2339 = vdwg.mxu0
    %2340 = vmatpush.bf16.msra.mxu0 %v1607
    %2341 = vmatpush.bf16.msra.mxu0 %v1600
    %2342 = vmatpush.bf16.msra.mxu0 %v1593
    %2343 = vmatpush.bf16.msra.mxu0 %v1586
    %2344 = vmatpush.bf16.msra.mxu0 %v1579
    %2345 = vmatpush.bf16.msra.mxu0 %v1572
    %2346 = vmatpush.bf16.msra.mxu0 %v1565
    %2347 = vmatpush.bf16.msra.mxu0 %v1558
    %2348 = vmatmul.bf16.gmra.mxu0 %v2316
    %v2349 = vpop.f32.mrf.mxu0
    %v2350 = vadd.f32 %v2321, %v2349
    %v2351 = vpop.f32.mrf.mxu0
    %2352 = vdwg.mxu0
    %2353 = vmatpush.bf16.msra.mxu0 %v1608
    %2354 = vmatpush.bf16.msra.mxu0 %v1601
    %2355 = vmatpush.bf16.msra.mxu0 %v1594
    %2356 = vmatpush.bf16.msra.mxu0 %v1587
    %2357 = vmatpush.bf16.msra.mxu0 %v1580
    %2358 = vmatpush.bf16.msra.mxu0 %v1573
    %2359 = vmatpush.bf16.msra.mxu0 %v1566
    %2360 = vmatpush.bf16.msra.mxu0 %v1559
    %2361 = vmatmul.bf16.gmra.mxu0 %v2316
    %v2362 = vpop.f32.mrf.mxu0
    %v2363 = vadd.f32 %v2322, %v2362
    %v2364 = vpop.f32.mrf.mxu0
    %2365 = vdwg.mxu0
    %2366 = vmatpush.bf16.msra.mxu0 %v1609
    %2367 = vmatpush.bf16.msra.mxu0 %v1602
    %2368 = vmatpush.bf16.msra.mxu0 %v1595
    %2369 = vmatpush.bf16.msra.mxu0 %v1588
    %2370 = vmatpush.bf16.msra.mxu0 %v1581
    %2371 = vmatpush.bf16.msra.mxu0 %v1574
    %2372 = vmatpush.bf16.msra.mxu0 %v1567
    %2373 = vmatpush.bf16.msra.mxu0 %v1560
    %2374 = vmatmul.bf16.gmra.mxu0 %v2316
    %v2375 = vpop.f32.mrf.mxu0
    %v2376 = vadd.f32 %v2323, %v2375
    %v2377 = vpop.f32.mrf.mxu0
    %2378 = vdwg.mxu0
    %2379 = vmatpush.bf16.msra.mxu0 %v1610
    %2380 = vmatpush.bf16.msra.mxu0 %v1603
    %2381 = vmatpush.bf16.msra.mxu0 %v1596
    %2382 = vmatpush.bf16.msra.mxu0 %v1589
    %2383 = vmatpush.bf16.msra.mxu0 %v1582
    %2384 = vmatpush.bf16.msra.mxu0 %v1575
    %2385 = vmatpush.bf16.msra.mxu0 %v1568
    %2386 = vmatpush.bf16.msra.mxu0 %v1561
    %2387 = vmatmul.bf16.gmra.mxu0 %v2316
    %v2388 = vpop.f32.mrf.mxu0
    %v2389 = vadd.f32 %v2324, %v2388
    %v2390 = vpop.f32.mrf.mxu0
    %2391 = vdwg.mxu0
    %2392 = vmatpush.bf16.msra.mxu0 %v1611
    %2393 = vmatpush.bf16.msra.mxu0 %v1604
    %2394 = vmatpush.bf16.msra.mxu0 %v1597
    %2395 = vmatpush.bf16.msra.mxu0 %v1590
    %2396 = vmatpush.bf16.msra.mxu0 %v1583
    %2397 = vmatpush.bf16.msra.mxu0 %v1576
    %2398 = vmatpush.bf16.msra.mxu0 %v1569
    %2399 = vmatpush.bf16.msra.mxu0 %v1562
    %2400 = vmatmul.bf16.gmra.mxu0 %v2316
    %v2401 = vpop.f32.mrf.mxu0
    %v2402 = vadd.f32 %v2325, %v2401
    %v2403 = vpop.f32.mrf.mxu0
    %2404 = vdwg.mxu0
    %2405 = vmatpush.bf16.msra.mxu0 %v1612
    %2406 = vmatpush.bf16.msra.mxu0 %v1605
    %2407 = vmatpush.bf16.msra.mxu0 %v1598
    %2408 = vmatpush.bf16.msra.mxu0 %v1591
    %2409 = vmatpush.bf16.msra.mxu0 %v1584
    %2410 = vmatpush.bf16.msra.mxu0 %v1577
    %2411 = vmatpush.bf16.msra.mxu0 %v1570
    %2412 = vmatpush.bf16.msra.mxu0 %v1563
    %2413 = vmatmul.bf16.gmra.mxu0 %v2316
    %v2414 = vpop.f32.mrf.mxu0
    %v2415 = vadd.f32 %v2326, %v2414
    %v2416 = vpop.f32.mrf.mxu0
    %2417 = vdwg.mxu0
    %v2418 = vmul.f32 %v2337, 0.5
    %v2419 = vtanh.pop %v2418
    %v2420 = vmul.f32 %v2419, 0.5
    %v2421 = vadd.f32 %v2420, 0.5
    %v2422 = vmul.f32 %v2350, 0.5
    %v2423 = vtanh.pop %v2422
    %v2424 = vmul.f32 %v2423, 0.5
    %v2425 = vadd.f32 %v2424, 0.5
    %v2426 = vmul.f32 %v2363, 0.5
    %v2427 = vtanh.pop %v2426
    %v2428 = vmul.f32 %v2427, 0.5
    %v2429 = vadd.f32 %v2428, 0.5
    %v2430 = vtanh.pop %v2376
    %v2431 = vmul.f32 %v2389, 0.5
    %v2432 = vtanh.pop %v2431
    %v2433 = vmul.f32 %v2432, 0.5
    %v2434 = vadd.f32 %v2433, 0.5
    %v2435 = vmul.f32 %v2402, 0.5
    %v2436 = vtanh.pop %v2435
    %v2437 = vmul.f32 %v2436, 0.5
    %v2438 = vadd.f32 %v2437, 0.5
    %v2439 = vmax.f32 %v2415, 0.0
    %vm2440 = vcmp.ne.f32.partialorder %v2415, %v2415
    %v2441 = vadd.f32 %v2415, 0.0
    %v2442 = vand.u32 2147483647, %v2415
    %v2443 = vsub.f32 0.0, %v2442
    %v2444 = vmul.f32 %v2443, 1.442695
    %v2445 = vpow.pop %v2444
    %v2446 = vadd.f32 %v2445, 1.0
    %v2447 = vlog2.pop %v2446
    %v2448 = vmul.f32 %v2447, 0.6931472
    %v2449 = vmul.f32 -0.5, %v2445
    %v2450 = vadd.f32 %v2449, 1.0
    %v2451 = vmul.f32 %v2450, %v2445
    %v2452 = vand.u32 2147483647, %v2445
    %vm2453 = vcmp.lt.f32.partialorder %v2452, 0.0004427343
    %v2454 = vsel %vm2453, %v2451, %v2448
    %v2455 = vadd.f32 %v2439, %v2454
    %v2456 = vsel %vm2440, %v2441, %v2455
    %v2457 = vmul.f32 %v2425, %v2311
    %v2458 = vmul.f32 %v2421, %v2430
    %v2459 = vadd.f32 %v2457, %v2458
    %v2460 = vmul.f32 %v2438, %v2297
    %v2461 = vmul.f32 %v2434, %v2430
    %v2462 = vadd.f32 %v2460, %v2461
    %s2463 = scalar_lea.vmem %s1, 32
    %v2464 = vld [vmem:[%s2463] sm:$0xff]
    %v2465 = vsub.f32 %v2459, %v2462
    %v2466 = vsub.f32 0.0, %v2456
    %2468 = vset.pattern.permute.xlu0 0
    %2469 = vperm.xlu0 %2468, %v2464
    %v2470 = vpop.permute.xlu0 %2469
    %v2472 = vmul.f32 %v2466, %v2470
    %v2473 = vmul.f32 %v2472, 1.442695
    %v2474 = vpow.pop %v2473
    %v2475 = vmul.f32 %v2465, %v2474
    %v2476 = vadd.f32 %v2462, %v2475
    %v2477 = vtanh.pop %v2476
    %v2478 = vmul.f32 %v2429, %v2477
    %s2479 = scalar_lea.vmem [#allocation12], 32
    %2480 = vst [vmem:[%s2479] sm:$0xff] %v2478
    %v2481 = vpack.c.bf16 %v2478, %v2478
    %s2482 = smul.u32 5, 7
    %s2483 = smul.addr %s2482, 8
    %s2484 = scalar_lea.vmem [#allocation2], %s2483
    %v2485 = vld [vmem:[%s2484] sm:$0xff]
    %v2486 = vld [vmem:[%s2484 + $0x8] sm:$0xff]
    %v2487 = vld [vmem:[%s2484 + $0x10] sm:$0xff]
    %v2488 = vld [vmem:[%s2484 + $0x18] sm:$0xff]
    %v2489 = vld [vmem:[%s2484 + $0x20] sm:$0xff]
    %v2490 = vld [vmem:[%s2484 + $0x28] sm:$0xff]
    %v2491 = vld [vmem:[%s2484 + $0x30] sm:$0xff]
    %2492 = vmatpush.bf16.msra.mxu0 %v1606
    %2493 = vmatpush.bf16.msra.mxu0 %v1599
    %2494 = vmatpush.bf16.msra.mxu0 %v1592
    %2495 = vmatpush.bf16.msra.mxu0 %v1585
    %2496 = vmatpush.bf16.msra.mxu0 %v1578
    %2497 = vmatpush.bf16.msra.mxu0 %v1571
    %2498 = vmatpush.bf16.msra.mxu0 %v1564
    %2499 = vmatpush.bf16.msra.mxu0 %v1557
    %2500 = vmatmul.bf16.gmra.mxu0 %v2481
    %v2501 = vpop.f32.mrf.mxu0
    %v2502 = vadd.f32 %v2485, %v2501
    %v2503 = vpop.f32.mrf.mxu0
    %2504 = vdwg.mxu0
    %2505 = vmatpush.bf16.msra.mxu0 %v1607
    %2506 = vmatpush.bf16.msra.mxu0 %v1600
    %2507 = vmatpush.bf16.msra.mxu0 %v1593
    %2508 = vmatpush.bf16.msra.mxu0 %v1586
    %2509 = vmatpush.bf16.msra.mxu0 %v1579
    %2510 = vmatpush.bf16.msra.mxu0 %v1572
    %2511 = vmatpush.bf16.msra.mxu0 %v1565
    %2512 = vmatpush.bf16.msra.mxu0 %v1558
    %2513 = vmatmul.bf16.gmra.mxu0 %v2481
    %v2514 = vpop.f32.mrf.mxu0
    %v2515 = vadd.f32 %v2486, %v2514
    %v2516 = vpop.f32.mrf.mxu0
    %2517 = vdwg.mxu0
    %2518 = vmatpush.bf16.msra.mxu0 %v1608
    %2519 = vmatpush.bf16.msra.mxu0 %v1601
    %2520 = vmatpush.bf16.msra.mxu0 %v1594
    %2521 = vmatpush.bf16.msra.mxu0 %v1587
    %2522 = vmatpush.bf16.msra.mxu0 %v1580
    %2523 = vmatpush.bf16.msra.mxu0 %v1573
    %2524 = vmatpush.bf16.msra.mxu0 %v1566
    %2525 = vmatpush.bf16.msra.mxu0 %v1559
    %2526 = vmatmul.bf16.gmra.mxu0 %v2481
    %v2527 = vpop.f32.mrf.mxu0
    %v2528 = vadd.f32 %v2487, %v2527
    %v2529 = vpop.f32.mrf.mxu0
    %2530 = vdwg.mxu0
    %2531 = vmatpush.bf16.msra.mxu0 %v1609
    %2532 = vmatpush.bf16.msra.mxu0 %v1602
    %2533 = vmatpush.bf16.msra.mxu0 %v1595
    %2534 = vmatpush.bf16.msra.mxu0 %v1588
    %2535 = vmatpush.bf16.msra.mxu0 %v1581
    %2536 = vmatpush.bf16.msra.mxu0 %v1574
    %2537 = vmatpush.bf16.msra.mxu0 %v1567
    %2538 = vmatpush.bf16.msra.mxu0 %v1560
    %2539 = vmatmul.bf16.gmra.mxu0 %v2481
    %v2540 = vpop.f32.mrf.mxu0
    %v2541 = vadd.f32 %v2488, %v2540
    %v2542 = vpop.f32.mrf.mxu0
    %2543 = vdwg.mxu0
    %2544 = vmatpush.bf16.msra.mxu0 %v1610
    %2545 = vmatpush.bf16.msra.mxu0 %v1603
    %2546 = vmatpush.bf16.msra.mxu0 %v1596
    %2547 = vmatpush.bf16.msra.mxu0 %v1589
    %2548 = vmatpush.bf16.msra.mxu0 %v1582
    %2549 = vmatpush.bf16.msra.mxu0 %v1575
    %2550 = vmatpush.bf16.msra.mxu0 %v1568
    %2551 = vmatpush.bf16.msra.mxu0 %v1561
    %2552 = vmatmul.bf16.gmra.mxu0 %v2481
    %v2553 = vpop.f32.mrf.mxu0
    %v2554 = vadd.f32 %v2489, %v2553
    %v2555 = vpop.f32.mrf.mxu0
    %2556 = vdwg.mxu0
    %2557 = vmatpush.bf16.msra.mxu0 %v1611
    %2558 = vmatpush.bf16.msra.mxu0 %v1604
    %2559 = vmatpush.bf16.msra.mxu0 %v1597
    %2560 = vmatpush.bf16.msra.mxu0 %v1590
    %2561 = vmatpush.bf16.msra.mxu0 %v1583
    %2562 = vmatpush.bf16.msra.mxu0 %v1576
    %2563 = vmatpush.bf16.msra.mxu0 %v1569
    %2564 = vmatpush.bf16.msra.mxu0 %v1562
    %2565 = vmatmul.bf16.gmra.mxu0 %v2481
    %v2566 = vpop.f32.mrf.mxu0
    %v2567 = vadd.f32 %v2490, %v2566
    %v2568 = vpop.f32.mrf.mxu0
    %2569 = vdwg.mxu0
    %2570 = vmatpush.bf16.msra.mxu0 %v1612
    %2571 = vmatpush.bf16.msra.mxu0 %v1605
    %2572 = vmatpush.bf16.msra.mxu0 %v1598
    %2573 = vmatpush.bf16.msra.mxu0 %v1591
    %2574 = vmatpush.bf16.msra.mxu0 %v1584
    %2575 = vmatpush.bf16.msra.mxu0 %v1577
    %2576 = vmatpush.bf16.msra.mxu0 %v1570
    %2577 = vmatpush.bf16.msra.mxu0 %v1563
    %2578 = vmatmul.bf16.gmra.mxu0 %v2481
    %v2579 = vpop.f32.mrf.mxu0
    %v2580 = vadd.f32 %v2491, %v2579
    %v2581 = vpop.f32.mrf.mxu0
    %2582 = vdwg.mxu0
    %v2583 = vmul.f32 %v2502, 0.5
    %v2584 = vtanh.pop %v2583
    %v2585 = vmul.f32 %v2584, 0.5
    %v2586 = vadd.f32 %v2585, 0.5
    %v2587 = vmul.f32 %v2515, 0.5
    %v2588 = vtanh.pop %v2587
    %v2589 = vmul.f32 %v2588, 0.5
    %v2590 = vadd.f32 %v2589, 0.5
    %v2591 = vmul.f32 %v2528, 0.5
    %v2592 = vtanh.pop %v2591
    %v2593 = vmul.f32 %v2592, 0.5
    %v2594 = vadd.f32 %v2593, 0.5
    %v2595 = vtanh.pop %v2541
    %v2596 = vmul.f32 %v2554, 0.5
    %v2597 = vtanh.pop %v2596
    %v2598 = vmul.f32 %v2597, 0.5
    %v2599 = vadd.f32 %v2598, 0.5
    %v2600 = vmul.f32 %v2567, 0.5
    %v2601 = vtanh.pop %v2600
    %v2602 = vmul.f32 %v2601, 0.5
    %v2603 = vadd.f32 %v2602, 0.5
    %v2604 = vmax.f32 %v2580, 0.0
    %vm2605 = vcmp.ne.f32.partialorder %v2580, %v2580
    %v2606 = vadd.f32 %v2580, 0.0
    %v2607 = vand.u32 2147483647, %v2580
    %v2608 = vsub.f32 0.0, %v2607
    %v2609 = vmul.f32 %v2608, 1.442695
    %v2610 = vpow.pop %v2609
    %v2611 = vadd.f32 %v2610, 1.0
    %v2612 = vlog2.pop %v2611
    %v2613 = vmul.f32 %v2612, 0.6931472
    %v2614 = vmul.f32 -0.5, %v2610
    %v2615 = vadd.f32 %v2614, 1.0
    %v2616 = vmul.f32 %v2615, %v2610
    %v2617 = vand.u32 2147483647, %v2610
    %vm2618 = vcmp.lt.f32.partialorder %v2617, 0.0004427343
    %v2619 = vsel %vm2618, %v2616, %v2613
    %v2620 = vadd.f32 %v2604, %v2619
    %v2621 = vsel %vm2605, %v2606, %v2620
    %v2622 = vmul.f32 %v2590, %v2476
    %v2623 = vmul.f32 %v2586, %v2595
    %v2624 = vadd.f32 %v2622, %v2623
    %v2625 = vmul.f32 %v2603, %v2462
    %v2626 = vmul.f32 %v2599, %v2595
    %v2627 = vadd.f32 %v2625, %v2626
    %s2628 = scalar_lea.vmem %s1, 40
    %v2629 = vld [vmem:[%s2628] sm:$0xff]
    %v2630 = vsub.f32 %v2624, %v2627
    %v2631 = vsub.f32 0.0, %v2621
    %2633 = vset.pattern.permute.xlu0 0
    %2634 = vperm.xlu0 %2633, %v2629
    %v2635 = vpop.permute.xlu0 %2634
    %v2637 = vmul.f32 %v2631, %v2635
    %v2638 = vmul.f32 %v2637, 1.442695
    %v2639 = vpow.pop %v2638
    %v2640 = vmul.f32 %v2630, %v2639
    %v2641 = vadd.f32 %v2627, %v2640
    %v2642 = vtanh.pop %v2641
    %v2643 = vmul.f32 %v2594, %v2642
    %s2644 = scalar_lea.vmem [#allocation12], 40
    %2645 = vst [vmem:[%s2644] sm:$0xff] %v2643
    %v2646 = vpack.c.bf16 %v2643, %v2643
    %s2647 = smul.u32 6, 7
    %s2648 = smul.addr %s2647, 8
    %s2649 = scalar_lea.vmem [#allocation2], %s2648
    %v2650 = vld [vmem:[%s2649] sm:$0xff]
    %v2651 = vld [vmem:[%s2649 + $0x8] sm:$0xff]
    %v2652 = vld [vmem:[%s2649 + $0x10] sm:$0xff]
    %v2653 = vld [vmem:[%s2649 + $0x18] sm:$0xff]
    %v2654 = vld [vmem:[%s2649 + $0x20] sm:$0xff]
    %v2655 = vld [vmem:[%s2649 + $0x28] sm:$0xff]
    %v2656 = vld [vmem:[%s2649 + $0x30] sm:$0xff]
    %2657 = vmatpush.bf16.msra.mxu0 %v1606
    %2658 = vmatpush.bf16.msra.mxu0 %v1599
    %2659 = vmatpush.bf16.msra.mxu0 %v1592
    %2660 = vmatpush.bf16.msra.mxu0 %v1585
    %2661 = vmatpush.bf16.msra.mxu0 %v1578
    %2662 = vmatpush.bf16.msra.mxu0 %v1571
    %2663 = vmatpush.bf16.msra.mxu0 %v1564
    %2664 = vmatpush.bf16.msra.mxu0 %v1557
    %2665 = vmatmul.bf16.gmra.mxu0 %v2646
    %v2666 = vpop.f32.mrf.mxu0
    %v2667 = vadd.f32 %v2650, %v2666
    %v2668 = vpop.f32.mrf.mxu0
    %2669 = vdwg.mxu0
    %2670 = vmatpush.bf16.msra.mxu0 %v1607
    %2671 = vmatpush.bf16.msra.mxu0 %v1600
    %2672 = vmatpush.bf16.msra.mxu0 %v1593
    %2673 = vmatpush.bf16.msra.mxu0 %v1586
    %2674 = vmatpush.bf16.msra.mxu0 %v1579
    %2675 = vmatpush.bf16.msra.mxu0 %v1572
    %2676 = vmatpush.bf16.msra.mxu0 %v1565
    %2677 = vmatpush.bf16.msra.mxu0 %v1558
    %2678 = vmatmul.bf16.gmra.mxu0 %v2646
    %v2679 = vpop.f32.mrf.mxu0
    %v2680 = vadd.f32 %v2651, %v2679
    %v2681 = vpop.f32.mrf.mxu0
    %2682 = vdwg.mxu0
    %2683 = vmatpush.bf16.msra.mxu0 %v1608
    %2684 = vmatpush.bf16.msra.mxu0 %v1601
    %2685 = vmatpush.bf16.msra.mxu0 %v1594
    %2686 = vmatpush.bf16.msra.mxu0 %v1587
    %2687 = vmatpush.bf16.msra.mxu0 %v1580
    %2688 = vmatpush.bf16.msra.mxu0 %v1573
    %2689 = vmatpush.bf16.msra.mxu0 %v1566
    %2690 = vmatpush.bf16.msra.mxu0 %v1559
    %2691 = vmatmul.bf16.gmra.mxu0 %v2646
    %v2692 = vpop.f32.mrf.mxu0
    %v2693 = vadd.f32 %v2652, %v2692
    %v2694 = vpop.f32.mrf.mxu0
    %2695 = vdwg.mxu0
    %2696 = vmatpush.bf16.msra.mxu0 %v1609
    %2697 = vmatpush.bf16.msra.mxu0 %v1602
    %2698 = vmatpush.bf16.msra.mxu0 %v1595
    %2699 = vmatpush.bf16.msra.mxu0 %v1588
    %2700 = vmatpush.bf16.msra.mxu0 %v1581
    %2701 = vmatpush.bf16.msra.mxu0 %v1574
    %2702 = vmatpush.bf16.msra.mxu0 %v1567
    %2703 = vmatpush.bf16.msra.mxu0 %v1560
    %2704 = vmatmul.bf16.gmra.mxu0 %v2646
    %v2705 = vpop.f32.mrf.mxu0
    %v2706 = vadd.f32 %v2653, %v2705
    %v2707 = vpop.f32.mrf.mxu0
    %2708 = vdwg.mxu0
    %2709 = vmatpush.bf16.msra.mxu0 %v1610
    %2710 = vmatpush.bf16.msra.mxu0 %v1603
    %2711 = vmatpush.bf16.msra.mxu0 %v1596
    %2712 = vmatpush.bf16.msra.mxu0 %v1589
    %2713 = vmatpush.bf16.msra.mxu0 %v1582
    %2714 = vmatpush.bf16.msra.mxu0 %v1575
    %2715 = vmatpush.bf16.msra.mxu0 %v1568
    %2716 = vmatpush.bf16.msra.mxu0 %v1561
    %2717 = vmatmul.bf16.gmra.mxu0 %v2646
    %v2718 = vpop.f32.mrf.mxu0
    %v2719 = vadd.f32 %v2654, %v2718
    %v2720 = vpop.f32.mrf.mxu0
    %2721 = vdwg.mxu0
    %2722 = vmatpush.bf16.msra.mxu0 %v1611
    %2723 = vmatpush.bf16.msra.mxu0 %v1604
    %2724 = vmatpush.bf16.msra.mxu0 %v1597
    %2725 = vmatpush.bf16.msra.mxu0 %v1590
    %2726 = vmatpush.bf16.msra.mxu0 %v1583
    %2727 = vmatpush.bf16.msra.mxu0 %v1576
    %2728 = vmatpush.bf16.msra.mxu0 %v1569
    %2729 = vmatpush.bf16.msra.mxu0 %v1562
    %2730 = vmatmul.bf16.gmra.mxu0 %v2646
    %v2731 = vpop.f32.mrf.mxu0
    %v2732 = vadd.f32 %v2655, %v2731
    %v2733 = vpop.f32.mrf.mxu0
    %2734 = vdwg.mxu0
    %2735 = vmatpush.bf16.msra.mxu0 %v1612
    %2736 = vmatpush.bf16.msra.mxu0 %v1605
    %2737 = vmatpush.bf16.msra.mxu0 %v1598
    %2738 = vmatpush.bf16.msra.mxu0 %v1591
    %2739 = vmatpush.bf16.msra.mxu0 %v1584
    %2740 = vmatpush.bf16.msra.mxu0 %v1577
    %2741 = vmatpush.bf16.msra.mxu0 %v1570
    %2742 = vmatpush.bf16.msra.mxu0 %v1563
    %2743 = vmatmul.bf16.gmra.mxu0 %v2646
    %v2744 = vpop.f32.mrf.mxu0
    %v2745 = vadd.f32 %v2656, %v2744
    %v2746 = vpop.f32.mrf.mxu0
    %2747 = vdwg.mxu0
    %v2748 = vmul.f32 %v2667, 0.5
    %v2749 = vtanh.pop %v2748
    %v2750 = vmul.f32 %v2749, 0.5
    %v2751 = vadd.f32 %v2750, 0.5
    %v2752 = vmul.f32 %v2680, 0.5
    %v2753 = vtanh.pop %v2752
    %v2754 = vmul.f32 %v2753, 0.5
    %v2755 = vadd.f32 %v2754, 0.5
    %v2756 = vmul.f32 %v2693, 0.5
    %v2757 = vtanh.pop %v2756
    %v2758 = vmul.f32 %v2757, 0.5
    %v2759 = vadd.f32 %v2758, 0.5
    %v2760 = vtanh.pop %v2706
    %v2761 = vmul.f32 %v2719, 0.5
    %v2762 = vtanh.pop %v2761
    %v2763 = vmul.f32 %v2762, 0.5
    %v2764 = vadd.f32 %v2763, 0.5
    %v2765 = vmul.f32 %v2732, 0.5
    %v2766 = vtanh.pop %v2765
    %v2767 = vmul.f32 %v2766, 0.5
    %v2768 = vadd.f32 %v2767, 0.5
    %v2769 = vmax.f32 %v2745, 0.0
    %vm2770 = vcmp.ne.f32.partialorder %v2745, %v2745
    %v2771 = vadd.f32 %v2745, 0.0
    %v2772 = vand.u32 2147483647, %v2745
    %v2773 = vsub.f32 0.0, %v2772
    %v2774 = vmul.f32 %v2773, 1.442695
    %v2775 = vpow.pop %v2774
    %v2776 = vadd.f32 %v2775, 1.0
    %v2777 = vlog2.pop %v2776
    %v2778 = vmul.f32 %v2777, 0.6931472
    %v2779 = vmul.f32 -0.5, %v2775
    %v2780 = vadd.f32 %v2779, 1.0
    %v2781 = vmul.f32 %v2780, %v2775
    %v2782 = vand.u32 2147483647, %v2775
    %vm2783 = vcmp.lt.f32.partialorder %v2782, 0.0004427343
    %v2784 = vsel %vm2783, %v2781, %v2778
    %v2785 = vadd.f32 %v2769, %v2784
    %v2786 = vsel %vm2770, %v2771, %v2785
    %v2787 = vmul.f32 %v2755, %v2641
    %v2788 = vmul.f32 %v2751, %v2760
    %v2789 = vadd.f32 %v2787, %v2788
    %v2790 = vmul.f32 %v2768, %v2627
    %v2791 = vmul.f32 %v2764, %v2760
    %v2792 = vadd.f32 %v2790, %v2791
    %s2793 = scalar_lea.vmem %s1, 48
    %v2794 = vld [vmem:[%s2793] sm:$0xff]
    %v2795 = vsub.f32 %v2789, %v2792
    %v2796 = vsub.f32 0.0, %v2786
    %2798 = vset.pattern.permute.xlu0 0
    %2799 = vperm.xlu0 %2798, %v2794
    %v2800 = vpop.permute.xlu0 %2799
    %v2802 = vmul.f32 %v2796, %v2800
    %v2803 = vmul.f32 %v2802, 1.442695
    %v2804 = vpow.pop %v2803
    %v2805 = vmul.f32 %v2795, %v2804
    %v2806 = vadd.f32 %v2792, %v2805
    %v2807 = vtanh.pop %v2806
    %v2808 = vmul.f32 %v2759, %v2807
    %s2809 = scalar_lea.vmem [#allocation12], 48
    %2810 = vst [vmem:[%s2809] sm:$0xff] %v2808
    %v2811 = vpack.c.bf16 %v2808, %v2808
    %s2812 = smul.u32 7, 7
    %s2813 = smul.addr %s2812, 8
    %s2814 = scalar_lea.vmem [#allocation2], %s2813
    %v2815 = vld [vmem:[%s2814] sm:$0xff]
    %v2816 = vld [vmem:[%s2814 + $0x8] sm:$0xff]
    %v2817 = vld [vmem:[%s2814 + $0x10] sm:$0xff]
    %v2818 = vld [vmem:[%s2814 + $0x18] sm:$0xff]
    %v2819 = vld [vmem:[%s2814 + $0x20] sm:$0xff]
    %v2820 = vld [vmem:[%s2814 + $0x28] sm:$0xff]
    %v2821 = vld [vmem:[%s2814 + $0x30] sm:$0xff]
    %2822 = vmatpush.bf16.msra.mxu0 %v1606
    %2823 = vmatpush.bf16.msra.mxu0 %v1599
    %2824 = vmatpush.bf16.msra.mxu0 %v1592
    %2825 = vmatpush.bf16.msra.mxu0 %v1585
    %2826 = vmatpush.bf16.msra.mxu0 %v1578
    %2827 = vmatpush.bf16.msra.mxu0 %v1571
    %2828 = vmatpush.bf16.msra.mxu0 %v1564
    %2829 = vmatpush.bf16.msra.mxu0 %v1557
    %2830 = vmatmul.bf16.gmra.mxu0 %v2811
    %v2831 = vpop.f32.mrf.mxu0
    %v2832 = vadd.f32 %v2815, %v2831
    %v2833 = vpop.f32.mrf.mxu0
    %2834 = vdwg.mxu0
    %2835 = vmatpush.bf16.msra.mxu0 %v1607
    %2836 = vmatpush.bf16.msra.mxu0 %v1600
    %2837 = vmatpush.bf16.msra.mxu0 %v1593
    %2838 = vmatpush.bf16.msra.mxu0 %v1586
    %2839 = vmatpush.bf16.msra.mxu0 %v1579
    %2840 = vmatpush.bf16.msra.mxu0 %v1572
    %2841 = vmatpush.bf16.msra.mxu0 %v1565
    %2842 = vmatpush.bf16.msra.mxu0 %v1558
    %2843 = vmatmul.bf16.gmra.mxu0 %v2811
    %v2844 = vpop.f32.mrf.mxu0
    %v2845 = vadd.f32 %v2816, %v2844
    %v2846 = vpop.f32.mrf.mxu0
    %2847 = vdwg.mxu0
    %2848 = vmatpush.bf16.msra.mxu0 %v1608
    %2849 = vmatpush.bf16.msra.mxu0 %v1601
    %2850 = vmatpush.bf16.msra.mxu0 %v1594
    %2851 = vmatpush.bf16.msra.mxu0 %v1587
    %2852 = vmatpush.bf16.msra.mxu0 %v1580
    %2853 = vmatpush.bf16.msra.mxu0 %v1573
    %2854 = vmatpush.bf16.msra.mxu0 %v1566
    %2855 = vmatpush.bf16.msra.mxu0 %v1559
    %2856 = vmatmul.bf16.gmra.mxu0 %v2811
    %v2857 = vpop.f32.mrf.mxu0
    %v2858 = vadd.f32 %v2817, %v2857
    %v2859 = vpop.f32.mrf.mxu0
    %2860 = vdwg.mxu0
    %2861 = vmatpush.bf16.msra.mxu0 %v1609
    %2862 = vmatpush.bf16.msra.mxu0 %v1602
    %2863 = vmatpush.bf16.msra.mxu0 %v1595
    %2864 = vmatpush.bf16.msra.mxu0 %v1588
    %2865 = vmatpush.bf16.msra.mxu0 %v1581
    %2866 = vmatpush.bf16.msra.mxu0 %v1574
    %2867 = vmatpush.bf16.msra.mxu0 %v1567
    %2868 = vmatpush.bf16.msra.mxu0 %v1560
    %2869 = vmatmul.bf16.gmra.mxu0 %v2811
    %v2870 = vpop.f32.mrf.mxu0
    %v2871 = vadd.f32 %v2818, %v2870
    %v2872 = vpop.f32.mrf.mxu0
    %2873 = vdwg.mxu0
    %2874 = vmatpush.bf16.msra.mxu0 %v1610
    %2875 = vmatpush.bf16.msra.mxu0 %v1603
    %2876 = vmatpush.bf16.msra.mxu0 %v1596
    %2877 = vmatpush.bf16.msra.mxu0 %v1589
    %2878 = vmatpush.bf16.msra.mxu0 %v1582
    %2879 = vmatpush.bf16.msra.mxu0 %v1575
    %2880 = vmatpush.bf16.msra.mxu0 %v1568
    %2881 = vmatpush.bf16.msra.mxu0 %v1561
    %2882 = vmatmul.bf16.gmra.mxu0 %v2811
    %v2883 = vpop.f32.mrf.mxu0
    %v2884 = vadd.f32 %v2819, %v2883
    %v2885 = vpop.f32.mrf.mxu0
    %2886 = vdwg.mxu0
    %2887 = vmatpush.bf16.msra.mxu0 %v1611
    %2888 = vmatpush.bf16.msra.mxu0 %v1604
    %2889 = vmatpush.bf16.msra.mxu0 %v1597
    %2890 = vmatpush.bf16.msra.mxu0 %v1590
    %2891 = vmatpush.bf16.msra.mxu0 %v1583
    %2892 = vmatpush.bf16.msra.mxu0 %v1576
    %2893 = vmatpush.bf16.msra.mxu0 %v1569
    %2894 = vmatpush.bf16.msra.mxu0 %v1562
    %2895 = vmatmul.bf16.gmra.mxu0 %v2811
    %v2896 = vpop.f32.mrf.mxu0
    %v2897 = vadd.f32 %v2820, %v2896
    %v2898 = vpop.f32.mrf.mxu0
    %2899 = vdwg.mxu0
    %2900 = vmatpush.bf16.msra.mxu0 %v1612
    %2901 = vmatpush.bf16.msra.mxu0 %v1605
    %2902 = vmatpush.bf16.msra.mxu0 %v1598
    %2903 = vmatpush.bf16.msra.mxu0 %v1591
    %2904 = vmatpush.bf16.msra.mxu0 %v1584
    %2905 = vmatpush.bf16.msra.mxu0 %v1577
    %2906 = vmatpush.bf16.msra.mxu0 %v1570
    %2907 = vmatpush.bf16.msra.mxu0 %v1563
    %2908 = vmatmul.bf16.gmra.mxu0 %v2811
    %v2909 = vpop.f32.mrf.mxu0
    %v2910 = vadd.f32 %v2821, %v2909
    %v2911 = vpop.f32.mrf.mxu0
    %2912 = vdwg.mxu0
    %v2913 = vmul.f32 %v2832, 0.5
    %v2914 = vtanh.pop %v2913
    %v2915 = vmul.f32 %v2914, 0.5
    %v2916 = vadd.f32 %v2915, 0.5
    %v2917 = vmul.f32 %v2845, 0.5
    %v2918 = vtanh.pop %v2917
    %v2919 = vmul.f32 %v2918, 0.5
    %v2920 = vadd.f32 %v2919, 0.5
    %v2921 = vmul.f32 %v2858, 0.5
    %v2922 = vtanh.pop %v2921
    %v2923 = vmul.f32 %v2922, 0.5
    %v2924 = vadd.f32 %v2923, 0.5
    %v2925 = vtanh.pop %v2871
    %v2926 = vmul.f32 %v2884, 0.5
    %v2927 = vtanh.pop %v2926
    %v2928 = vmul.f32 %v2927, 0.5
    %v2929 = vadd.f32 %v2928, 0.5
    %v2930 = vmul.f32 %v2897, 0.5
    %v2931 = vtanh.pop %v2930
    %v2932 = vmul.f32 %v2931, 0.5
    %v2933 = vadd.f32 %v2932, 0.5
    %v2934 = vmax.f32 %v2910, 0.0
    %vm2935 = vcmp.ne.f32.partialorder %v2910, %v2910
    %v2936 = vadd.f32 %v2910, 0.0
    %v2937 = vand.u32 2147483647, %v2910
    %v2938 = vsub.f32 0.0, %v2937
    %v2939 = vmul.f32 %v2938, 1.442695
    %v2940 = vpow.pop %v2939
    %v2941 = vadd.f32 %v2940, 1.0
    %v2942 = vlog2.pop %v2941
    %v2943 = vmul.f32 %v2942, 0.6931472
    %v2944 = vmul.f32 -0.5, %v2940
    %v2945 = vadd.f32 %v2944, 1.0
    %v2946 = vmul.f32 %v2945, %v2940
    %v2947 = vand.u32 2147483647, %v2940
    %vm2948 = vcmp.lt.f32.partialorder %v2947, 0.0004427343
    %v2949 = vsel %vm2948, %v2946, %v2943
    %v2950 = vadd.f32 %v2934, %v2949
    %v2951 = vsel %vm2935, %v2936, %v2950
    %v2952 = vmul.f32 %v2920, %v2806
    %v2953 = vmul.f32 %v2916, %v2925
    %v2954 = vadd.f32 %v2952, %v2953
    %v2955 = vmul.f32 %v2933, %v2792
    %v2956 = vmul.f32 %v2929, %v2925
    %v2957 = vadd.f32 %v2955, %v2956
    %s2958 = scalar_lea.vmem %s1, 56
    %v2959 = vld [vmem:[%s2958] sm:$0xff]
    %v2960 = vsub.f32 %v2954, %v2957
    %v2961 = vsub.f32 0.0, %v2951
    %2963 = vset.pattern.permute.xlu0 0
    %2964 = vperm.xlu0 %2963, %v2959
    %v2965 = vpop.permute.xlu0 %2964
    %v2967 = vmul.f32 %v2961, %v2965
    %v2968 = vmul.f32 %v2967, 1.442695
    %v2969 = vpow.pop %v2968
    %v2970 = vmul.f32 %v2960, %v2969
    %v2971 = vadd.f32 %v2957, %v2970
    %v2972 = vtanh.pop %v2971
    %v2973 = vmul.f32 %v2924, %v2972
    %s2974 = scalar_lea.vmem [#allocation12], 56
    %2975 = vst [vmem:[%s2974] sm:$0xff] %v2973
    %2976 = vst [vmem:[#allocation3] sm:$0xff] %v2973
    %2977 = vst [vmem:[#allocation4] sm:$0xff] %v2971
    %2978 = vst [vmem:[#allocation5] sm:$0xff] %v2957
    // Predicated region
    $region38: #{tpu_custom_call.1} parent=1 // pred_check
      _
    $region39: #{tpu_custom_call.1} parent=1 // pred_check_branch
      %2980 = sbr.rel (0) target = $region41
    $region40: #{tpu_custom_call.1} parent=1 // pred_region
      %2982 = vsyncadd [#allocation8], 0
      %s2983 = sshll.u32 [#allocation12], 4
      %s2984 = int_to_ptr.vmem [resolvable:$true] %s2983
      %s2985 = sshll.u32 %s5, 4
      %s2986 = int_to_ptr.hbm [resolvable:$true] %s2985
      %2991 = dma.vmem_to_hbm [thread:$0]  %s2984, 1024, %s2986, [#allocation8], 128, 128, 8
    $region41: #{tpu_custom_call.1} parent=1 // pred_fallthru
      _
    // Predicated region
    $region42: #{tpu_custom_call.1} parent=1 // pred_check
      _
    $region43: #{tpu_custom_call.1} parent=1 // pred_check_branch
      %2993 = sbr.rel (0) target = $region45
    $region44: #{tpu_custom_call.1} parent=1 // pred_region
      %2995 = dma.done [#allocation8], 1024
    $region45: #{tpu_custom_call.1} parent=1 // pred_fallthru
      _
    %2996 = vsyncpa [#allocation7], 1
    %2997 = vsyncpa [#allocation10], 1
    %2998 = vsyncpa [#allocation8], 1

</llo_original>
